<compile_context>
chip_gen: v5e
topology: v5e:2x2
jax: 0.10.0
libtpu: 0.0.40
codegen_flags: <defaults>
</compile_context>

<pallas_src>
import functools

import jax
import jax.numpy as jnp
from jax.experimental import pallas as pl
from jax.experimental.pallas import tpu as pltpu


# ----------------------------- kernel ---------------------------------------


def _silu(z):
    return z * jax.nn.sigmoid(z)


def _make_fused_rnn_kernel(n_h_layers, n_y_layers, tc, batch, hidden_dim, input_dim):
    """Kernel for fixed MLP depths and chunk size; all loops unrolled at trace time.

    ref order:
      inputs : h0, x_chunk (Tc,B,I),
               W0 (H+I, w0), b0,                 (first hmlp layer, fused)
               [Wh_i, bh_i] * (n_h_layers-1),
               [Wy_i, by_i] * n_y_layers         (last one lane-padded)
      outputs: y_chunk (Tc,B,O_pad), h_final (B,H)
      scratch: hx (B, H+I)  -- persistent carry, cols [:H]=h, [H:]=x_t staging
               h_chunk (Tc, B, H)  -- per-chunk hidden states for batched ymlp
    """
    H, I = hidden_dim, input_dim

    def kernel(*refs):
        h0_ref = refs[0]
        x_ref = refs[1]
        idx = 2
        w0_ref, b0_ref = refs[idx], refs[idx + 1]
        idx += 2
        h_rest = []
        for _ in range(n_h_layers - 1):
            h_rest.append((refs[idx], refs[idx + 1]))
            idx += 2
        y_params = []
        for _ in range(n_y_layers):
            y_params.append((refs[idx], refs[idx + 1]))
            idx += 2
        y_ref, hout_ref = refs[idx], refs[idx + 1]
        hx_ref, hchunk_ref = refs[idx + 2], refs[idx + 3]

        c = pl.program_id(0)

        # Load the initial hidden state into the resident VMEM carry once.
        @pl.when(c == 0)
        def _():
            hx_ref[:, :H] = h0_ref[...].astype(jnp.float32)

        # Hoist bias loads / broadcasts out of the unrolled timestep loop
        # (JAX does not CSE broadcast_in_dim).
        b0_b = jnp.broadcast_to(b0_ref[...], (batch, b0_ref.shape[1]))
        hb_b = [
            jnp.broadcast_to(b_ref[...], (batch, b_ref.shape[1]))
            for (_, b_ref) in h_rest
        ]

        # ---- recurrent hmlp over the chunk (fully unrolled, Tc <= 32) -------
        for t in range(tc):
            # Pack x_t next to h in the carry buffer -> single fused first dot.
            hx_ref[:, H:] = x_ref[t].astype(jnp.float32)
            act = (
                jnp.dot(hx_ref[...], w0_ref[...], preferred_element_type=jnp.float32)
                + b0_b
            )
            if n_h_layers > 1:
                act = _silu(act)
            for i, (w_ref, _) in enumerate(h_rest):
                act = (
                    jnp.dot(act, w_ref[...], preferred_element_type=jnp.float32)
                    + hb_b[i]
                )
                if i < n_h_layers - 2:
                    act = _silu(act)
            h_new = act
            hx_ref[:, :H] = h_new
            hchunk_ref[t] = h_new

        # ---- ymlp batched over the whole chunk: (Tc*B, H) fills MXU rows ----
        act = hchunk_ref[...].reshape(tc * batch, H)
        for i, (w_ref, b_ref) in enumerate(y_params):
            act = (
                jnp.dot(act, w_ref[...], preferred_element_type=jnp.float32)
                + b_ref[...]
            )
            if i < n_y_layers - 1:
                act = _silu(act)
        y_ref[...] = act.reshape(tc, batch, act.shape[-1]).astype(y_ref.dtype)

        # Refresh the resident h_final block every chunk (cheap VMEM store);
        # correct at the end of the grid without relying on last-step writes.
        hout_ref[...] = hx_ref[:, :H].astype(hout_ref.dtype)

    return kernel


# --------------------------- wrappers ----------------------------------------


def _const_spec(arr):
    ndim = arr.ndim
    return pl.BlockSpec(arr.shape, lambda c, _n=ndim: (0,) * _n)


def _pick_time_chunk(seq_len, max_chunk=32):
    tc = min(seq_len, max_chunk)
    while seq_len % tc:
        tc -= 1
    return tc


@functools.partial(jax.jit, static_argnames=("hidden_dim", "output_dim"))
def general_rnn_forward_sequence(
    x_seq, h_layers, y_layers, h0=None, *, hidden_dim, output_dim
):
    """Fused RNN over a whole sequence.

    x_seq: (B, T, input_dim); h0: (B, hidden_dim) or None (zeros).
    h_layers / y_layers: tuples of (W_t, b_row) with W_t (in, out), b_row (1, out).
    Returns (y_seq (B, T, output_dim), h_final (B, hidden_dim)).
    """
    B, T, I = x_seq.shape
    if h0 is None:
        h0 = jnp.zeros((B, hidden_dim), jnp.float32)
    h0 = h0.astype(jnp.float32)
    # Time-major layout so x_ref[t] is a contiguous (B, I) tile in-kernel.
    # (T*B*I is tiny here; for very long sequences this extra HBM pass would
    #  be worth eliminating by chunk-loading (B,Tc,I) slabs instead.)
    x_tbi = jnp.transpose(x_seq, (1, 0, 2)).astype(jnp.float32)  # (T, B, I)

    # Lane-dense y output: pad last ymlp layer to a multiple of 128 lanes.
    o_pad = ((output_dim + 127) // 128) * 128
    wyl, byl = y_layers[-1]
    pad = o_pad - output_dim
    wyl_p = jnp.pad(wyl, ((0, 0), (0, pad)))
    byl_p = jnp.pad(byl, ((0, 0), (0, pad)))

    flat_params = []
    for w, b in h_layers:
        flat_params += [w, b]
    for w, b in list(y_layers[:-1]) + [(wyl_p, byl_p)]:
        flat_params += [w, b]

    tc = _pick_time_chunk(T)
    n_chunks = T // tc

    kernel = _make_fused_rnn_kernel(
        len(h_layers), len(y_layers), tc, B, hidden_dim, I
    )

    in_specs = [
        pl.BlockSpec((B, hidden_dim), lambda c: (0, 0)),   # h0 (loaded once)
        pl.BlockSpec((tc, B, I), lambda c: (c, 0, 0)),     # x chunk streamed
    ] + [_const_spec(a) for a in flat_params]              # weights resident in VMEM

    out_shape = (
        jax.ShapeDtypeStruct((T, B, o_pad), jnp.float32),    # y, lane-dense
        jax.ShapeDtypeStruct((B, hidden_dim), jnp.float32),  # final hidden state
    )
    out_specs = (
        pl.BlockSpec((tc, B, o_pad), lambda c: (c, 0, 0)),
        pl.BlockSpec((B, hidden_dim), lambda c: (0, 0)),
    )

    y_pad, h_final = pl.pallas_call(
        kernel,
        grid=(n_chunks,),
        out_shape=out_shape,
        in_specs=in_specs,
        out_specs=out_specs,
        scratch_shapes=[
            pltpu.VMEM((B, hidden_dim + I), jnp.float32),   # hx carry
            pltpu.VMEM((tc, B, hidden_dim), jnp.float32),   # per-chunk h stack
        ],
        compiler_params=pltpu.CompilerParams(
            dimension_semantics=("arbitrary",),  # time recurrence: sequential axis
        ),
    )(h0, x_tbi, *flat_params)

    y_seq = jnp.transpose(y_pad[:, :, :output_dim], (1, 0, 2))  # (B, T, O)
    return y_seq, h_final


def general_rnn_forward(x, h, h_layers, y_layers, *, hidden_dim, output_dim):
    """Single RNN step (the module's forward()).  x: (B, I), h: (B, H) or None."""
    y_seq, h_new = general_rnn_forward_sequence(
        x[:, None, :], h_layers, y_layers, h0=h,
        hidden_dim=hidden_dim, output_dim=output_dim,
    )
    return y_seq[:, 0, :], h_new


# ----------------------- parameter construction ------------------------------


def _init_linear(key, in_dim, out_dim):
    """Mirror torch.nn.Linear init U(-1/sqrt(in), 1/sqrt(in)).
    W returned as (in, out); bias as (1, out)."""
    kw, kb = jax.random.split(key)
    bound = 1.0 / jnp.sqrt(jnp.float32(in_dim))
    w = jax.random.uniform(kw, (in_dim, out_dim), jnp.float32, -bound, bound)
    b = jax.random.uniform(kb, (1, out_dim), jnp.float32, -bound, bound)
    return w, b


def build_mlp_params(key, in_dim, out_dim, width, depth):
    shp = [in_dim] + [width] * (depth - 1) + [out_dim]
    keys = jax.random.split(key, depth)
    return tuple(_init_linear(keys[i], shp[i], shp[i + 1]) for i in range(depth))


# ---------------------------- reference --------------------------------------


def _mlp_ref(x, layers):
    act = x
    n = len(layers)
    for i, (w, b) in enumerate(layers):
        act = act @ w + b
        if i < n - 1:
            act = jax.nn.silu(act)
    return act


def general_rnn_forward_ref(x, h, h_layers, y_layers):
    hx = jnp.concatenate([h, x], axis=1)
    h_new = _mlp_ref(hx, h_layers)
    y = _mlp_ref(h_new, y_layers)
    return y, h_new


def general_rnn_forward_sequence_ref(x_seq, h_layers, y_layers, hidden_dim):
    B, T, _ = x_seq.shape
    h = jnp.zeros((B, hidden_dim), jnp.float32)
    ys = []
    for t in range(T):
        y, h = general_rnn_forward_ref(x_seq[:, t, :], h, h_layers, y_layers)
        ys.append(y)
    return jnp.stack(ys, axis=1), h


# ------------------------------ main ------------------------------------------

if __name__ == "__main__":
    # GeneralRNN config
    batch = 8
    seq_len = 16
    input_dim = 8
    hidden_dim = 32
    output_dim = 4
    hidden_mlp_width = 64
    hidden_mlp_depth = 2
    output_mlp_width = 64
    output_mlp_depth = 2

    key = jax.random.PRNGKey(0)
    k_x, k_xs, k_h, k_hmlp, k_ymlp = jax.random.split(key, 5)

    x = jax.random.normal(k_x, (batch, input_dim), jnp.float32)
    x_seq = jax.random.normal(k_xs, (batch, seq_len, input_dim), jnp.float32)
    h0 = jax.random.normal(k_h, (batch, hidden_dim), jnp.float32)

    h_layers = build_mlp_params(
        k_hmlp, hidden_dim + input_dim, hidden_dim, hidden_mlp_width, hidden_mlp_depth
    )
    y_layers = build_mlp_params(
        k_ymlp, hidden_dim, output_dim, output_mlp_width, output_mlp_depth
    )

    # ---- fused full-sequence path (forward_sequence semantics, h0 = zeros) ----
    y_seq, h_last = general_rnn_forward_sequence(
        x_seq, h_layers, y_layers, hidden_dim=hidden_dim, output_dim=output_dim
    )
    y_seq = jax.block_until_ready(y_seq)
    h_last = jax.block_until_ready(h_last)

    y_seq_ref, h_last_ref = general_rnn_forward_sequence_ref(
        x_seq, h_layers, y_layers, hidden_dim
    )
    assert y_seq.shape == (batch, seq_len, output_dim)
    assert h_last.shape == (batch, hidden_dim)
    assert jnp.allclose(y_seq, y_seq_ref, atol=1e-3, rtol=1e-3), "y_seq mismatch"
    assert jnp.allclose(h_last, h_last_ref, atol=1e-3, rtol=1e-3), "h_last mismatch"

    # ---- single-step path (forward(x, h) semantics) ----
    y1, h1 = general_rnn_forward(
        x, h0, h_layers, y_layers, hidden_dim=hidden_dim, output_dim=output_dim
    )
    y1 = jax.block_until_ready(y1)
    h1 = jax.block_until_ready(h1)
    y1_ref, h1_ref = general_rnn_forward_ref(x, h0, h_layers, y_layers)
    assert jnp.allclose(y1, y1_ref, atol=1e-4, rtol=1e-4), "single-step y mismatch"
    assert jnp.allclose(h1, h1_ref, atol=1e-4, rtol=1e-4), "single-step h mismatch"

    # ---- single-step with h=None (zeros initial hidden), as in forward() ----
    y0, _ = general_rnn_forward(
        x, None, h_layers, y_layers, hidden_dim=hidden_dim, output_dim=output_dim
    )
    y0 = jax.block_until_ready(y0)
    y0_ref, _ = general_rnn_forward_ref(
        x, jnp.zeros((batch, hidden_dim), jnp.float32), h_layers, y_layers
    )
    assert jnp.allclose(y0, y0_ref, atol=1e-4, rtol=1e-4), "h=None y mismatch"

    print("KERNEL_OK")
</pallas_src>

<mosaic_0001>
module attributes {stable_mosaic.version = 11 : i64} {
  func.func @kernel(%arg0: i32, %arg1: memref<8x32xf32, #tpu.memory_space<vmem>>, %arg2: memref<16x8x8xf32, #tpu.memory_space<vmem>>, %arg3: memref<40x64xf32, #tpu.memory_space<vmem>>, %arg4: memref<1x64xf32, #tpu.memory_space<vmem>>, %arg5: memref<64x32xf32, #tpu.memory_space<vmem>>, %arg6: memref<1x32xf32, #tpu.memory_space<vmem>>, %arg7: memref<32x64xf32, #tpu.memory_space<vmem>>, %arg8: memref<1x64xf32, #tpu.memory_space<vmem>>, %arg9: memref<64x128xf32, #tpu.memory_space<vmem>>, %arg10: memref<1x128xf32, #tpu.memory_space<vmem>>, %arg11: memref<16x8x128xf32, #tpu.memory_space<vmem>>, %arg12: memref<8x32xf32, #tpu.memory_space<vmem>>, %arg13: memref<8x40xf32, #tpu.memory_space<vmem>>, %arg14: memref<16x8x32xf32, #tpu.memory_space<vmem>>) attributes {dimension_semantics = [#tpu.dimension_semantics<arbitrary>], iteration_bounds = array<i64: 1>, scalar_prefetch = 0 : i64, scratch_operands = 2 : i64, tpu.core_type = #tpu.core_type<tc>, window_params = [{pipeline_mode = #tpu.pipeline_mode<synchronous>, transform_indices = @transform_0, window_bounds = array<i64: 8, 32>}, {transform_indices = @transform_1, window_bounds = array<i64: 16, 8, 8>}, {pipeline_mode = #tpu.pipeline_mode<synchronous>, transform_indices = @transform_2, window_bounds = array<i64: 40, 64>}, {pipeline_mode = #tpu.pipeline_mode<synchronous>, transform_indices = @transform_3, window_bounds = array<i64: 1, 64>}, {pipeline_mode = #tpu.pipeline_mode<synchronous>, transform_indices = @transform_4, window_bounds = array<i64: 64, 32>}, {pipeline_mode = #tpu.pipeline_mode<synchronous>, transform_indices = @transform_5, window_bounds = array<i64: 1, 32>}, {pipeline_mode = #tpu.pipeline_mode<synchronous>, transform_indices = @transform_6, window_bounds = array<i64: 32, 64>}, {pipeline_mode = #tpu.pipeline_mode<synchronous>, transform_indices = @transform_7, window_bounds = array<i64: 1, 64>}, {pipeline_mode = #tpu.pipeline_mode<synchronous>, transform_indices = @transform_8, window_bounds = array<i64: 64, 128>}, {pipeline_mode = #tpu.pipeline_mode<synchronous>, transform_indices = @transform_9, window_bounds = array<i64: 1, 128>}, {transform_indices = @transform_10, window_bounds = array<i64: 16, 8, 128>}, {pipeline_mode = #tpu.pipeline_mode<synchronous>, transform_indices = @transform_11, window_bounds = array<i64: 8, 32>}]} {
    %c0_i32 = arith.constant 0 : i32
    %0 = arith.cmpi eq, %arg0, %c0_i32 : i32
    %1 = arith.extui %0 : i1 to i32
    %c0_i32_0 = arith.constant 0 : i32
    %2 = arith.cmpi ne, %1, %c0_i32_0 : i32
    scf.if %2 {
      %c0_312 = arith.constant 0 : index
      %c0_313 = arith.constant 0 : index
      %351 = vector.load %arg1[%c0_312, %c0_313] : memref<8x32xf32, #tpu.memory_space<vmem>>, vector<8x32xf32>
      %c0_314 = arith.constant 0 : index
      %c0_315 = arith.constant 0 : index
      %352 = vector.load %arg13[%c0_314, %c0_315] : memref<8x40xf32, #tpu.memory_space<vmem>>, vector<8x32xf32>
      tpu.vector_store %arg13[%c0_314, %c0_315], %351 {strides = array<i32>} : memref<8x40xf32, #tpu.memory_space<vmem>>, vector<8x32xf32>,
    } else {
    }
    %c0 = arith.constant 0 : index
    %c0_1 = arith.constant 0 : index
    %3 = vector.load %arg4[%c0, %c0_1] : memref<1x64xf32, #tpu.memory_space<vmem>>, vector<1x64xf32>
    %4 = vector.shape_cast %3 : vector<1x64xf32> to vector<1x64xf32>
    %5 = vector.broadcast %4 : vector<1x64xf32> to vector<8x64xf32>
    %c0_2 = arith.constant 0 : index
    %c0_3 = arith.constant 0 : index
    %6 = vector.load %arg6[%c0_2, %c0_3] : memref<1x32xf32, #tpu.memory_space<vmem>>, vector<1x32xf32>
    %7 = vector.shape_cast %6 : vector<1x32xf32> to vector<1x32xf32>
    %8 = vector.broadcast %7 : vector<1x32xf32> to vector<8x32xf32>
    %c0_4 = arith.constant 0 : index
    %c0_5 = arith.constant 0 : index
    %c0_6 = arith.constant 0 : index
    %9 = vector.load %arg2[%c0_4, %c0_5, %c0_6] : memref<16x8x8xf32, #tpu.memory_space<vmem>>, vector<1x8x8xf32>
    %10 = vector.shape_cast %9 : vector<1x8x8xf32> to vector<8x8xf32>
    %c0_7 = arith.constant 0 : index
    %c32 = arith.constant 32 : index
    %11 = vector.load %arg13[%c0_7, %c32] : memref<8x40xf32, #tpu.memory_space<vmem>>, vector<8x8xf32>
    tpu.vector_store %arg13[%c0_7, %c32], %10 {strides = array<i32>} : memref<8x40xf32, #tpu.memory_space<vmem>>, vector<8x8xf32>,
    %c0_8 = arith.constant 0 : index
    %c0_9 = arith.constant 0 : index
    %12 = vector.load %arg13[%c0_8, %c0_9] : memref<8x40xf32, #tpu.memory_space<vmem>>, vector<8x40xf32>
    %c0_10 = arith.constant 0 : index
    %c0_11 = arith.constant 0 : index
    %13 = vector.load %arg3[%c0_10, %c0_11] : memref<40x64xf32, #tpu.memory_space<vmem>>, vector<40x64xf32>
    %cst = arith.constant dense<0.000000e+00> : vector<8x64xf32>
    %14 = tpu.matmul %12, %13, %cst {dimension_numbers = #tpu.dot_dimension_numbers<[1], [0], [0], [1], [0, 0, 1, 1], [], []>} : vector<8x40xf32>, vector<40x64xf32>, vector<8x64xf32> -> vector<8x64xf32>
    %15 = arith.addf %14, %5 : vector<8x64xf32>
    %16 = arith.negf %15 : vector<8x64xf32>
    %17 = math.exp %16 : vector<8x64xf32>
    %cst_12 = arith.constant 1.000000e+00 : f32
    %18 = vector.broadcast %cst_12 : f32 to vector<8x64xf32>
    %19 = arith.addf %18, %17 : vector<8x64xf32>
    %20 = arith.divf %18, %19 : vector<8x64xf32>
    %21 = arith.mulf %15, %20 : vector<8x64xf32>
    %c0_13 = arith.constant 0 : index
    %c0_14 = arith.constant 0 : index
    %22 = vector.load %arg5[%c0_13, %c0_14] : memref<64x32xf32, #tpu.memory_space<vmem>>, vector<64x32xf32>
    %cst_15 = arith.constant dense<0.000000e+00> : vector<8x32xf32>
    %23 = tpu.matmul %21, %22, %cst_15 {dimension_numbers = #tpu.dot_dimension_numbers<[1], [0], [0], [1], [0, 0, 1, 1], [], []>} : vector<8x64xf32>, vector<64x32xf32>, vector<8x32xf32> -> vector<8x32xf32>
    %24 = arith.addf %23, %8 : vector<8x32xf32>
    %c0_16 = arith.constant 0 : index
    %c0_17 = arith.constant 0 : index
    %25 = vector.load %arg13[%c0_16, %c0_17] : memref<8x40xf32, #tpu.memory_space<vmem>>, vector<8x32xf32>
    tpu.vector_store %arg13[%c0_16, %c0_17], %24 {strides = array<i32>} : memref<8x40xf32, #tpu.memory_space<vmem>>, vector<8x32xf32>,
    %c0_18 = arith.constant 0 : index
    %c0_19 = arith.constant 0 : index
    %c0_20 = arith.constant 0 : index
    %26 = vector.load %arg14[%c0_18, %c0_19, %c0_20] : memref<16x8x32xf32, #tpu.memory_space<vmem>>, vector<1x8x32xf32>
    %27 = vector.shape_cast %26 : vector<1x8x32xf32> to vector<8x32xf32>
    %28 = vector.shape_cast %24 : vector<8x32xf32> to vector<1x8x32xf32>
    tpu.vector_store %arg14[%c0_18, %c0_19, %c0_20], %28 {strides = array<i32>} : memref<16x8x32xf32, #tpu.memory_space<vmem>>, vector<1x8x32xf32>,
    %c1 = arith.constant 1 : index
    %c0_21 = arith.constant 0 : index
    %c0_22 = arith.constant 0 : index
    %29 = vector.load %arg2[%c1, %c0_21, %c0_22] : memref<16x8x8xf32, #tpu.memory_space<vmem>>, vector<1x8x8xf32>
    %30 = vector.shape_cast %29 : vector<1x8x8xf32> to vector<8x8xf32>
    %c0_23 = arith.constant 0 : index
    %c32_24 = arith.constant 32 : index
    %31 = vector.load %arg13[%c0_23, %c32_24] : memref<8x40xf32, #tpu.memory_space<vmem>>, vector<8x8xf32>
    tpu.vector_store %arg13[%c0_23, %c32_24], %30 {strides = array<i32>} : memref<8x40xf32, #tpu.memory_space<vmem>>, vector<8x8xf32>,
    %c0_25 = arith.constant 0 : index
    %c0_26 = arith.constant 0 : index
    %32 = vector.load %arg13[%c0_25, %c0_26] : memref<8x40xf32, #tpu.memory_space<vmem>>, vector<8x40xf32>
    %c0_27 = arith.constant 0 : index
    %c0_28 = arith.constant 0 : index
    %33 = vector.load %arg3[%c0_27, %c0_28] : memref<40x64xf32, #tpu.memory_space<vmem>>, vector<40x64xf32>
    %cst_29 = arith.constant dense<0.000000e+00> : vector<8x64xf32>
    %34 = tpu.matmul %32, %33, %cst_29 {dimension_numbers = #tpu.dot_dimension_numbers<[1], [0], [0], [1], [0, 0, 1, 1], [], []>} : vector<8x40xf32>, vector<40x64xf32>, vector<8x64xf32> -> vector<8x64xf32>
    %35 = arith.addf %34, %5 : vector<8x64xf32>
    %36 = arith.negf %35 : vector<8x64xf32>
    %37 = math.exp %36 : vector<8x64xf32>
    %cst_30 = arith.constant 1.000000e+00 : f32
    %38 = vector.broadcast %cst_30 : f32 to vector<8x64xf32>
    %39 = arith.addf %38, %37 : vector<8x64xf32>
    %40 = arith.divf %38, %39 : vector<8x64xf32>
    %41 = arith.mulf %35, %40 : vector<8x64xf32>
    %c0_31 = arith.constant 0 : index
    %c0_32 = arith.constant 0 : index
    %42 = vector.load %arg5[%c0_31, %c0_32] : memref<64x32xf32, #tpu.memory_space<vmem>>, vector<64x32xf32>
    %cst_33 = arith.constant dense<0.000000e+00> : vector<8x32xf32>
    %43 = tpu.matmul %41, %42, %cst_33 {dimension_numbers = #tpu.dot_dimension_numbers<[1], [0], [0], [1], [0, 0, 1, 1], [], []>} : vector<8x64xf32>, vector<64x32xf32>, vector<8x32xf32> -> vector<8x32xf32>
    %44 = arith.addf %43, %8 : vector<8x32xf32>
    %c0_34 = arith.constant 0 : index
    %c0_35 = arith.constant 0 : index
    %45 = vector.load %arg13[%c0_34, %c0_35] : memref<8x40xf32, #tpu.memory_space<vmem>>, vector<8x32xf32>
    tpu.vector_store %arg13[%c0_34, %c0_35], %44 {strides = array<i32>} : memref<8x40xf32, #tpu.memory_space<vmem>>, vector<8x32xf32>,
    %c1_36 = arith.constant 1 : index
    %c0_37 = arith.constant 0 : index
    %c0_38 = arith.constant 0 : index
    %46 = vector.load %arg14[%c1_36, %c0_37, %c0_38] : memref<16x8x32xf32, #tpu.memory_space<vmem>>, vector<1x8x32xf32>
    %47 = vector.shape_cast %46 : vector<1x8x32xf32> to vector<8x32xf32>
    %48 = vector.shape_cast %44 : vector<8x32xf32> to vector<1x8x32xf32>
    tpu.vector_store %arg14[%c1_36, %c0_37, %c0_38], %48 {strides = array<i32>} : memref<16x8x32xf32, #tpu.memory_space<vmem>>, vector<1x8x32xf32>,
    %c2 = arith.constant 2 : index
    %c0_39 = arith.constant 0 : index
    %c0_40 = arith.constant 0 : index
    %49 = vector.load %arg2[%c2, %c0_39, %c0_40] : memref<16x8x8xf32, #tpu.memory_space<vmem>>, vector<1x8x8xf32>
    %50 = vector.shape_cast %49 : vector<1x8x8xf32> to vector<8x8xf32>
    %c0_41 = arith.constant 0 : index
    %c32_42 = arith.constant 32 : index
    %51 = vector.load %arg13[%c0_41, %c32_42] : memref<8x40xf32, #tpu.memory_space<vmem>>, vector<8x8xf32>
    tpu.vector_store %arg13[%c0_41, %c32_42], %50 {strides = array<i32>} : memref<8x40xf32, #tpu.memory_space<vmem>>, vector<8x8xf32>,
    %c0_43 = arith.constant 0 : index
    %c0_44 = arith.constant 0 : index
    %52 = vector.load %arg13[%c0_43, %c0_44] : memref<8x40xf32, #tpu.memory_space<vmem>>, vector<8x40xf32>
    %c0_45 = arith.constant 0 : index
    %c0_46 = arith.constant 0 : index
    %53 = vector.load %arg3[%c0_45, %c0_46] : memref<40x64xf32, #tpu.memory_space<vmem>>, vector<40x64xf32>
    %cst_47 = arith.constant dense<0.000000e+00> : vector<8x64xf32>
    %54 = tpu.matmul %52, %53, %cst_47 {dimension_numbers = #tpu.dot_dimension_numbers<[1], [0], [0], [1], [0, 0, 1, 1], [], []>} : vector<8x40xf32>, vector<40x64xf32>, vector<8x64xf32> -> vector<8x64xf32>
    %55 = arith.addf %54, %5 : vector<8x64xf32>
    %56 = arith.negf %55 : vector<8x64xf32>
    %57 = math.exp %56 : vector<8x64xf32>
    %cst_48 = arith.constant 1.000000e+00 : f32
    %58 = vector.broadcast %cst_48 : f32 to vector<8x64xf32>
    %59 = arith.addf %58, %57 : vector<8x64xf32>
    %60 = arith.divf %58, %59 : vector<8x64xf32>
    %61 = arith.mulf %55, %60 : vector<8x64xf32>
    %c0_49 = arith.constant 0 : index
    %c0_50 = arith.constant 0 : index
    %62 = vector.load %arg5[%c0_49, %c0_50] : memref<64x32xf32, #tpu.memory_space<vmem>>, vector<64x32xf32>
    %cst_51 = arith.constant dense<0.000000e+00> : vector<8x32xf32>
    %63 = tpu.matmul %61, %62, %cst_51 {dimension_numbers = #tpu.dot_dimension_numbers<[1], [0], [0], [1], [0, 0, 1, 1], [], []>} : vector<8x64xf32>, vector<64x32xf32>, vector<8x32xf32> -> vector<8x32xf32>
    %64 = arith.addf %63, %8 : vector<8x32xf32>
    %c0_52 = arith.constant 0 : index
    %c0_53 = arith.constant 0 : index
    %65 = vector.load %arg13[%c0_52, %c0_53] : memref<8x40xf32, #tpu.memory_space<vmem>>, vector<8x32xf32>
    tpu.vector_store %arg13[%c0_52, %c0_53], %64 {strides = array<i32>} : memref<8x40xf32, #tpu.memory_space<vmem>>, vector<8x32xf32>,
    %c2_54 = arith.constant 2 : index
    %c0_55 = arith.constant 0 : index
    %c0_56 = arith.constant 0 : index
    %66 = vector.load %arg14[%c2_54, %c0_55, %c0_56] : memref<16x8x32xf32, #tpu.memory_space<vmem>>, vector<1x8x32xf32>
    %67 = vector.shape_cast %66 : vector<1x8x32xf32> to vector<8x32xf32>
    %68 = vector.shape_cast %64 : vector<8x32xf32> to vector<1x8x32xf32>
    tpu.vector_store %arg14[%c2_54, %c0_55, %c0_56], %68 {strides = array<i32>} : memref<16x8x32xf32, #tpu.memory_space<vmem>>, vector<1x8x32xf32>,
    %c3 = arith.constant 3 : index
    %c0_57 = arith.constant 0 : index
    %c0_58 = arith.constant 0 : index
    %69 = vector.load %arg2[%c3, %c0_57, %c0_58] : memref<16x8x8xf32, #tpu.memory_space<vmem>>, vector<1x8x8xf32>
    %70 = vector.shape_cast %69 : vector<1x8x8xf32> to vector<8x8xf32>
    %c0_59 = arith.constant 0 : index
    %c32_60 = arith.constant 32 : index
    %71 = vector.load %arg13[%c0_59, %c32_60] : memref<8x40xf32, #tpu.memory_space<vmem>>, vector<8x8xf32>
    tpu.vector_store %arg13[%c0_59, %c32_60], %70 {strides = array<i32>} : memref<8x40xf32, #tpu.memory_space<vmem>>, vector<8x8xf32>,
    %c0_61 = arith.constant 0 : index
    %c0_62 = arith.constant 0 : index
    %72 = vector.load %arg13[%c0_61, %c0_62] : memref<8x40xf32, #tpu.memory_space<vmem>>, vector<8x40xf32>
    %c0_63 = arith.constant 0 : index
    %c0_64 = arith.constant 0 : index
    %73 = vector.load %arg3[%c0_63, %c0_64] : memref<40x64xf32, #tpu.memory_space<vmem>>, vector<40x64xf32>
    %cst_65 = arith.constant dense<0.000000e+00> : vector<8x64xf32>
    %74 = tpu.matmul %72, %73, %cst_65 {dimension_numbers = #tpu.dot_dimension_numbers<[1], [0], [0], [1], [0, 0, 1, 1], [], []>} : vector<8x40xf32>, vector<40x64xf32>, vector<8x64xf32> -> vector<8x64xf32>
    %75 = arith.addf %74, %5 : vector<8x64xf32>
    %76 = arith.negf %75 : vector<8x64xf32>
    %77 = math.exp %76 : vector<8x64xf32>
    %cst_66 = arith.constant 1.000000e+00 : f32
    %78 = vector.broadcast %cst_66 : f32 to vector<8x64xf32>
    %79 = arith.addf %78, %77 : vector<8x64xf32>
    %80 = arith.divf %78, %79 : vector<8x64xf32>
    %81 = arith.mulf %75, %80 : vector<8x64xf32>
    %c0_67 = arith.constant 0 : index
    %c0_68 = arith.constant 0 : index
    %82 = vector.load %arg5[%c0_67, %c0_68] : memref<64x32xf32, #tpu.memory_space<vmem>>, vector<64x32xf32>
    %cst_69 = arith.constant dense<0.000000e+00> : vector<8x32xf32>
    %83 = tpu.matmul %81, %82, %cst_69 {dimension_numbers = #tpu.dot_dimension_numbers<[1], [0], [0], [1], [0, 0, 1, 1], [], []>} : vector<8x64xf32>, vector<64x32xf32>, vector<8x32xf32> -> vector<8x32xf32>
    %84 = arith.addf %83, %8 : vector<8x32xf32>
    %c0_70 = arith.constant 0 : index
    %c0_71 = arith.constant 0 : index
    %85 = vector.load %arg13[%c0_70, %c0_71] : memref<8x40xf32, #tpu.memory_space<vmem>>, vector<8x32xf32>
    tpu.vector_store %arg13[%c0_70, %c0_71], %84 {strides = array<i32>} : memref<8x40xf32, #tpu.memory_space<vmem>>, vector<8x32xf32>,
    %c3_72 = arith.constant 3 : index
    %c0_73 = arith.constant 0 : index
    %c0_74 = arith.constant 0 : index
    %86 = vector.load %arg14[%c3_72, %c0_73, %c0_74] : memref<16x8x32xf32, #tpu.memory_space<vmem>>, vector<1x8x32xf32>
    %87 = vector.shape_cast %86 : vector<1x8x32xf32> to vector<8x32xf32>
    %88 = vector.shape_cast %84 : vector<8x32xf32> to vector<1x8x32xf32>
    tpu.vector_store %arg14[%c3_72, %c0_73, %c0_74], %88 {strides = array<i32>} : memref<16x8x32xf32, #tpu.memory_space<vmem>>, vector<1x8x32xf32>,
    %c4 = arith.constant 4 : index
    %c0_75 = arith.constant 0 : index
    %c0_76 = arith.constant 0 : index
    %89 = vector.load %arg2[%c4, %c0_75, %c0_76] : memref<16x8x8xf32, #tpu.memory_space<vmem>>, vector<1x8x8xf32>
    %90 = vector.shape_cast %89 : vector<1x8x8xf32> to vector<8x8xf32>
    %c0_77 = arith.constant 0 : index
    %c32_78 = arith.constant 32 : index
    %91 = vector.load %arg13[%c0_77, %c32_78] : memref<8x40xf32, #tpu.memory_space<vmem>>, vector<8x8xf32>
    tpu.vector_store %arg13[%c0_77, %c32_78], %90 {strides = array<i32>} : memref<8x40xf32, #tpu.memory_space<vmem>>, vector<8x8xf32>,
    %c0_79 = arith.constant 0 : index
    %c0_80 = arith.constant 0 : index
    %92 = vector.load %arg13[%c0_79, %c0_80] : memref<8x40xf32, #tpu.memory_space<vmem>>, vector<8x40xf32>
    %c0_81 = arith.constant 0 : index
    %c0_82 = arith.constant 0 : index
    %93 = vector.load %arg3[%c0_81, %c0_82] : memref<40x64xf32, #tpu.memory_space<vmem>>, vector<40x64xf32>
    %cst_83 = arith.constant dense<0.000000e+00> : vector<8x64xf32>
    %94 = tpu.matmul %92, %93, %cst_83 {dimension_numbers = #tpu.dot_dimension_numbers<[1], [0], [0], [1], [0, 0, 1, 1], [], []>} : vector<8x40xf32>, vector<40x64xf32>, vector<8x64xf32> -> vector<8x64xf32>
    %95 = arith.addf %94, %5 : vector<8x64xf32>
    %96 = arith.negf %95 : vector<8x64xf32>
    %97 = math.exp %96 : vector<8x64xf32>
    %cst_84 = arith.constant 1.000000e+00 : f32
    %98 = vector.broadcast %cst_84 : f32 to vector<8x64xf32>
    %99 = arith.addf %98, %97 : vector<8x64xf32>
    %100 = arith.divf %98, %99 : vector<8x64xf32>
    %101 = arith.mulf %95, %100 : vector<8x64xf32>
    %c0_85 = arith.constant 0 : index
    %c0_86 = arith.constant 0 : index
    %102 = vector.load %arg5[%c0_85, %c0_86] : memref<64x32xf32, #tpu.memory_space<vmem>>, vector<64x32xf32>
    %cst_87 = arith.constant dense<0.000000e+00> : vector<8x32xf32>
    %103 = tpu.matmul %101, %102, %cst_87 {dimension_numbers = #tpu.dot_dimension_numbers<[1], [0], [0], [1], [0, 0, 1, 1], [], []>} : vector<8x64xf32>, vector<64x32xf32>, vector<8x32xf32> -> vector<8x32xf32>
    %104 = arith.addf %103, %8 : vector<8x32xf32>
    %c0_88 = arith.constant 0 : index
    %c0_89 = arith.constant 0 : index
    %105 = vector.load %arg13[%c0_88, %c0_89] : memref<8x40xf32, #tpu.memory_space<vmem>>, vector<8x32xf32>
    tpu.vector_store %arg13[%c0_88, %c0_89], %104 {strides = array<i32>} : memref<8x40xf32, #tpu.memory_space<vmem>>, vector<8x32xf32>,
    %c4_90 = arith.constant 4 : index
    %c0_91 = arith.constant 0 : index
    %c0_92 = arith.constant 0 : index
    %106 = vector.load %arg14[%c4_90, %c0_91, %c0_92] : memref<16x8x32xf32, #tpu.memory_space<vmem>>, vector<1x8x32xf32>
    %107 = vector.shape_cast %106 : vector<1x8x32xf32> to vector<8x32xf32>
    %108 = vector.shape_cast %104 : vector<8x32xf32> to vector<1x8x32xf32>
    tpu.vector_store %arg14[%c4_90, %c0_91, %c0_92], %108 {strides = array<i32>} : memref<16x8x32xf32, #tpu.memory_space<vmem>>, vector<1x8x32xf32>,
    %c5 = arith.constant 5 : index
    %c0_93 = arith.constant 0 : index
    %c0_94 = arith.constant 0 : index
    %109 = vector.load %arg2[%c5, %c0_93, %c0_94] : memref<16x8x8xf32, #tpu.memory_space<vmem>>, vector<1x8x8xf32>
    %110 = vector.shape_cast %109 : vector<1x8x8xf32> to vector<8x8xf32>
    %c0_95 = arith.constant 0 : index
    %c32_96 = arith.constant 32 : index
    %111 = vector.load %arg13[%c0_95, %c32_96] : memref<8x40xf32, #tpu.memory_space<vmem>>, vector<8x8xf32>
    tpu.vector_store %arg13[%c0_95, %c32_96], %110 {strides = array<i32>} : memref<8x40xf32, #tpu.memory_space<vmem>>, vector<8x8xf32>,
    %c0_97 = arith.constant 0 : index
    %c0_98 = arith.constant 0 : index
    %112 = vector.load %arg13[%c0_97, %c0_98] : memref<8x40xf32, #tpu.memory_space<vmem>>, vector<8x40xf32>
    %c0_99 = arith.constant 0 : index
    %c0_100 = arith.constant 0 : index
    %113 = vector.load %arg3[%c0_99, %c0_100] : memref<40x64xf32, #tpu.memory_space<vmem>>, vector<40x64xf32>
    %cst_101 = arith.constant dense<0.000000e+00> : vector<8x64xf32>
    %114 = tpu.matmul %112, %113, %cst_101 {dimension_numbers = #tpu.dot_dimension_numbers<[1], [0], [0], [1], [0, 0, 1, 1], [], []>} : vector<8x40xf32>, vector<40x64xf32>, vector<8x64xf32> -> vector<8x64xf32>
    %115 = arith.addf %114, %5 : vector<8x64xf32>
    %116 = arith.negf %115 : vector<8x64xf32>
    %117 = math.exp %116 : vector<8x64xf32>
    %cst_102 = arith.constant 1.000000e+00 : f32
    %118 = vector.broadcast %cst_102 : f32 to vector<8x64xf32>
    %119 = arith.addf %118, %117 : vector<8x64xf32>
    %120 = arith.divf %118, %119 : vector<8x64xf32>
    %121 = arith.mulf %115, %120 : vector<8x64xf32>
    %c0_103 = arith.constant 0 : index
    %c0_104 = arith.constant 0 : index
    %122 = vector.load %arg5[%c0_103, %c0_104] : memref<64x32xf32, #tpu.memory_space<vmem>>, vector<64x32xf32>
    %cst_105 = arith.constant dense<0.000000e+00> : vector<8x32xf32>
    %123 = tpu.matmul %121, %122, %cst_105 {dimension_numbers = #tpu.dot_dimension_numbers<[1], [0], [0], [1], [0, 0, 1, 1], [], []>} : vector<8x64xf32>, vector<64x32xf32>, vector<8x32xf32> -> vector<8x32xf32>
    %124 = arith.addf %123, %8 : vector<8x32xf32>
    %c0_106 = arith.constant 0 : index
    %c0_107 = arith.constant 0 : index
    %125 = vector.load %arg13[%c0_106, %c0_107] : memref<8x40xf32, #tpu.memory_space<vmem>>, vector<8x32xf32>
    tpu.vector_store %arg13[%c0_106, %c0_107], %124 {strides = array<i32>} : memref<8x40xf32, #tpu.memory_space<vmem>>, vector<8x32xf32>,
    %c5_108 = arith.constant 5 : index
    %c0_109 = arith.constant 0 : index
    %c0_110 = arith.constant 0 : index
    %126 = vector.load %arg14[%c5_108, %c0_109, %c0_110] : memref<16x8x32xf32, #tpu.memory_space<vmem>>, vector<1x8x32xf32>
    %127 = vector.shape_cast %126 : vector<1x8x32xf32> to vector<8x32xf32>
    %128 = vector.shape_cast %124 : vector<8x32xf32> to vector<1x8x32xf32>
    tpu.vector_store %arg14[%c5_108, %c0_109, %c0_110], %128 {strides = array<i32>} : memref<16x8x32xf32, #tpu.memory_space<vmem>>, vector<1x8x32xf32>,
    %c6 = arith.constant 6 : index
    %c0_111 = arith.constant 0 : index
    %c0_112 = arith.constant 0 : index
    %129 = vector.load %arg2[%c6, %c0_111, %c0_112] : memref<16x8x8xf32, #tpu.memory_space<vmem>>, vector<1x8x8xf32>
    %130 = vector.shape_cast %129 : vector<1x8x8xf32> to vector<8x8xf32>
    %c0_113 = arith.constant 0 : index
    %c32_114 = arith.constant 32 : index
    %131 = vector.load %arg13[%c0_113, %c32_114] : memref<8x40xf32, #tpu.memory_space<vmem>>, vector<8x8xf32>
    tpu.vector_store %arg13[%c0_113, %c32_114], %130 {strides = array<i32>} : memref<8x40xf32, #tpu.memory_space<vmem>>, vector<8x8xf32>,
    %c0_115 = arith.constant 0 : index
    %c0_116 = arith.constant 0 : index
    %132 = vector.load %arg13[%c0_115, %c0_116] : memref<8x40xf32, #tpu.memory_space<vmem>>, vector<8x40xf32>
    %c0_117 = arith.constant 0 : index
    %c0_118 = arith.constant 0 : index
    %133 = vector.load %arg3[%c0_117, %c0_118] : memref<40x64xf32, #tpu.memory_space<vmem>>, vector<40x64xf32>
    %cst_119 = arith.constant dense<0.000000e+00> : vector<8x64xf32>
    %134 = tpu.matmul %132, %133, %cst_119 {dimension_numbers = #tpu.dot_dimension_numbers<[1], [0], [0], [1], [0, 0, 1, 1], [], []>} : vector<8x40xf32>, vector<40x64xf32>, vector<8x64xf32> -> vector<8x64xf32>
    %135 = arith.addf %134, %5 : vector<8x64xf32>
    %136 = arith.negf %135 : vector<8x64xf32>
    %137 = math.exp %136 : vector<8x64xf32>
    %cst_120 = arith.constant 1.000000e+00 : f32
    %138 = vector.broadcast %cst_120 : f32 to vector<8x64xf32>
    %139 = arith.addf %138, %137 : vector<8x64xf32>
    %140 = arith.divf %138, %139 : vector<8x64xf32>
    %141 = arith.mulf %135, %140 : vector<8x64xf32>
    %c0_121 = arith.constant 0 : index
    %c0_122 = arith.constant 0 : index
    %142 = vector.load %arg5[%c0_121, %c0_122] : memref<64x32xf32, #tpu.memory_space<vmem>>, vector<64x32xf32>
    %cst_123 = arith.constant dense<0.000000e+00> : vector<8x32xf32>
    %143 = tpu.matmul %141, %142, %cst_123 {dimension_numbers = #tpu.dot_dimension_numbers<[1], [0], [0], [1], [0, 0, 1, 1], [], []>} : vector<8x64xf32>, vector<64x32xf32>, vector<8x32xf32> -> vector<8x32xf32>
    %144 = arith.addf %143, %8 : vector<8x32xf32>
    %c0_124 = arith.constant 0 : index
    %c0_125 = arith.constant 0 : index
    %145 = vector.load %arg13[%c0_124, %c0_125] : memref<8x40xf32, #tpu.memory_space<vmem>>, vector<8x32xf32>
    tpu.vector_store %arg13[%c0_124, %c0_125], %144 {strides = array<i32>} : memref<8x40xf32, #tpu.memory_space<vmem>>, vector<8x32xf32>,
    %c6_126 = arith.constant 6 : index
    %c0_127 = arith.constant 0 : index
    %c0_128 = arith.constant 0 : index
    %146 = vector.load %arg14[%c6_126, %c0_127, %c0_128] : memref<16x8x32xf32, #tpu.memory_space<vmem>>, vector<1x8x32xf32>
    %147 = vector.shape_cast %146 : vector<1x8x32xf32> to vector<8x32xf32>
    %148 = vector.shape_cast %144 : vector<8x32xf32> to vector<1x8x32xf32>
    tpu.vector_store %arg14[%c6_126, %c0_127, %c0_128], %148 {strides = array<i32>} : memref<16x8x32xf32, #tpu.memory_space<vmem>>, vector<1x8x32xf32>,
    %c7 = arith.constant 7 : index
    %c0_129 = arith.constant 0 : index
    %c0_130 = arith.constant 0 : index
    %149 = vector.load %arg2[%c7, %c0_129, %c0_130] : memref<16x8x8xf32, #tpu.memory_space<vmem>>, vector<1x8x8xf32>
    %150 = vector.shape_cast %149 : vector<1x8x8xf32> to vector<8x8xf32>
    %c0_131 = arith.constant 0 : index
    %c32_132 = arith.constant 32 : index
    %151 = vector.load %arg13[%c0_131, %c32_132] : memref<8x40xf32, #tpu.memory_space<vmem>>, vector<8x8xf32>
    tpu.vector_store %arg13[%c0_131, %c32_132], %150 {strides = array<i32>} : memref<8x40xf32, #tpu.memory_space<vmem>>, vector<8x8xf32>,
    %c0_133 = arith.constant 0 : index
    %c0_134 = arith.constant 0 : index
    %152 = vector.load %arg13[%c0_133, %c0_134] : memref<8x40xf32, #tpu.memory_space<vmem>>, vector<8x40xf32>
    %c0_135 = arith.constant 0 : index
    %c0_136 = arith.constant 0 : index
    %153 = vector.load %arg3[%c0_135, %c0_136] : memref<40x64xf32, #tpu.memory_space<vmem>>, vector<40x64xf32>
    %cst_137 = arith.constant dense<0.000000e+00> : vector<8x64xf32>
    %154 = tpu.matmul %152, %153, %cst_137 {dimension_numbers = #tpu.dot_dimension_numbers<[1], [0], [0], [1], [0, 0, 1, 1], [], []>} : vector<8x40xf32>, vector<40x64xf32>, vector<8x64xf32> -> vector<8x64xf32>
    %155 = arith.addf %154, %5 : vector<8x64xf32>
    %156 = arith.negf %155 : vector<8x64xf32>
    %157 = math.exp %156 : vector<8x64xf32>
    %cst_138 = arith.constant 1.000000e+00 : f32
    %158 = vector.broadcast %cst_138 : f32 to vector<8x64xf32>
    %159 = arith.addf %158, %157 : vector<8x64xf32>
    %160 = arith.divf %158, %159 : vector<8x64xf32>
    %161 = arith.mulf %155, %160 : vector<8x64xf32>
    %c0_139 = arith.constant 0 : index
    %c0_140 = arith.constant 0 : index
    %162 = vector.load %arg5[%c0_139, %c0_140] : memref<64x32xf32, #tpu.memory_space<vmem>>, vector<64x32xf32>
    %cst_141 = arith.constant dense<0.000000e+00> : vector<8x32xf32>
    %163 = tpu.matmul %161, %162, %cst_141 {dimension_numbers = #tpu.dot_dimension_numbers<[1], [0], [0], [1], [0, 0, 1, 1], [], []>} : vector<8x64xf32>, vector<64x32xf32>, vector<8x32xf32> -> vector<8x32xf32>
    %164 = arith.addf %163, %8 : vector<8x32xf32>
    %c0_142 = arith.constant 0 : index
    %c0_143 = arith.constant 0 : index
    %165 = vector.load %arg13[%c0_142, %c0_143] : memref<8x40xf32, #tpu.memory_space<vmem>>, vector<8x32xf32>
    tpu.vector_store %arg13[%c0_142, %c0_143], %164 {strides = array<i32>} : memref<8x40xf32, #tpu.memory_space<vmem>>, vector<8x32xf32>,
    %c7_144 = arith.constant 7 : index
    %c0_145 = arith.constant 0 : index
    %c0_146 = arith.constant 0 : index
    %166 = vector.load %arg14[%c7_144, %c0_145, %c0_146] : memref<16x8x32xf32, #tpu.memory_space<vmem>>, vector<1x8x32xf32>
    %167 = vector.shape_cast %166 : vector<1x8x32xf32> to vector<8x32xf32>
    %168 = vector.shape_cast %164 : vector<8x32xf32> to vector<1x8x32xf32>
    tpu.vector_store %arg14[%c7_144, %c0_145, %c0_146], %168 {strides = array<i32>} : memref<16x8x32xf32, #tpu.memory_space<vmem>>, vector<1x8x32xf32>,
    %c8 = arith.constant 8 : index
    %c0_147 = arith.constant 0 : index
    %c0_148 = arith.constant 0 : index
    %169 = vector.load %arg2[%c8, %c0_147, %c0_148] : memref<16x8x8xf32, #tpu.memory_space<vmem>>, vector<1x8x8xf32>
    %170 = vector.shape_cast %169 : vector<1x8x8xf32> to vector<8x8xf32>
    %c0_149 = arith.constant 0 : index
    %c32_150 = arith.constant 32 : index
    %171 = vector.load %arg13[%c0_149, %c32_150] : memref<8x40xf32, #tpu.memory_space<vmem>>, vector<8x8xf32>
    tpu.vector_store %arg13[%c0_149, %c32_150], %170 {strides = array<i32>} : memref<8x40xf32, #tpu.memory_space<vmem>>, vector<8x8xf32>,
    %c0_151 = arith.constant 0 : index
    %c0_152 = arith.constant 0 : index
    %172 = vector.load %arg13[%c0_151, %c0_152] : memref<8x40xf32, #tpu.memory_space<vmem>>, vector<8x40xf32>
    %c0_153 = arith.constant 0 : index
    %c0_154 = arith.constant 0 : index
    %173 = vector.load %arg3[%c0_153, %c0_154] : memref<40x64xf32, #tpu.memory_space<vmem>>, vector<40x64xf32>
    %cst_155 = arith.constant dense<0.000000e+00> : vector<8x64xf32>
    %174 = tpu.matmul %172, %173, %cst_155 {dimension_numbers = #tpu.dot_dimension_numbers<[1], [0], [0], [1], [0, 0, 1, 1], [], []>} : vector<8x40xf32>, vector<40x64xf32>, vector<8x64xf32> -> vector<8x64xf32>
    %175 = arith.addf %174, %5 : vector<8x64xf32>
    %176 = arith.negf %175 : vector<8x64xf32>
    %177 = math.exp %176 : vector<8x64xf32>
    %cst_156 = arith.constant 1.000000e+00 : f32
    %178 = vector.broadcast %cst_156 : f32 to vector<8x64xf32>
    %179 = arith.addf %178, %177 : vector<8x64xf32>
    %180 = arith.divf %178, %179 : vector<8x64xf32>
    %181 = arith.mulf %175, %180 : vector<8x64xf32>
    %c0_157 = arith.constant 0 : index
    %c0_158 = arith.constant 0 : index
    %182 = vector.load %arg5[%c0_157, %c0_158] : memref<64x32xf32, #tpu.memory_space<vmem>>, vector<64x32xf32>
    %cst_159 = arith.constant dense<0.000000e+00> : vector<8x32xf32>
    %183 = tpu.matmul %181, %182, %cst_159 {dimension_numbers = #tpu.dot_dimension_numbers<[1], [0], [0], [1], [0, 0, 1, 1], [], []>} : vector<8x64xf32>, vector<64x32xf32>, vector<8x32xf32> -> vector<8x32xf32>
    %184 = arith.addf %183, %8 : vector<8x32xf32>
    %c0_160 = arith.constant 0 : index
    %c0_161 = arith.constant 0 : index
    %185 = vector.load %arg13[%c0_160, %c0_161] : memref<8x40xf32, #tpu.memory_space<vmem>>, vector<8x32xf32>
    tpu.vector_store %arg13[%c0_160, %c0_161], %184 {strides = array<i32>} : memref<8x40xf32, #tpu.memory_space<vmem>>, vector<8x32xf32>,
    %c8_162 = arith.constant 8 : index
    %c0_163 = arith.constant 0 : index
    %c0_164 = arith.constant 0 : index
    %186 = vector.load %arg14[%c8_162, %c0_163, %c0_164] : memref<16x8x32xf32, #tpu.memory_space<vmem>>, vector<1x8x32xf32>
    %187 = vector.shape_cast %186 : vector<1x8x32xf32> to vector<8x32xf32>
    %188 = vector.shape_cast %184 : vector<8x32xf32> to vector<1x8x32xf32>
    tpu.vector_store %arg14[%c8_162, %c0_163, %c0_164], %188 {strides = array<i32>} : memref<16x8x32xf32, #tpu.memory_space<vmem>>, vector<1x8x32xf32>,
    %c9 = arith.constant 9 : index
    %c0_165 = arith.constant 0 : index
    %c0_166 = arith.constant 0 : index
    %189 = vector.load %arg2[%c9, %c0_165, %c0_166] : memref<16x8x8xf32, #tpu.memory_space<vmem>>, vector<1x8x8xf32>
    %190 = vector.shape_cast %189 : vector<1x8x8xf32> to vector<8x8xf32>
    %c0_167 = arith.constant 0 : index
    %c32_168 = arith.constant 32 : index
    %191 = vector.load %arg13[%c0_167, %c32_168] : memref<8x40xf32, #tpu.memory_space<vmem>>, vector<8x8xf32>
    tpu.vector_store %arg13[%c0_167, %c32_168], %190 {strides = array<i32>} : memref<8x40xf32, #tpu.memory_space<vmem>>, vector<8x8xf32>,
    %c0_169 = arith.constant 0 : index
    %c0_170 = arith.constant 0 : index
    %192 = vector.load %arg13[%c0_169, %c0_170] : memref<8x40xf32, #tpu.memory_space<vmem>>, vector<8x40xf32>
    %c0_171 = arith.constant 0 : index
    %c0_172 = arith.constant 0 : index
    %193 = vector.load %arg3[%c0_171, %c0_172] : memref<40x64xf32, #tpu.memory_space<vmem>>, vector<40x64xf32>
    %cst_173 = arith.constant dense<0.000000e+00> : vector<8x64xf32>
    %194 = tpu.matmul %192, %193, %cst_173 {dimension_numbers = #tpu.dot_dimension_numbers<[1], [0], [0], [1], [0, 0, 1, 1], [], []>} : vector<8x40xf32>, vector<40x64xf32>, vector<8x64xf32> -> vector<8x64xf32>
    %195 = arith.addf %194, %5 : vector<8x64xf32>
    %196 = arith.negf %195 : vector<8x64xf32>
    %197 = math.exp %196 : vector<8x64xf32>
    %cst_174 = arith.constant 1.000000e+00 : f32
    %198 = vector.broadcast %cst_174 : f32 to vector<8x64xf32>
    %199 = arith.addf %198, %197 : vector<8x64xf32>
    %200 = arith.divf %198, %199 : vector<8x64xf32>
    %201 = arith.mulf %195, %200 : vector<8x64xf32>
    %c0_175 = arith.constant 0 : index
    %c0_176 = arith.constant 0 : index
    %202 = vector.load %arg5[%c0_175, %c0_176] : memref<64x32xf32, #tpu.memory_space<vmem>>, vector<64x32xf32>
    %cst_177 = arith.constant dense<0.000000e+00> : vector<8x32xf32>
    %203 = tpu.matmul %201, %202, %cst_177 {dimension_numbers = #tpu.dot_dimension_numbers<[1], [0], [0], [1], [0, 0, 1, 1], [], []>} : vector<8x64xf32>, vector<64x32xf32>, vector<8x32xf32> -> vector<8x32xf32>
    %204 = arith.addf %203, %8 : vector<8x32xf32>
    %c0_178 = arith.constant 0 : index
    %c0_179 = arith.constant 0 : index
    %205 = vector.load %arg13[%c0_178, %c0_179] : memref<8x40xf32, #tpu.memory_space<vmem>>, vector<8x32xf32>
    tpu.vector_store %arg13[%c0_178, %c0_179], %204 {strides = array<i32>} : memref<8x40xf32, #tpu.memory_space<vmem>>, vector<8x32xf32>,
    %c9_180 = arith.constant 9 : index
    %c0_181 = arith.constant 0 : index
    %c0_182 = arith.constant 0 : index
    %206 = vector.load %arg14[%c9_180, %c0_181, %c0_182] : memref<16x8x32xf32, #tpu.memory_space<vmem>>, vector<1x8x32xf32>
    %207 = vector.shape_cast %206 : vector<1x8x32xf32> to vector<8x32xf32>
    %208 = vector.shape_cast %204 : vector<8x32xf32> to vector<1x8x32xf32>
    tpu.vector_store %arg14[%c9_180, %c0_181, %c0_182], %208 {strides = array<i32>} : memref<16x8x32xf32, #tpu.memory_space<vmem>>, vector<1x8x32xf32>,
    %c10 = arith.constant 10 : index
    %c0_183 = arith.constant 0 : index
    %c0_184 = arith.constant 0 : index
    %209 = vector.load %arg2[%c10, %c0_183, %c0_184] : memref<16x8x8xf32, #tpu.memory_space<vmem>>, vector<1x8x8xf32>
    %210 = vector.shape_cast %209 : vector<1x8x8xf32> to vector<8x8xf32>
    %c0_185 = arith.constant 0 : index
    %c32_186 = arith.constant 32 : index
    %211 = vector.load %arg13[%c0_185, %c32_186] : memref<8x40xf32, #tpu.memory_space<vmem>>, vector<8x8xf32>
    tpu.vector_store %arg13[%c0_185, %c32_186], %210 {strides = array<i32>} : memref<8x40xf32, #tpu.memory_space<vmem>>, vector<8x8xf32>,
    %c0_187 = arith.constant 0 : index
    %c0_188 = arith.constant 0 : index
    %212 = vector.load %arg13[%c0_187, %c0_188] : memref<8x40xf32, #tpu.memory_space<vmem>>, vector<8x40xf32>
    %c0_189 = arith.constant 0 : index
    %c0_190 = arith.constant 0 : index
    %213 = vector.load %arg3[%c0_189, %c0_190] : memref<40x64xf32, #tpu.memory_space<vmem>>, vector<40x64xf32>
    %cst_191 = arith.constant dense<0.000000e+00> : vector<8x64xf32>
    %214 = tpu.matmul %212, %213, %cst_191 {dimension_numbers = #tpu.dot_dimension_numbers<[1], [0], [0], [1], [0, 0, 1, 1], [], []>} : vector<8x40xf32>, vector<40x64xf32>, vector<8x64xf32> -> vector<8x64xf32>
    %215 = arith.addf %214, %5 : vector<8x64xf32>
    %216 = arith.negf %215 : vector<8x64xf32>
    %217 = math.exp %216 : vector<8x64xf32>
    %cst_192 = arith.constant 1.000000e+00 : f32
    %218 = vector.broadcast %cst_192 : f32 to vector<8x64xf32>
    %219 = arith.addf %218, %217 : vector<8x64xf32>
    %220 = arith.divf %218, %219 : vector<8x64xf32>
    %221 = arith.mulf %215, %220 : vector<8x64xf32>
    %c0_193 = arith.constant 0 : index
    %c0_194 = arith.constant 0 : index
    %222 = vector.load %arg5[%c0_193, %c0_194] : memref<64x32xf32, #tpu.memory_space<vmem>>, vector<64x32xf32>
    %cst_195 = arith.constant dense<0.000000e+00> : vector<8x32xf32>
    %223 = tpu.matmul %221, %222, %cst_195 {dimension_numbers = #tpu.dot_dimension_numbers<[1], [0], [0], [1], [0, 0, 1, 1], [], []>} : vector<8x64xf32>, vector<64x32xf32>, vector<8x32xf32> -> vector<8x32xf32>
    %224 = arith.addf %223, %8 : vector<8x32xf32>
    %c0_196 = arith.constant 0 : index
    %c0_197 = arith.constant 0 : index
    %225 = vector.load %arg13[%c0_196, %c0_197] : memref<8x40xf32, #tpu.memory_space<vmem>>, vector<8x32xf32>
    tpu.vector_store %arg13[%c0_196, %c0_197], %224 {strides = array<i32>} : memref<8x40xf32, #tpu.memory_space<vmem>>, vector<8x32xf32>,
    %c10_198 = arith.constant 10 : index
    %c0_199 = arith.constant 0 : index
    %c0_200 = arith.constant 0 : index
    %226 = vector.load %arg14[%c10_198, %c0_199, %c0_200] : memref<16x8x32xf32, #tpu.memory_space<vmem>>, vector<1x8x32xf32>
    %227 = vector.shape_cast %226 : vector<1x8x32xf32> to vector<8x32xf32>
    %228 = vector.shape_cast %224 : vector<8x32xf32> to vector<1x8x32xf32>
    tpu.vector_store %arg14[%c10_198, %c0_199, %c0_200], %228 {strides = array<i32>} : memref<16x8x32xf32, #tpu.memory_space<vmem>>, vector<1x8x32xf32>,
    %c11 = arith.constant 11 : index
    %c0_201 = arith.constant 0 : index
    %c0_202 = arith.constant 0 : index
    %229 = vector.load %arg2[%c11, %c0_201, %c0_202] : memref<16x8x8xf32, #tpu.memory_space<vmem>>, vector<1x8x8xf32>
    %230 = vector.shape_cast %229 : vector<1x8x8xf32> to vector<8x8xf32>
    %c0_203 = arith.constant 0 : index
    %c32_204 = arith.constant 32 : index
    %231 = vector.load %arg13[%c0_203, %c32_204] : memref<8x40xf32, #tpu.memory_space<vmem>>, vector<8x8xf32>
    tpu.vector_store %arg13[%c0_203, %c32_204], %230 {strides = array<i32>} : memref<8x40xf32, #tpu.memory_space<vmem>>, vector<8x8xf32>,
    %c0_205 = arith.constant 0 : index
    %c0_206 = arith.constant 0 : index
    %232 = vector.load %arg13[%c0_205, %c0_206] : memref<8x40xf32, #tpu.memory_space<vmem>>, vector<8x40xf32>
    %c0_207 = arith.constant 0 : index
    %c0_208 = arith.constant 0 : index
    %233 = vector.load %arg3[%c0_207, %c0_208] : memref<40x64xf32, #tpu.memory_space<vmem>>, vector<40x64xf32>
    %cst_209 = arith.constant dense<0.000000e+00> : vector<8x64xf32>
    %234 = tpu.matmul %232, %233, %cst_209 {dimension_numbers = #tpu.dot_dimension_numbers<[1], [0], [0], [1], [0, 0, 1, 1], [], []>} : vector<8x40xf32>, vector<40x64xf32>, vector<8x64xf32> -> vector<8x64xf32>
    %235 = arith.addf %234, %5 : vector<8x64xf32>
    %236 = arith.negf %235 : vector<8x64xf32>
    %237 = math.exp %236 : vector<8x64xf32>
    %cst_210 = arith.constant 1.000000e+00 : f32
    %238 = vector.broadcast %cst_210 : f32 to vector<8x64xf32>
    %239 = arith.addf %238, %237 : vector<8x64xf32>
    %240 = arith.divf %238, %239 : vector<8x64xf32>
    %241 = arith.mulf %235, %240 : vector<8x64xf32>
    %c0_211 = arith.constant 0 : index
    %c0_212 = arith.constant 0 : index
    %242 = vector.load %arg5[%c0_211, %c0_212] : memref<64x32xf32, #tpu.memory_space<vmem>>, vector<64x32xf32>
    %cst_213 = arith.constant dense<0.000000e+00> : vector<8x32xf32>
    %243 = tpu.matmul %241, %242, %cst_213 {dimension_numbers = #tpu.dot_dimension_numbers<[1], [0], [0], [1], [0, 0, 1, 1], [], []>} : vector<8x64xf32>, vector<64x32xf32>, vector<8x32xf32> -> vector<8x32xf32>
    %244 = arith.addf %243, %8 : vector<8x32xf32>
    %c0_214 = arith.constant 0 : index
    %c0_215 = arith.constant 0 : index
    %245 = vector.load %arg13[%c0_214, %c0_215] : memref<8x40xf32, #tpu.memory_space<vmem>>, vector<8x32xf32>
    tpu.vector_store %arg13[%c0_214, %c0_215], %244 {strides = array<i32>} : memref<8x40xf32, #tpu.memory_space<vmem>>, vector<8x32xf32>,
    %c11_216 = arith.constant 11 : index
    %c0_217 = arith.constant 0 : index
    %c0_218 = arith.constant 0 : index
    %246 = vector.load %arg14[%c11_216, %c0_217, %c0_218] : memref<16x8x32xf32, #tpu.memory_space<vmem>>, vector<1x8x32xf32>
    %247 = vector.shape_cast %246 : vector<1x8x32xf32> to vector<8x32xf32>
    %248 = vector.shape_cast %244 : vector<8x32xf32> to vector<1x8x32xf32>
    tpu.vector_store %arg14[%c11_216, %c0_217, %c0_218], %248 {strides = array<i32>} : memref<16x8x32xf32, #tpu.memory_space<vmem>>, vector<1x8x32xf32>,
    %c12 = arith.constant 12 : index
    %c0_219 = arith.constant 0 : index
    %c0_220 = arith.constant 0 : index
    %249 = vector.load %arg2[%c12, %c0_219, %c0_220] : memref<16x8x8xf32, #tpu.memory_space<vmem>>, vector<1x8x8xf32>
    %250 = vector.shape_cast %249 : vector<1x8x8xf32> to vector<8x8xf32>
    %c0_221 = arith.constant 0 : index
    %c32_222 = arith.constant 32 : index
    %251 = vector.load %arg13[%c0_221, %c32_222] : memref<8x40xf32, #tpu.memory_space<vmem>>, vector<8x8xf32>
    tpu.vector_store %arg13[%c0_221, %c32_222], %250 {strides = array<i32>} : memref<8x40xf32, #tpu.memory_space<vmem>>, vector<8x8xf32>,
    %c0_223 = arith.constant 0 : index
    %c0_224 = arith.constant 0 : index
    %252 = vector.load %arg13[%c0_223, %c0_224] : memref<8x40xf32, #tpu.memory_space<vmem>>, vector<8x40xf32>
    %c0_225 = arith.constant 0 : index
    %c0_226 = arith.constant 0 : index
    %253 = vector.load %arg3[%c0_225, %c0_226] : memref<40x64xf32, #tpu.memory_space<vmem>>, vector<40x64xf32>
    %cst_227 = arith.constant dense<0.000000e+00> : vector<8x64xf32>
    %254 = tpu.matmul %252, %253, %cst_227 {dimension_numbers = #tpu.dot_dimension_numbers<[1], [0], [0], [1], [0, 0, 1, 1], [], []>} : vector<8x40xf32>, vector<40x64xf32>, vector<8x64xf32> -> vector<8x64xf32>
    %255 = arith.addf %254, %5 : vector<8x64xf32>
    %256 = arith.negf %255 : vector<8x64xf32>
    %257 = math.exp %256 : vector<8x64xf32>
    %cst_228 = arith.constant 1.000000e+00 : f32
    %258 = vector.broadcast %cst_228 : f32 to vector<8x64xf32>
    %259 = arith.addf %258, %257 : vector<8x64xf32>
    %260 = arith.divf %258, %259 : vector<8x64xf32>
    %261 = arith.mulf %255, %260 : vector<8x64xf32>
    %c0_229 = arith.constant 0 : index
    %c0_230 = arith.constant 0 : index
    %262 = vector.load %arg5[%c0_229, %c0_230] : memref<64x32xf32, #tpu.memory_space<vmem>>, vector<64x32xf32>
    %cst_231 = arith.constant dense<0.000000e+00> : vector<8x32xf32>
    %263 = tpu.matmul %261, %262, %cst_231 {dimension_numbers = #tpu.dot_dimension_numbers<[1], [0], [0], [1], [0, 0, 1, 1], [], []>} : vector<8x64xf32>, vector<64x32xf32>, vector<8x32xf32> -> vector<8x32xf32>
    %264 = arith.addf %263, %8 : vector<8x32xf32>
    %c0_232 = arith.constant 0 : index
    %c0_233 = arith.constant 0 : index
    %265 = vector.load %arg13[%c0_232, %c0_233] : memref<8x40xf32, #tpu.memory_space<vmem>>, vector<8x32xf32>
    tpu.vector_store %arg13[%c0_232, %c0_233], %264 {strides = array<i32>} : memref<8x40xf32, #tpu.memory_space<vmem>>, vector<8x32xf32>,
    %c12_234 = arith.constant 12 : index
    %c0_235 = arith.constant 0 : index
    %c0_236 = arith.constant 0 : index
    %266 = vector.load %arg14[%c12_234, %c0_235, %c0_236] : memref<16x8x32xf32, #tpu.memory_space<vmem>>, vector<1x8x32xf32>
    %267 = vector.shape_cast %266 : vector<1x8x32xf32> to vector<8x32xf32>
    %268 = vector.shape_cast %264 : vector<8x32xf32> to vector<1x8x32xf32>
    tpu.vector_store %arg14[%c12_234, %c0_235, %c0_236], %268 {strides = array<i32>} : memref<16x8x32xf32, #tpu.memory_space<vmem>>, vector<1x8x32xf32>,
    %c13 = arith.constant 13 : index
    %c0_237 = arith.constant 0 : index
    %c0_238 = arith.constant 0 : index
    %269 = vector.load %arg2[%c13, %c0_237, %c0_238] : memref<16x8x8xf32, #tpu.memory_space<vmem>>, vector<1x8x8xf32>
    %270 = vector.shape_cast %269 : vector<1x8x8xf32> to vector<8x8xf32>
    %c0_239 = arith.constant 0 : index
    %c32_240 = arith.constant 32 : index
    %271 = vector.load %arg13[%c0_239, %c32_240] : memref<8x40xf32, #tpu.memory_space<vmem>>, vector<8x8xf32>
    tpu.vector_store %arg13[%c0_239, %c32_240], %270 {strides = array<i32>} : memref<8x40xf32, #tpu.memory_space<vmem>>, vector<8x8xf32>,
    %c0_241 = arith.constant 0 : index
    %c0_242 = arith.constant 0 : index
    %272 = vector.load %arg13[%c0_241, %c0_242] : memref<8x40xf32, #tpu.memory_space<vmem>>, vector<8x40xf32>
    %c0_243 = arith.constant 0 : index
    %c0_244 = arith.constant 0 : index
    %273 = vector.load %arg3[%c0_243, %c0_244] : memref<40x64xf32, #tpu.memory_space<vmem>>, vector<40x64xf32>
    %cst_245 = arith.constant dense<0.000000e+00> : vector<8x64xf32>
    %274 = tpu.matmul %272, %273, %cst_245 {dimension_numbers = #tpu.dot_dimension_numbers<[1], [0], [0], [1], [0, 0, 1, 1], [], []>} : vector<8x40xf32>, vector<40x64xf32>, vector<8x64xf32> -> vector<8x64xf32>
    %275 = arith.addf %274, %5 : vector<8x64xf32>
    %276 = arith.negf %275 : vector<8x64xf32>
    %277 = math.exp %276 : vector<8x64xf32>
    %cst_246 = arith.constant 1.000000e+00 : f32
    %278 = vector.broadcast %cst_246 : f32 to vector<8x64xf32>
    %279 = arith.addf %278, %277 : vector<8x64xf32>
    %280 = arith.divf %278, %279 : vector<8x64xf32>
    %281 = arith.mulf %275, %280 : vector<8x64xf32>
    %c0_247 = arith.constant 0 : index
    %c0_248 = arith.constant 0 : index
    %282 = vector.load %arg5[%c0_247, %c0_248] : memref<64x32xf32, #tpu.memory_space<vmem>>, vector<64x32xf32>
    %cst_249 = arith.constant dense<0.000000e+00> : vector<8x32xf32>
    %283 = tpu.matmul %281, %282, %cst_249 {dimension_numbers = #tpu.dot_dimension_numbers<[1], [0], [0], [1], [0, 0, 1, 1], [], []>} : vector<8x64xf32>, vector<64x32xf32>, vector<8x32xf32> -> vector<8x32xf32>
    %284 = arith.addf %283, %8 : vector<8x32xf32>
    %c0_250 = arith.constant 0 : index
    %c0_251 = arith.constant 0 : index
    %285 = vector.load %arg13[%c0_250, %c0_251] : memref<8x40xf32, #tpu.memory_space<vmem>>, vector<8x32xf32>
    tpu.vector_store %arg13[%c0_250, %c0_251], %284 {strides = array<i32>} : memref<8x40xf32, #tpu.memory_space<vmem>>, vector<8x32xf32>,
    %c13_252 = arith.constant 13 : index
    %c0_253 = arith.constant 0 : index
    %c0_254 = arith.constant 0 : index
    %286 = vector.load %arg14[%c13_252, %c0_253, %c0_254] : memref<16x8x32xf32, #tpu.memory_space<vmem>>, vector<1x8x32xf32>
    %287 = vector.shape_cast %286 : vector<1x8x32xf32> to vector<8x32xf32>
    %288 = vector.shape_cast %284 : vector<8x32xf32> to vector<1x8x32xf32>
    tpu.vector_store %arg14[%c13_252, %c0_253, %c0_254], %288 {strides = array<i32>} : memref<16x8x32xf32, #tpu.memory_space<vmem>>, vector<1x8x32xf32>,
    %c14 = arith.constant 14 : index
    %c0_255 = arith.constant 0 : index
    %c0_256 = arith.constant 0 : index
    %289 = vector.load %arg2[%c14, %c0_255, %c0_256] : memref<16x8x8xf32, #tpu.memory_space<vmem>>, vector<1x8x8xf32>
    %290 = vector.shape_cast %289 : vector<1x8x8xf32> to vector<8x8xf32>
    %c0_257 = arith.constant 0 : index
    %c32_258 = arith.constant 32 : index
    %291 = vector.load %arg13[%c0_257, %c32_258] : memref<8x40xf32, #tpu.memory_space<vmem>>, vector<8x8xf32>
    tpu.vector_store %arg13[%c0_257, %c32_258], %290 {strides = array<i32>} : memref<8x40xf32, #tpu.memory_space<vmem>>, vector<8x8xf32>,
    %c0_259 = arith.constant 0 : index
    %c0_260 = arith.constant 0 : index
    %292 = vector.load %arg13[%c0_259, %c0_260] : memref<8x40xf32, #tpu.memory_space<vmem>>, vector<8x40xf32>
    %c0_261 = arith.constant 0 : index
    %c0_262 = arith.constant 0 : index
    %293 = vector.load %arg3[%c0_261, %c0_262] : memref<40x64xf32, #tpu.memory_space<vmem>>, vector<40x64xf32>
    %cst_263 = arith.constant dense<0.000000e+00> : vector<8x64xf32>
    %294 = tpu.matmul %292, %293, %cst_263 {dimension_numbers = #tpu.dot_dimension_numbers<[1], [0], [0], [1], [0, 0, 1, 1], [], []>} : vector<8x40xf32>, vector<40x64xf32>, vector<8x64xf32> -> vector<8x64xf32>
    %295 = arith.addf %294, %5 : vector<8x64xf32>
    %296 = arith.negf %295 : vector<8x64xf32>
    %297 = math.exp %296 : vector<8x64xf32>
    %cst_264 = arith.constant 1.000000e+00 : f32
    %298 = vector.broadcast %cst_264 : f32 to vector<8x64xf32>
    %299 = arith.addf %298, %297 : vector<8x64xf32>
    %300 = arith.divf %298, %299 : vector<8x64xf32>
    %301 = arith.mulf %295, %300 : vector<8x64xf32>
    %c0_265 = arith.constant 0 : index
    %c0_266 = arith.constant 0 : index
    %302 = vector.load %arg5[%c0_265, %c0_266] : memref<64x32xf32, #tpu.memory_space<vmem>>, vector<64x32xf32>
    %cst_267 = arith.constant dense<0.000000e+00> : vector<8x32xf32>
    %303 = tpu.matmul %301, %302, %cst_267 {dimension_numbers = #tpu.dot_dimension_numbers<[1], [0], [0], [1], [0, 0, 1, 1], [], []>} : vector<8x64xf32>, vector<64x32xf32>, vector<8x32xf32> -> vector<8x32xf32>
    %304 = arith.addf %303, %8 : vector<8x32xf32>
    %c0_268 = arith.constant 0 : index
    %c0_269 = arith.constant 0 : index
    %305 = vector.load %arg13[%c0_268, %c0_269] : memref<8x40xf32, #tpu.memory_space<vmem>>, vector<8x32xf32>
    tpu.vector_store %arg13[%c0_268, %c0_269], %304 {strides = array<i32>} : memref<8x40xf32, #tpu.memory_space<vmem>>, vector<8x32xf32>,
    %c14_270 = arith.constant 14 : index
    %c0_271 = arith.constant 0 : index
    %c0_272 = arith.constant 0 : index
    %306 = vector.load %arg14[%c14_270, %c0_271, %c0_272] : memref<16x8x32xf32, #tpu.memory_space<vmem>>, vector<1x8x32xf32>
    %307 = vector.shape_cast %306 : vector<1x8x32xf32> to vector<8x32xf32>
    %308 = vector.shape_cast %304 : vector<8x32xf32> to vector<1x8x32xf32>
    tpu.vector_store %arg14[%c14_270, %c0_271, %c0_272], %308 {strides = array<i32>} : memref<16x8x32xf32, #tpu.memory_space<vmem>>, vector<1x8x32xf32>,
    %c15 = arith.constant 15 : index
    %c0_273 = arith.constant 0 : index
    %c0_274 = arith.constant 0 : index
    %309 = vector.load %arg2[%c15, %c0_273, %c0_274] : memref<16x8x8xf32, #tpu.memory_space<vmem>>, vector<1x8x8xf32>
    %310 = vector.shape_cast %309 : vector<1x8x8xf32> to vector<8x8xf32>
    %c0_275 = arith.constant 0 : index
    %c32_276 = arith.constant 32 : index
    %311 = vector.load %arg13[%c0_275, %c32_276] : memref<8x40xf32, #tpu.memory_space<vmem>>, vector<8x8xf32>
    tpu.vector_store %arg13[%c0_275, %c32_276], %310 {strides = array<i32>} : memref<8x40xf32, #tpu.memory_space<vmem>>, vector<8x8xf32>,
    %c0_277 = arith.constant 0 : index
    %c0_278 = arith.constant 0 : index
    %312 = vector.load %arg13[%c0_277, %c0_278] : memref<8x40xf32, #tpu.memory_space<vmem>>, vector<8x40xf32>
    %c0_279 = arith.constant 0 : index
    %c0_280 = arith.constant 0 : index
    %313 = vector.load %arg3[%c0_279, %c0_280] : memref<40x64xf32, #tpu.memory_space<vmem>>, vector<40x64xf32>
    %cst_281 = arith.constant dense<0.000000e+00> : vector<8x64xf32>
    %314 = tpu.matmul %312, %313, %cst_281 {dimension_numbers = #tpu.dot_dimension_numbers<[1], [0], [0], [1], [0, 0, 1, 1], [], []>} : vector<8x40xf32>, vector<40x64xf32>, vector<8x64xf32> -> vector<8x64xf32>
    %315 = arith.addf %314, %5 : vector<8x64xf32>
    %316 = arith.negf %315 : vector<8x64xf32>
    %317 = math.exp %316 : vector<8x64xf32>
    %cst_282 = arith.constant 1.000000e+00 : f32
    %318 = vector.broadcast %cst_282 : f32 to vector<8x64xf32>
    %319 = arith.addf %318, %317 : vector<8x64xf32>
    %320 = arith.divf %318, %319 : vector<8x64xf32>
    %321 = arith.mulf %315, %320 : vector<8x64xf32>
    %c0_283 = arith.constant 0 : index
    %c0_284 = arith.constant 0 : index
    %322 = vector.load %arg5[%c0_283, %c0_284] : memref<64x32xf32, #tpu.memory_space<vmem>>, vector<64x32xf32>
    %cst_285 = arith.constant dense<0.000000e+00> : vector<8x32xf32>
    %323 = tpu.matmul %321, %322, %cst_285 {dimension_numbers = #tpu.dot_dimension_numbers<[1], [0], [0], [1], [0, 0, 1, 1], [], []>} : vector<8x64xf32>, vector<64x32xf32>, vector<8x32xf32> -> vector<8x32xf32>
    %324 = arith.addf %323, %8 : vector<8x32xf32>
    %c0_286 = arith.constant 0 : index
    %c0_287 = arith.constant 0 : index
    %325 = vector.load %arg13[%c0_286, %c0_287] : memref<8x40xf32, #tpu.memory_space<vmem>>, vector<8x32xf32>
    tpu.vector_store %arg13[%c0_286, %c0_287], %324 {strides = array<i32>} : memref<8x40xf32, #tpu.memory_space<vmem>>, vector<8x32xf32>,
    %c15_288 = arith.constant 15 : index
    %c0_289 = arith.constant 0 : index
    %c0_290 = arith.constant 0 : index
    %326 = vector.load %arg14[%c15_288, %c0_289, %c0_290] : memref<16x8x32xf32, #tpu.memory_space<vmem>>, vector<1x8x32xf32>
    %327 = vector.shape_cast %326 : vector<1x8x32xf32> to vector<8x32xf32>
    %328 = vector.shape_cast %324 : vector<8x32xf32> to vector<1x8x32xf32>
    tpu.vector_store %arg14[%c15_288, %c0_289, %c0_290], %328 {strides = array<i32>} : memref<16x8x32xf32, #tpu.memory_space<vmem>>, vector<1x8x32xf32>,
    %c0_291 = arith.constant 0 : index
    %c0_292 = arith.constant 0 : index
    %c0_293 = arith.constant 0 : index
    %329 = vector.load %arg14[%c0_291, %c0_292, %c0_293] : memref<16x8x32xf32, #tpu.memory_space<vmem>>, vector<16x8x32xf32>
    %330 = vector.shape_cast %329 : vector<16x8x32xf32> to vector<128x32xf32>
    %c0_294 = arith.constant 0 : index
    %c0_295 = arith.constant 0 : index
    %331 = vector.load %arg7[%c0_294, %c0_295] : memref<32x64xf32, #tpu.memory_space<vmem>>, vector<32x64xf32>
    %cst_296 = arith.constant dense<0.000000e+00> : vector<128x64xf32>
    %332 = tpu.matmul %330, %331, %cst_296 {dimension_numbers = #tpu.dot_dimension_numbers<[1], [0], [0], [1], [0, 0, 1, 1], [], []>} : vector<128x32xf32>, vector<32x64xf32>, vector<128x64xf32> -> vector<128x64xf32>
    %c0_297 = arith.constant 0 : index
    %c0_298 = arith.constant 0 : index
    %333 = vector.load %arg8[%c0_297, %c0_298] : memref<1x64xf32, #tpu.memory_space<vmem>>, vector<1x64xf32>
    %334 = vector.broadcast %333 : vector<1x64xf32> to vector<128x64xf32>
    %335 = arith.addf %332, %334 : vector<128x64xf32>
    %336 = arith.negf %335 : vector<128x64xf32>
    %337 = math.exp %336 : vector<128x64xf32>
    %cst_299 = arith.constant 1.000000e+00 : f32
    %338 = vector.broadcast %cst_299 : f32 to vector<128x64xf32>
    %339 = arith.addf %338, %337 : vector<128x64xf32>
    %340 = arith.divf %338, %339 : vector<128x64xf32>
    %341 = arith.mulf %335, %340 : vector<128x64xf32>
    %c0_300 = arith.constant 0 : index
    %c0_301 = arith.constant 0 : index
    %342 = vector.load %arg9[%c0_300, %c0_301] : memref<64x128xf32, #tpu.memory_space<vmem>>, vector<64x128xf32>
    %cst_302 = arith.constant dense<0.000000e+00> : vector<128x128xf32>
    %343 = tpu.matmul %341, %342, %cst_302 {dimension_numbers = #tpu.dot_dimension_numbers<[1], [0], [0], [1], [0, 0, 1, 1], [], []>} : vector<128x64xf32>, vector<64x128xf32>, vector<128x128xf32> -> vector<128x128xf32>
    %c0_303 = arith.constant 0 : index
    %c0_304 = arith.constant 0 : index
    %344 = vector.load %arg10[%c0_303, %c0_304] : memref<1x128xf32, #tpu.memory_space<vmem>>, vector<1x128xf32>
    %345 = vector.broadcast %344 : vector<1x128xf32> to vector<128x128xf32>
    %346 = arith.addf %343, %345 : vector<128x128xf32>
    %347 = vector.shape_cast %346 : vector<128x128xf32> to vector<16x8x128xf32>
    %c0_305 = arith.constant 0 : index
    %c0_306 = arith.constant 0 : index
    %c0_307 = arith.constant 0 : index
    %348 = vector.load %arg11[%c0_305, %c0_306, %c0_307] : memref<16x8x128xf32, #tpu.memory_space<vmem>>, vector<16x8x128xf32>
    tpu.vector_store %arg11[%c0_305, %c0_306, %c0_307], %347 {strides = array<i32>} : memref<16x8x128xf32, #tpu.memory_space<vmem>>, vector<16x8x128xf32>,
    %c0_308 = arith.constant 0 : index
    %c0_309 = arith.constant 0 : index
    %349 = vector.load %arg13[%c0_308, %c0_309] : memref<8x40xf32, #tpu.memory_space<vmem>>, vector<8x32xf32>
    %c0_310 = arith.constant 0 : index
    %c0_311 = arith.constant 0 : index
    %350 = vector.load %arg12[%c0_310, %c0_311] : memref<8x32xf32, #tpu.memory_space<vmem>>, vector<8x32xf32>
    tpu.vector_store %arg12[%c0_310, %c0_311], %349 {strides = array<i32>} : memref<8x32xf32, #tpu.memory_space<vmem>>, vector<8x32xf32>,
    return
  }
  func.func @transform_0(%arg0: i32) -> (i32, i32) {
    %c0_i32 = arith.constant 0 : i32
    %c0_i32_0 = arith.constant 0 : i32
    %c0_i32_1 = arith.constant 0 : i32
    return %c0_i32, %c0_i32_0 : i32, i32
  }
  func.func @transform_1(%arg0: i32) -> (i32, i32, i32) {
    %c0_i32 = arith.constant 0 : i32
    %c0_i32_0 = arith.constant 0 : i32
    %c0_i32_1 = arith.constant 0 : i32
    return %arg0, %c0_i32, %c0_i32_0 : i32, i32, i32
  }
  func.func @transform_2(%arg0: i32) -> (i32, i32) {
    %c0_i32 = arith.constant 0 : i32
    %c0_i32_0 = arith.constant 0 : i32
    %c0_i32_1 = arith.constant 0 : i32
    return %c0_i32, %c0_i32_0 : i32, i32
  }
  func.func @transform_3(%arg0: i32) -> (i32, i32) {
    %c0_i32 = arith.constant 0 : i32
    %c0_i32_0 = arith.constant 0 : i32
    %c0_i32_1 = arith.constant 0 : i32
    return %c0_i32, %c0_i32_0 : i32, i32
  }
  func.func @transform_4(%arg0: i32) -> (i32, i32) {
    %c0_i32 = arith.constant 0 : i32
    %c0_i32_0 = arith.constant 0 : i32
    %c0_i32_1 = arith.constant 0 : i32
    return %c0_i32, %c0_i32_0 : i32, i32
  }
  func.func @transform_5(%arg0: i32) -> (i32, i32) {
    %c0_i32 = arith.constant 0 : i32
    %c0_i32_0 = arith.constant 0 : i32
    %c0_i32_1 = arith.constant 0 : i32
    return %c0_i32, %c0_i32_0 : i32, i32
  }
  func.func @transform_6(%arg0: i32) -> (i32, i32) {
    %c0_i32 = arith.constant 0 : i32
    %c0_i32_0 = arith.constant 0 : i32
    %c0_i32_1 = arith.constant 0 : i32
    return %c0_i32, %c0_i32_0 : i32, i32
  }
  func.func @transform_7(%arg0: i32) -> (i32, i32) {
    %c0_i32 = arith.constant 0 : i32
    %c0_i32_0 = arith.constant 0 : i32
    %c0_i32_1 = arith.constant 0 : i32
    return %c0_i32, %c0_i32_0 : i32, i32
  }
  func.func @transform_8(%arg0: i32) -> (i32, i32) {
    %c0_i32 = arith.constant 0 : i32
    %c0_i32_0 = arith.constant 0 : i32
    %c0_i32_1 = arith.constant 0 : i32
    return %c0_i32, %c0_i32_0 : i32, i32
  }
  func.func @transform_9(%arg0: i32) -> (i32, i32) {
    %c0_i32 = arith.constant 0 : i32
    %c0_i32_0 = arith.constant 0 : i32
    %c0_i32_1 = arith.constant 0 : i32
    return %c0_i32, %c0_i32_0 : i32, i32
  }
  func.func @transform_10(%arg0: i32) -> (i32, i32, i32) {
    %c0_i32 = arith.constant 0 : i32
    %c0_i32_0 = arith.constant 0 : i32
    %c0_i32_1 = arith.constant 0 : i32
    return %arg0, %c0_i32, %c0_i32_0 : i32, i32, i32
  }
  func.func @transform_11(%arg0: i32) -> (i32, i32) {
    %c0_i32 = arith.constant 0 : i32
    %c0_i32_0 = arith.constant 0 : i32
    %c0_i32_1 = arith.constant 0 : i32
    return %c0_i32, %c0_i32_0 : i32, i32
  }
}

</mosaic_0001>

<llo_original>
// kernel: general_rnn_forward_sequence.1
$region0: #{general_rnn_forward_sequence.1}
  #allocation0 [shape = 'u32[]', space=smem, size = 0x4, offset = 0x4, fixed_abs, tag = 'smem constant byte address 0x4 - core index']
  #allocation1 [shape = 'u32[72,128]{1,0:T(1,128)}', space=vmem, size = 0x9000, scoped, tag = 'internal scratch']
  #allocation2 [shape = 'f32[8,40]{1,0:T(8,128)}', space=vmem, size = 0x1000, scoped, tag = 'scratch operand']
  #allocation3 [shape = 'f32[16,8,32]{2,1,0:T(8,128)}', space=vmem, size = 0x10000, scoped, tag = 'scratch operand']
  %s0 = inlined_call_operand.vmem [shape: f32[8,32], index: 0, kind: input, shape index: {}]
  %s1 = inlined_call_operand.vmem [shape: f32[16,8,8], index: 1, kind: input, shape index: {}]
  %s2 = inlined_call_operand.vmem [shape: f32[40,64], index: 2, kind: input, shape index: {}]
  %s3 = inlined_call_operand.vmem [shape: f32[1,64], index: 3, kind: input, shape index: {}]
  %s4 = inlined_call_operand.vmem [shape: f32[64,32], index: 4, kind: input, shape index: {}]
  %s5 = inlined_call_operand.vmem [shape: f32[1,32], index: 5, kind: input, shape index: {}]
  %s6 = inlined_call_operand.vmem [shape: f32[32,64], index: 6, kind: input, shape index: {}]
  %s7 = inlined_call_operand.vmem [shape: f32[1,64], index: 7, kind: input, shape index: {}]
  %s8 = inlined_call_operand.vmem [shape: f32[64,128], index: 8, kind: input, shape index: {}]
  %s9 = inlined_call_operand.vmem [shape: f32[1,128], index: 9, kind: input, shape index: {}]
  %s10 = inlined_call_operand.vmem [shape: f32[16,8,128], index: 10, kind: output, shape index: {0}]
  %s11 = inlined_call_operand.hbm [shape: f32[8,32], index: 11, kind: output, shape index: {1}]
  %12 = xla_tuple %s10, %s11
  %s13 = sld [smem:[#allocation0]]
  $region62: #{general_rnn_forward_sequence.1} parent=0
    _
  %s15 = ssub.s32 1, %s13
  %s16 = scalar_select 0, %s15, %s13
  $region1: #{general_rnn_forward_sequence.1} parent=0
    #allocation4 [shape = 'u8[4096]{0}', space=vmem, size = 0x1000, scoped, tag = 'output window, operand 1, single buffered']
    #allocation5 [shape = 's32[1]{0}', space=sflag, size = 0x4, scoped, tag = 'scoped memory for general_rnn_forward_sequence.1']
    %17 = vsyncpa [#allocation5], 0
    // Predicated region
    $region2: #{general_rnn_forward_sequence.1} parent=1 // pred_check
      _
    $region3: #{general_rnn_forward_sequence.1} parent=1 // pred_check_branch
      %19 = sbr.rel (0) target = $region5
    $region4: #{general_rnn_forward_sequence.1} parent=1 // pred_region
      _
    $region5: #{general_rnn_forward_sequence.1} parent=1 // pred_fallthru
      _
    // Predicated region
    $region6: #{general_rnn_forward_sequence.1} parent=1 // pred_check
      _
    $region7: #{general_rnn_forward_sequence.1} parent=1 // pred_check_branch
      %21 = sbr.rel (0) target = $region9
    $region8: #{general_rnn_forward_sequence.1} parent=1 // pred_region
      _
    $region9: #{general_rnn_forward_sequence.1} parent=1 // pred_fallthru
      _
    // Predicated region
    $region10: #{general_rnn_forward_sequence.1} parent=1 // pred_check
      _
    $region11: #{general_rnn_forward_sequence.1} parent=1 // pred_check_branch
      %23 = sbr.rel (0) target = $region13
    $region12: #{general_rnn_forward_sequence.1} parent=1 // pred_region
      _
    $region13: #{general_rnn_forward_sequence.1} parent=1 // pred_fallthru
      _
    // Predicated region
    $region14: #{general_rnn_forward_sequence.1} parent=1 // pred_check
      _
    $region15: #{general_rnn_forward_sequence.1} parent=1 // pred_check_branch
      %25 = sbr.rel (0) target = $region17
    $region16: #{general_rnn_forward_sequence.1} parent=1 // pred_region
      _
    $region17: #{general_rnn_forward_sequence.1} parent=1 // pred_fallthru
      _
    // Predicated region
    $region18: #{general_rnn_forward_sequence.1} parent=1 // pred_check
      _
    $region19: #{general_rnn_forward_sequence.1} parent=1 // pred_check_branch
      %27 = sbr.rel (0) target = $region21
    $region20: #{general_rnn_forward_sequence.1} parent=1 // pred_region
      _
    $region21: #{general_rnn_forward_sequence.1} parent=1 // pred_fallthru
      _
    // Predicated region
    $region22: #{general_rnn_forward_sequence.1} parent=1 // pred_check
      _
    $region23: #{general_rnn_forward_sequence.1} parent=1 // pred_check_branch
      %29 = sbr.rel (0) target = $region25
    $region24: #{general_rnn_forward_sequence.1} parent=1 // pred_region
      _
    $region25: #{general_rnn_forward_sequence.1} parent=1 // pred_fallthru
      _
    // Predicated region
    $region26: #{general_rnn_forward_sequence.1} parent=1 // pred_check
      _
    $region27: #{general_rnn_forward_sequence.1} parent=1 // pred_check_branch
      %31 = sbr.rel (0) target = $region29
    $region28: #{general_rnn_forward_sequence.1} parent=1 // pred_region
      _
    $region29: #{general_rnn_forward_sequence.1} parent=1 // pred_fallthru
      _
    // Predicated region
    $region30: #{general_rnn_forward_sequence.1} parent=1 // pred_check
      _
    $region31: #{general_rnn_forward_sequence.1} parent=1 // pred_check_branch
      %33 = sbr.rel (0) target = $region33
    $region32: #{general_rnn_forward_sequence.1} parent=1 // pred_region
      _
    $region33: #{general_rnn_forward_sequence.1} parent=1 // pred_fallthru
      _
    // Predicated region
    $region34: #{general_rnn_forward_sequence.1} parent=1 // pred_check
      _
    $region35: #{general_rnn_forward_sequence.1} parent=1 // pred_check_branch
      %35 = sbr.rel (0) target = $region37
    $region36: #{general_rnn_forward_sequence.1} parent=1 // pred_region
      _
    $region37: #{general_rnn_forward_sequence.1} parent=1 // pred_fallthru
      _
    // Predicated region
    $region38: #{general_rnn_forward_sequence.1} parent=1 // pred_check
      _
    $region39: #{general_rnn_forward_sequence.1} parent=1 // pred_check_branch
      %37 = sbr.rel (0) target = $region41
    $region40: #{general_rnn_forward_sequence.1} parent=1 // pred_region
      _
    $region41: #{general_rnn_forward_sequence.1} parent=1 // pred_fallthru
      _
    %p38 = scmp.eq.s32.totalorder 0, 0
    // Predicated region
    $region42: #{general_rnn_forward_sequence.1} parent=1 // pred_check
      %p39 = pneg %p38
    $region43: #{general_rnn_forward_sequence.1} parent=1 // pred_check_branch
      %41 = sbr.rel (%p39) target = $region45
    $region44: #{general_rnn_forward_sequence.1} parent=1 // pred_region
      %v42 = vld [vmem:[%s0] sm:$0xff]
      %vm43 = vcmask 261120
      %44 = vst.msk [vmem:[#allocation2] sm:$0xff] %vm43, %v42
    $region45: #{general_rnn_forward_sequence.1} parent=1 // pred_fallthru
      _
    %v45 = vld [vmem:[%s3] sm:$0x1]
    %v47 = vperm.slane %v45, 0
    %v49 = vld [vmem:[%s5] sm:$0x1]
    %v51 = vperm.slane %v49, 0
    %v53 = vld [vmem:[%s1] sm:$0xff]
    %55 = vrot.lane.b32.xlu0 %v53, 32
    %v56 = vpop.permute.xlu0 %55
    %vm58 = vcmask 326912
    %59 = vst.msk [vmem:[#allocation2] sm:$0xff] %vm58, %v56
    %v60 = vld [vmem:[#allocation2] sm:$0xff]
    %v61 = vld [vmem:[%s2] sm:$0xff]
    %v62 = vld [vmem:[%s2 + $0x8] sm:$0xff]
    %v63 = vld [vmem:[%s2 + $0x10] sm:$0xff]
    %v64 = vld [vmem:[%s2 + $0x18] sm:$0xff]
    %v65 = vld [vmem:[%s2 + $0x20] sm:$0xff]
    %vm66 = vcmask 326656
    %v68 = vsel %vm66, %v60, 0
    %70 = vmatpush.msra.mxu0 0.0
    %71 = vmatpush.msra.mxu0 0.0
    %72 = vmatpush.msra.mxu0 0.0
    %73 = vmatpush.msra.mxu0 0.0
    %74 = vmatpush.msra.mxu0 0.0
    %75 = vmatpush.msra.mxu0 0.0
    %76 = vmatpush.msra.mxu0 0.0
    %77 = vmatpush.msra.mxu0 0.0
    %78 = vmatpush.msra.mxu0 0.0
    %79 = vmatpush.msra.mxu0 0.0
    %80 = vmatpush.msra.mxu0 0.0
    %81 = vmatpush.msra.mxu0 %v65
    %82 = vmatpush.msra.mxu0 %v64
    %83 = vmatpush.msra.mxu0 %v63
    %84 = vmatpush.msra.mxu0 %v62
    %85 = vmatpush.msra.mxu0 %v61
    %86 = vmatmul.f32.gmra.mxu0 %v68
    %v87 = vpop.f32.mrf.mxu0
    %v88 = vadd.f32 %v47, %v87
    %89 = vdwg.mxu0
    %v90 = vxor.u32 %v88, 2147483648
    %v91 = vmul.f32 %v90, 1.442695
    %v92 = vpow.pop %v91
    %v93 = vadd.f32 %v92, 1.0
    %v94 = vrcp.pop %v93
    %v95 = vmul.f32 %v93, %v94
    %v96 = vsub.f32 1.0, %v95
    %v97 = vmul.f32 %v94, %v96
    %v98 = vadd.f32 %v94, %v97
    %vm99 = vweird.f32 %v93
    %vm100 = vweird.f32 %v94
    %vm101 = vmor %vm99, %vm100
    %v102 = vsel %vm101, %v94, %v98
    %v103 = vand.u32 2147483647, %v93
    %vm104 = vcmp.eq.f32.partialorder %v103, 8.507059e+37
    %v105 = vand.u32 %v93, 2147483648
    %v106 = vor.u32 1.1754944e-38, %v105
    %v107 = vsel %vm104, %v106, %v102
    %v108 = vmul.f32 1.0, %v107
    %v109 = vmul.f32 %v88, %v108
    %v110 = vld [vmem:[%s4] sm:$0xff]
    %v111 = vld [vmem:[%s4 + $0x8] sm:$0xff]
    %v112 = vld [vmem:[%s4 + $0x10] sm:$0xff]
    %v113 = vld [vmem:[%s4 + $0x18] sm:$0xff]
    %v114 = vld [vmem:[%s4 + $0x20] sm:$0xff]
    %v115 = vld [vmem:[%s4 + $0x28] sm:$0xff]
    %v116 = vld [vmem:[%s4 + $0x30] sm:$0xff]
    %v117 = vld [vmem:[%s4 + $0x38] sm:$0xff]
    %vm118 = vcmask 523264
    %v120 = vsel %vm118, %v109, 0
    %122 = vmatpush.msra.mxu0 0.0
    %123 = vmatpush.msra.mxu0 0.0
    %124 = vmatpush.msra.mxu0 0.0
    %125 = vmatpush.msra.mxu0 0.0
    %126 = vmatpush.msra.mxu0 0.0
    %127 = vmatpush.msra.mxu0 0.0
    %128 = vmatpush.msra.mxu0 0.0
    %129 = vmatpush.msra.mxu0 0.0
    %130 = vmatpush.msra.mxu0 %v117
    %131 = vmatpush.msra.mxu0 %v116
    %132 = vmatpush.msra.mxu0 %v115
    %133 = vmatpush.msra.mxu0 %v114
    %134 = vmatpush.msra.mxu0 %v113
    %135 = vmatpush.msra.mxu0 %v112
    %136 = vmatpush.msra.mxu0 %v111
    %137 = vmatpush.msra.mxu0 %v110
    %138 = vmatmul.f32.gmra.mxu0 %v120
    %v139 = vpop.f32.mrf.mxu0
    %v140 = vadd.f32 %v51, %v139
    %141 = vdwg.mxu0
    %vm142 = vcmask 261120
    %143 = vst.msk [vmem:[#allocation2] sm:$0xff] %vm142, %v140
    %144 = vst.msk [vmem:[#allocation3] sm:$0xff] %vm142, %v140
    %s145 = scalar_lea.vmem %s1, 8
    %v146 = vld [vmem:[%s145] sm:$0xff]
    %148 = vrot.lane.b32.xlu0 %v146, 32
    %v149 = vpop.permute.xlu0 %148
    %151 = vst.msk [vmem:[#allocation2] sm:$0xff] %vm58, %v149
    %v152 = vld [vmem:[#allocation2] sm:$0xff]
    %v153 = vld [vmem:[%s2] sm:$0xff]
    %v154 = vld [vmem:[%s2 + $0x8] sm:$0xff]
    %v155 = vld [vmem:[%s2 + $0x10] sm:$0xff]
    %v156 = vld [vmem:[%s2 + $0x18] sm:$0xff]
    %v157 = vld [vmem:[%s2 + $0x20] sm:$0xff]
    %v159 = vsel %vm66, %v152, 0
    %161 = vmatpush.msra.mxu0 0.0
    %162 = vmatpush.msra.mxu0 0.0
    %163 = vmatpush.msra.mxu0 0.0
    %164 = vmatpush.msra.mxu0 0.0
    %165 = vmatpush.msra.mxu0 0.0
    %166 = vmatpush.msra.mxu0 0.0
    %167 = vmatpush.msra.mxu0 0.0
    %168 = vmatpush.msra.mxu0 0.0
    %169 = vmatpush.msra.mxu0 0.0
    %170 = vmatpush.msra.mxu0 0.0
    %171 = vmatpush.msra.mxu0 0.0
    %172 = vmatpush.msra.mxu0 %v157
    %173 = vmatpush.msra.mxu0 %v156
    %174 = vmatpush.msra.mxu0 %v155
    %175 = vmatpush.msra.mxu0 %v154
    %176 = vmatpush.msra.mxu0 %v153
    %177 = vmatmul.f32.gmra.mxu0 %v159
    %v178 = vpop.f32.mrf.mxu0
    %v179 = vadd.f32 %v47, %v178
    %180 = vdwg.mxu0
    %v181 = vxor.u32 %v179, 2147483648
    %v182 = vmul.f32 %v181, 1.442695
    %v183 = vpow.pop %v182
    %v184 = vadd.f32 %v183, 1.0
    %v185 = vrcp.pop %v184
    %v186 = vmul.f32 %v184, %v185
    %v187 = vsub.f32 1.0, %v186
    %v188 = vmul.f32 %v185, %v187
    %v189 = vadd.f32 %v185, %v188
    %vm190 = vweird.f32 %v184
    %vm191 = vweird.f32 %v185
    %vm192 = vmor %vm190, %vm191
    %v193 = vsel %vm192, %v185, %v189
    %v194 = vand.u32 2147483647, %v184
    %vm195 = vcmp.eq.f32.partialorder %v194, 8.507059e+37
    %v196 = vand.u32 %v184, 2147483648
    %v197 = vor.u32 1.1754944e-38, %v196
    %v198 = vsel %vm195, %v197, %v193
    %v199 = vmul.f32 1.0, %v198
    %v200 = vmul.f32 %v179, %v199
    %v201 = vld [vmem:[%s4] sm:$0xff]
    %v202 = vld [vmem:[%s4 + $0x8] sm:$0xff]
    %v203 = vld [vmem:[%s4 + $0x10] sm:$0xff]
    %v204 = vld [vmem:[%s4 + $0x18] sm:$0xff]
    %v205 = vld [vmem:[%s4 + $0x20] sm:$0xff]
    %v206 = vld [vmem:[%s4 + $0x28] sm:$0xff]
    %v207 = vld [vmem:[%s4 + $0x30] sm:$0xff]
    %v208 = vld [vmem:[%s4 + $0x38] sm:$0xff]
    %v210 = vsel %vm118, %v200, 0
    %212 = vmatpush.msra.mxu0 0.0
    %213 = vmatpush.msra.mxu0 0.0
    %214 = vmatpush.msra.mxu0 0.0
    %215 = vmatpush.msra.mxu0 0.0
    %216 = vmatpush.msra.mxu0 0.0
    %217 = vmatpush.msra.mxu0 0.0
    %218 = vmatpush.msra.mxu0 0.0
    %219 = vmatpush.msra.mxu0 0.0
    %220 = vmatpush.msra.mxu0 %v208
    %221 = vmatpush.msra.mxu0 %v207
    %222 = vmatpush.msra.mxu0 %v206
    %223 = vmatpush.msra.mxu0 %v205
    %224 = vmatpush.msra.mxu0 %v204
    %225 = vmatpush.msra.mxu0 %v203
    %226 = vmatpush.msra.mxu0 %v202
    %227 = vmatpush.msra.mxu0 %v201
    %228 = vmatmul.f32.gmra.mxu0 %v210
    %v229 = vpop.f32.mrf.mxu0
    %v230 = vadd.f32 %v51, %v229
    %231 = vdwg.mxu0
    %232 = vst.msk [vmem:[#allocation2] sm:$0xff] %vm142, %v230
    %s233 = scalar_lea.vmem [#allocation3], 8
    %234 = vst.msk [vmem:[%s233] sm:$0xff] %vm142, %v230
    %s235 = scalar_lea.vmem %s1, 16
    %v236 = vld [vmem:[%s235] sm:$0xff]
    %238 = vrot.lane.b32.xlu0 %v236, 32
    %v239 = vpop.permute.xlu0 %238
    %241 = vst.msk [vmem:[#allocation2] sm:$0xff] %vm58, %v239
    %v242 = vld [vmem:[#allocation2] sm:$0xff]
    %v243 = vld [vmem:[%s2] sm:$0xff]
    %v244 = vld [vmem:[%s2 + $0x8] sm:$0xff]
    %v245 = vld [vmem:[%s2 + $0x10] sm:$0xff]
    %v246 = vld [vmem:[%s2 + $0x18] sm:$0xff]
    %v247 = vld [vmem:[%s2 + $0x20] sm:$0xff]
    %v249 = vsel %vm66, %v242, 0
    %251 = vmatpush.msra.mxu0 0.0
    %252 = vmatpush.msra.mxu0 0.0
    %253 = vmatpush.msra.mxu0 0.0
    %254 = vmatpush.msra.mxu0 0.0
    %255 = vmatpush.msra.mxu0 0.0
    %256 = vmatpush.msra.mxu0 0.0
    %257 = vmatpush.msra.mxu0 0.0
    %258 = vmatpush.msra.mxu0 0.0
    %259 = vmatpush.msra.mxu0 0.0
    %260 = vmatpush.msra.mxu0 0.0
    %261 = vmatpush.msra.mxu0 0.0
    %262 = vmatpush.msra.mxu0 %v247
    %263 = vmatpush.msra.mxu0 %v246
    %264 = vmatpush.msra.mxu0 %v245
    %265 = vmatpush.msra.mxu0 %v244
    %266 = vmatpush.msra.mxu0 %v243
    %267 = vmatmul.f32.gmra.mxu0 %v249
    %v268 = vpop.f32.mrf.mxu0
    %v269 = vadd.f32 %v47, %v268
    %270 = vdwg.mxu0
    %v271 = vxor.u32 %v269, 2147483648
    %v272 = vmul.f32 %v271, 1.442695
    %v273 = vpow.pop %v272
    %v274 = vadd.f32 %v273, 1.0
    %v275 = vrcp.pop %v274
    %v276 = vmul.f32 %v274, %v275
    %v277 = vsub.f32 1.0, %v276
    %v278 = vmul.f32 %v275, %v277
    %v279 = vadd.f32 %v275, %v278
    %vm280 = vweird.f32 %v274
    %vm281 = vweird.f32 %v275
    %vm282 = vmor %vm280, %vm281
    %v283 = vsel %vm282, %v275, %v279
    %v284 = vand.u32 2147483647, %v274
    %vm285 = vcmp.eq.f32.partialorder %v284, 8.507059e+37
    %v286 = vand.u32 %v274, 2147483648
    %v287 = vor.u32 1.1754944e-38, %v286
    %v288 = vsel %vm285, %v287, %v283
    %v289 = vmul.f32 1.0, %v288
    %v290 = vmul.f32 %v269, %v289
    %v291 = vld [vmem:[%s4] sm:$0xff]
    %v292 = vld [vmem:[%s4 + $0x8] sm:$0xff]
    %v293 = vld [vmem:[%s4 + $0x10] sm:$0xff]
    %v294 = vld [vmem:[%s4 + $0x18] sm:$0xff]
    %v295 = vld [vmem:[%s4 + $0x20] sm:$0xff]
    %v296 = vld [vmem:[%s4 + $0x28] sm:$0xff]
    %v297 = vld [vmem:[%s4 + $0x30] sm:$0xff]
    %v298 = vld [vmem:[%s4 + $0x38] sm:$0xff]
    %v300 = vsel %vm118, %v290, 0
    %302 = vmatpush.msra.mxu0 0.0
    %303 = vmatpush.msra.mxu0 0.0
    %304 = vmatpush.msra.mxu0 0.0
    %305 = vmatpush.msra.mxu0 0.0
    %306 = vmatpush.msra.mxu0 0.0
    %307 = vmatpush.msra.mxu0 0.0
    %308 = vmatpush.msra.mxu0 0.0
    %309 = vmatpush.msra.mxu0 0.0
    %310 = vmatpush.msra.mxu0 %v298
    %311 = vmatpush.msra.mxu0 %v297
    %312 = vmatpush.msra.mxu0 %v296
    %313 = vmatpush.msra.mxu0 %v295
    %314 = vmatpush.msra.mxu0 %v294
    %315 = vmatpush.msra.mxu0 %v293
    %316 = vmatpush.msra.mxu0 %v292
    %317 = vmatpush.msra.mxu0 %v291
    %318 = vmatmul.f32.gmra.mxu0 %v300
    %v319 = vpop.f32.mrf.mxu0
    %v320 = vadd.f32 %v51, %v319
    %321 = vdwg.mxu0
    %322 = vst.msk [vmem:[#allocation2] sm:$0xff] %vm142, %v320
    %s323 = scalar_lea.vmem [#allocation3], 16
    %324 = vst.msk [vmem:[%s323] sm:$0xff] %vm142, %v320
    %s325 = scalar_lea.vmem %s1, 24
    %v326 = vld [vmem:[%s325] sm:$0xff]
    %328 = vrot.lane.b32.xlu0 %v326, 32
    %v329 = vpop.permute.xlu0 %328
    %331 = vst.msk [vmem:[#allocation2] sm:$0xff] %vm58, %v329
    %v332 = vld [vmem:[#allocation2] sm:$0xff]
    %v333 = vld [vmem:[%s2] sm:$0xff]
    %v334 = vld [vmem:[%s2 + $0x8] sm:$0xff]
    %v335 = vld [vmem:[%s2 + $0x10] sm:$0xff]
    %v336 = vld [vmem:[%s2 + $0x18] sm:$0xff]
    %v337 = vld [vmem:[%s2 + $0x20] sm:$0xff]
    %v339 = vsel %vm66, %v332, 0
    %341 = vmatpush.msra.mxu0 0.0
    %342 = vmatpush.msra.mxu0 0.0
    %343 = vmatpush.msra.mxu0 0.0
    %344 = vmatpush.msra.mxu0 0.0
    %345 = vmatpush.msra.mxu0 0.0
    %346 = vmatpush.msra.mxu0 0.0
    %347 = vmatpush.msra.mxu0 0.0
    %348 = vmatpush.msra.mxu0 0.0
    %349 = vmatpush.msra.mxu0 0.0
    %350 = vmatpush.msra.mxu0 0.0
    %351 = vmatpush.msra.mxu0 0.0
    %352 = vmatpush.msra.mxu0 %v337
    %353 = vmatpush.msra.mxu0 %v336
    %354 = vmatpush.msra.mxu0 %v335
    %355 = vmatpush.msra.mxu0 %v334
    %356 = vmatpush.msra.mxu0 %v333
    %357 = vmatmul.f32.gmra.mxu0 %v339
    %v358 = vpop.f32.mrf.mxu0
    %v359 = vadd.f32 %v47, %v358
    %360 = vdwg.mxu0
    %v361 = vxor.u32 %v359, 2147483648
    %v362 = vmul.f32 %v361, 1.442695
    %v363 = vpow.pop %v362
    %v364 = vadd.f32 %v363, 1.0
    %v365 = vrcp.pop %v364
    %v366 = vmul.f32 %v364, %v365
    %v367 = vsub.f32 1.0, %v366
    %v368 = vmul.f32 %v365, %v367
    %v369 = vadd.f32 %v365, %v368
    %vm370 = vweird.f32 %v364
    %vm371 = vweird.f32 %v365
    %vm372 = vmor %vm370, %vm371
    %v373 = vsel %vm372, %v365, %v369
    %v374 = vand.u32 2147483647, %v364
    %vm375 = vcmp.eq.f32.partialorder %v374, 8.507059e+37
    %v376 = vand.u32 %v364, 2147483648
    %v377 = vor.u32 1.1754944e-38, %v376
    %v378 = vsel %vm375, %v377, %v373
    %v379 = vmul.f32 1.0, %v378
    %v380 = vmul.f32 %v359, %v379
    %v381 = vld [vmem:[%s4] sm:$0xff]
    %v382 = vld [vmem:[%s4 + $0x8] sm:$0xff]
    %v383 = vld [vmem:[%s4 + $0x10] sm:$0xff]
    %v384 = vld [vmem:[%s4 + $0x18] sm:$0xff]
    %v385 = vld [vmem:[%s4 + $0x20] sm:$0xff]
    %v386 = vld [vmem:[%s4 + $0x28] sm:$0xff]
    %v387 = vld [vmem:[%s4 + $0x30] sm:$0xff]
    %v388 = vld [vmem:[%s4 + $0x38] sm:$0xff]
    %v390 = vsel %vm118, %v380, 0
    %392 = vmatpush.msra.mxu0 0.0
    %393 = vmatpush.msra.mxu0 0.0
    %394 = vmatpush.msra.mxu0 0.0
    %395 = vmatpush.msra.mxu0 0.0
    %396 = vmatpush.msra.mxu0 0.0
    %397 = vmatpush.msra.mxu0 0.0
    %398 = vmatpush.msra.mxu0 0.0
    %399 = vmatpush.msra.mxu0 0.0
    %400 = vmatpush.msra.mxu0 %v388
    %401 = vmatpush.msra.mxu0 %v387
    %402 = vmatpush.msra.mxu0 %v386
    %403 = vmatpush.msra.mxu0 %v385
    %404 = vmatpush.msra.mxu0 %v384
    %405 = vmatpush.msra.mxu0 %v383
    %406 = vmatpush.msra.mxu0 %v382
    %407 = vmatpush.msra.mxu0 %v381
    %408 = vmatmul.f32.gmra.mxu0 %v390
    %v409 = vpop.f32.mrf.mxu0
    %v410 = vadd.f32 %v51, %v409
    %411 = vdwg.mxu0
    %412 = vst.msk [vmem:[#allocation2] sm:$0xff] %vm142, %v410
    %s413 = scalar_lea.vmem [#allocation3], 24
    %414 = vst.msk [vmem:[%s413] sm:$0xff] %vm142, %v410
    %s415 = scalar_lea.vmem %s1, 32
    %v416 = vld [vmem:[%s415] sm:$0xff]
    %418 = vrot.lane.b32.xlu0 %v416, 32
    %v419 = vpop.permute.xlu0 %418
    %421 = vst.msk [vmem:[#allocation2] sm:$0xff] %vm58, %v419
    %v422 = vld [vmem:[#allocation2] sm:$0xff]
    %v423 = vld [vmem:[%s2] sm:$0xff]
    %v424 = vld [vmem:[%s2 + $0x8] sm:$0xff]
    %v425 = vld [vmem:[%s2 + $0x10] sm:$0xff]
    %v426 = vld [vmem:[%s2 + $0x18] sm:$0xff]
    %v427 = vld [vmem:[%s2 + $0x20] sm:$0xff]
    %v429 = vsel %vm66, %v422, 0
    %431 = vmatpush.msra.mxu0 0.0
    %432 = vmatpush.msra.mxu0 0.0
    %433 = vmatpush.msra.mxu0 0.0
    %434 = vmatpush.msra.mxu0 0.0
    %435 = vmatpush.msra.mxu0 0.0
    %436 = vmatpush.msra.mxu0 0.0
    %437 = vmatpush.msra.mxu0 0.0
    %438 = vmatpush.msra.mxu0 0.0
    %439 = vmatpush.msra.mxu0 0.0
    %440 = vmatpush.msra.mxu0 0.0
    %441 = vmatpush.msra.mxu0 0.0
    %442 = vmatpush.msra.mxu0 %v427
    %443 = vmatpush.msra.mxu0 %v426
    %444 = vmatpush.msra.mxu0 %v425
    %445 = vmatpush.msra.mxu0 %v424
    %446 = vmatpush.msra.mxu0 %v423
    %447 = vmatmul.f32.gmra.mxu0 %v429
    %v448 = vpop.f32.mrf.mxu0
    %v449 = vadd.f32 %v47, %v448
    %450 = vdwg.mxu0
    %v451 = vxor.u32 %v449, 2147483648
    %v452 = vmul.f32 %v451, 1.442695
    %v453 = vpow.pop %v452
    %v454 = vadd.f32 %v453, 1.0
    %v455 = vrcp.pop %v454
    %v456 = vmul.f32 %v454, %v455
    %v457 = vsub.f32 1.0, %v456
    %v458 = vmul.f32 %v455, %v457
    %v459 = vadd.f32 %v455, %v458
    %vm460 = vweird.f32 %v454
    %vm461 = vweird.f32 %v455
    %vm462 = vmor %vm460, %vm461
    %v463 = vsel %vm462, %v455, %v459
    %v464 = vand.u32 2147483647, %v454
    %vm465 = vcmp.eq.f32.partialorder %v464, 8.507059e+37
    %v466 = vand.u32 %v454, 2147483648
    %v467 = vor.u32 1.1754944e-38, %v466
    %v468 = vsel %vm465, %v467, %v463
    %v469 = vmul.f32 1.0, %v468
    %v470 = vmul.f32 %v449, %v469
    %v471 = vld [vmem:[%s4] sm:$0xff]
    %v472 = vld [vmem:[%s4 + $0x8] sm:$0xff]
    %v473 = vld [vmem:[%s4 + $0x10] sm:$0xff]
    %v474 = vld [vmem:[%s4 + $0x18] sm:$0xff]
    %v475 = vld [vmem:[%s4 + $0x20] sm:$0xff]
    %v476 = vld [vmem:[%s4 + $0x28] sm:$0xff]
    %v477 = vld [vmem:[%s4 + $0x30] sm:$0xff]
    %v478 = vld [vmem:[%s4 + $0x38] sm:$0xff]
    %v480 = vsel %vm118, %v470, 0
    %482 = vmatpush.msra.mxu0 0.0
    %483 = vmatpush.msra.mxu0 0.0
    %484 = vmatpush.msra.mxu0 0.0
    %485 = vmatpush.msra.mxu0 0.0
    %486 = vmatpush.msra.mxu0 0.0
    %487 = vmatpush.msra.mxu0 0.0
    %488 = vmatpush.msra.mxu0 0.0
    %489 = vmatpush.msra.mxu0 0.0
    %490 = vmatpush.msra.mxu0 %v478
    %491 = vmatpush.msra.mxu0 %v477
    %492 = vmatpush.msra.mxu0 %v476
    %493 = vmatpush.msra.mxu0 %v475
    %494 = vmatpush.msra.mxu0 %v474
    %495 = vmatpush.msra.mxu0 %v473
    %496 = vmatpush.msra.mxu0 %v472
    %497 = vmatpush.msra.mxu0 %v471
    %498 = vmatmul.f32.gmra.mxu0 %v480
    %v499 = vpop.f32.mrf.mxu0
    %v500 = vadd.f32 %v51, %v499
    %501 = vdwg.mxu0
    %502 = vst.msk [vmem:[#allocation2] sm:$0xff] %vm142, %v500
    %s503 = scalar_lea.vmem [#allocation3], 32
    %504 = vst.msk [vmem:[%s503] sm:$0xff] %vm142, %v500
    %s505 = scalar_lea.vmem %s1, 40
    %v506 = vld [vmem:[%s505] sm:$0xff]
    %508 = vrot.lane.b32.xlu0 %v506, 32
    %v509 = vpop.permute.xlu0 %508
    %511 = vst.msk [vmem:[#allocation2] sm:$0xff] %vm58, %v509
    %v512 = vld [vmem:[#allocation2] sm:$0xff]
    %v513 = vld [vmem:[%s2] sm:$0xff]
    %v514 = vld [vmem:[%s2 + $0x8] sm:$0xff]
    %v515 = vld [vmem:[%s2 + $0x10] sm:$0xff]
    %v516 = vld [vmem:[%s2 + $0x18] sm:$0xff]
    %v517 = vld [vmem:[%s2 + $0x20] sm:$0xff]
    %v519 = vsel %vm66, %v512, 0
    %521 = vmatpush.msra.mxu0 0.0
    %522 = vmatpush.msra.mxu0 0.0
    %523 = vmatpush.msra.mxu0 0.0
    %524 = vmatpush.msra.mxu0 0.0
    %525 = vmatpush.msra.mxu0 0.0
    %526 = vmatpush.msra.mxu0 0.0
    %527 = vmatpush.msra.mxu0 0.0
    %528 = vmatpush.msra.mxu0 0.0
    %529 = vmatpush.msra.mxu0 0.0
    %530 = vmatpush.msra.mxu0 0.0
    %531 = vmatpush.msra.mxu0 0.0
    %532 = vmatpush.msra.mxu0 %v517
    %533 = vmatpush.msra.mxu0 %v516
    %534 = vmatpush.msra.mxu0 %v515
    %535 = vmatpush.msra.mxu0 %v514
    %536 = vmatpush.msra.mxu0 %v513
    %537 = vmatmul.f32.gmra.mxu0 %v519
    %v538 = vpop.f32.mrf.mxu0
    %v539 = vadd.f32 %v47, %v538
    %540 = vdwg.mxu0
    %v541 = vxor.u32 %v539, 2147483648
    %v542 = vmul.f32 %v541, 1.442695
    %v543 = vpow.pop %v542
    %v544 = vadd.f32 %v543, 1.0
    %v545 = vrcp.pop %v544
    %v546 = vmul.f32 %v544, %v545
    %v547 = vsub.f32 1.0, %v546
    %v548 = vmul.f32 %v545, %v547
    %v549 = vadd.f32 %v545, %v548
    %vm550 = vweird.f32 %v544
    %vm551 = vweird.f32 %v545
    %vm552 = vmor %vm550, %vm551
    %v553 = vsel %vm552, %v545, %v549
    %v554 = vand.u32 2147483647, %v544
    %vm555 = vcmp.eq.f32.partialorder %v554, 8.507059e+37
    %v556 = vand.u32 %v544, 2147483648
    %v557 = vor.u32 1.1754944e-38, %v556
    %v558 = vsel %vm555, %v557, %v553
    %v559 = vmul.f32 1.0, %v558
    %v560 = vmul.f32 %v539, %v559
    %v561 = vld [vmem:[%s4] sm:$0xff]
    %v562 = vld [vmem:[%s4 + $0x8] sm:$0xff]
    %v563 = vld [vmem:[%s4 + $0x10] sm:$0xff]
    %v564 = vld [vmem:[%s4 + $0x18] sm:$0xff]
    %v565 = vld [vmem:[%s4 + $0x20] sm:$0xff]
    %v566 = vld [vmem:[%s4 + $0x28] sm:$0xff]
    %v567 = vld [vmem:[%s4 + $0x30] sm:$0xff]
    %v568 = vld [vmem:[%s4 + $0x38] sm:$0xff]
    %v570 = vsel %vm118, %v560, 0
    %572 = vmatpush.msra.mxu0 0.0
    %573 = vmatpush.msra.mxu0 0.0
    %574 = vmatpush.msra.mxu0 0.0
    %575 = vmatpush.msra.mxu0 0.0
    %576 = vmatpush.msra.mxu0 0.0
    %577 = vmatpush.msra.mxu0 0.0
    %578 = vmatpush.msra.mxu0 0.0
    %579 = vmatpush.msra.mxu0 0.0
    %580 = vmatpush.msra.mxu0 %v568
    %581 = vmatpush.msra.mxu0 %v567
    %582 = vmatpush.msra.mxu0 %v566
    %583 = vmatpush.msra.mxu0 %v565
    %584 = vmatpush.msra.mxu0 %v564
    %585 = vmatpush.msra.mxu0 %v563
    %586 = vmatpush.msra.mxu0 %v562
    %587 = vmatpush.msra.mxu0 %v561
    %588 = vmatmul.f32.gmra.mxu0 %v570
    %v589 = vpop.f32.mrf.mxu0
    %v590 = vadd.f32 %v51, %v589
    %591 = vdwg.mxu0
    %592 = vst.msk [vmem:[#allocation2] sm:$0xff] %vm142, %v590
    %s593 = scalar_lea.vmem [#allocation3], 40
    %594 = vst.msk [vmem:[%s593] sm:$0xff] %vm142, %v590
    %s595 = scalar_lea.vmem %s1, 48
    %v596 = vld [vmem:[%s595] sm:$0xff]
    %598 = vrot.lane.b32.xlu0 %v596, 32
    %v599 = vpop.permute.xlu0 %598
    %601 = vst.msk [vmem:[#allocation2] sm:$0xff] %vm58, %v599
    %v602 = vld [vmem:[#allocation2] sm:$0xff]
    %v603 = vld [vmem:[%s2] sm:$0xff]
    %v604 = vld [vmem:[%s2 + $0x8] sm:$0xff]
    %v605 = vld [vmem:[%s2 + $0x10] sm:$0xff]
    %v606 = vld [vmem:[%s2 + $0x18] sm:$0xff]
    %v607 = vld [vmem:[%s2 + $0x20] sm:$0xff]
    %v609 = vsel %vm66, %v602, 0
    %611 = vmatpush.msra.mxu0 0.0
    %612 = vmatpush.msra.mxu0 0.0
    %613 = vmatpush.msra.mxu0 0.0
    %614 = vmatpush.msra.mxu0 0.0
    %615 = vmatpush.msra.mxu0 0.0
    %616 = vmatpush.msra.mxu0 0.0
    %617 = vmatpush.msra.mxu0 0.0
    %618 = vmatpush.msra.mxu0 0.0
    %619 = vmatpush.msra.mxu0 0.0
    %620 = vmatpush.msra.mxu0 0.0
    %621 = vmatpush.msra.mxu0 0.0
    %622 = vmatpush.msra.mxu0 %v607
    %623 = vmatpush.msra.mxu0 %v606
    %624 = vmatpush.msra.mxu0 %v605
    %625 = vmatpush.msra.mxu0 %v604
    %626 = vmatpush.msra.mxu0 %v603
    %627 = vmatmul.f32.gmra.mxu0 %v609
    %v628 = vpop.f32.mrf.mxu0
    %v629 = vadd.f32 %v47, %v628
    %630 = vdwg.mxu0
    %v631 = vxor.u32 %v629, 2147483648
    %v632 = vmul.f32 %v631, 1.442695
    %v633 = vpow.pop %v632
    %v634 = vadd.f32 %v633, 1.0
    %v635 = vrcp.pop %v634
    %v636 = vmul.f32 %v634, %v635
    %v637 = vsub.f32 1.0, %v636
    %v638 = vmul.f32 %v635, %v637
    %v639 = vadd.f32 %v635, %v638
    %vm640 = vweird.f32 %v634
    %vm641 = vweird.f32 %v635
    %vm642 = vmor %vm640, %vm641
    %v643 = vsel %vm642, %v635, %v639
    %v644 = vand.u32 2147483647, %v634
    %vm645 = vcmp.eq.f32.partialorder %v644, 8.507059e+37
    %v646 = vand.u32 %v634, 2147483648
    %v647 = vor.u32 1.1754944e-38, %v646
    %v648 = vsel %vm645, %v647, %v643
    %v649 = vmul.f32 1.0, %v648
    %v650 = vmul.f32 %v629, %v649
    %v651 = vld [vmem:[%s4] sm:$0xff]
    %v652 = vld [vmem:[%s4 + $0x8] sm:$0xff]
    %v653 = vld [vmem:[%s4 + $0x10] sm:$0xff]
    %v654 = vld [vmem:[%s4 + $0x18] sm:$0xff]
    %v655 = vld [vmem:[%s4 + $0x20] sm:$0xff]
    %v656 = vld [vmem:[%s4 + $0x28] sm:$0xff]
    %v657 = vld [vmem:[%s4 + $0x30] sm:$0xff]
    %v658 = vld [vmem:[%s4 + $0x38] sm:$0xff]
    %v660 = vsel %vm118, %v650, 0
    %662 = vmatpush.msra.mxu0 0.0
    %663 = vmatpush.msra.mxu0 0.0
    %664 = vmatpush.msra.mxu0 0.0
    %665 = vmatpush.msra.mxu0 0.0
    %666 = vmatpush.msra.mxu0 0.0
    %667 = vmatpush.msra.mxu0 0.0
    %668 = vmatpush.msra.mxu0 0.0
    %669 = vmatpush.msra.mxu0 0.0
    %670 = vmatpush.msra.mxu0 %v658
    %671 = vmatpush.msra.mxu0 %v657
    %672 = vmatpush.msra.mxu0 %v656
    %673 = vmatpush.msra.mxu0 %v655
    %674 = vmatpush.msra.mxu0 %v654
    %675 = vmatpush.msra.mxu0 %v653
    %676 = vmatpush.msra.mxu0 %v652
    %677 = vmatpush.msra.mxu0 %v651
    %678 = vmatmul.f32.gmra.mxu0 %v660
    %v679 = vpop.f32.mrf.mxu0
    %v680 = vadd.f32 %v51, %v679
    %681 = vdwg.mxu0
    %682 = vst.msk [vmem:[#allocation2] sm:$0xff] %vm142, %v680
    %s683 = scalar_lea.vmem [#allocation3], 48
    %684 = vst.msk [vmem:[%s683] sm:$0xff] %vm142, %v680
    %s685 = scalar_lea.vmem %s1, 56
    %v686 = vld [vmem:[%s685] sm:$0xff]
    %688 = vrot.lane.b32.xlu0 %v686, 32
    %v689 = vpop.permute.xlu0 %688
    %691 = vst.msk [vmem:[#allocation2] sm:$0xff] %vm58, %v689
    %v692 = vld [vmem:[#allocation2] sm:$0xff]
    %v693 = vld [vmem:[%s2] sm:$0xff]
    %v694 = vld [vmem:[%s2 + $0x8] sm:$0xff]
    %v695 = vld [vmem:[%s2 + $0x10] sm:$0xff]
    %v696 = vld [vmem:[%s2 + $0x18] sm:$0xff]
    %v697 = vld [vmem:[%s2 + $0x20] sm:$0xff]
    %v699 = vsel %vm66, %v692, 0
    %701 = vmatpush.msra.mxu0 0.0
    %702 = vmatpush.msra.mxu0 0.0
    %703 = vmatpush.msra.mxu0 0.0
    %704 = vmatpush.msra.mxu0 0.0
    %705 = vmatpush.msra.mxu0 0.0
    %706 = vmatpush.msra.mxu0 0.0
    %707 = vmatpush.msra.mxu0 0.0
    %708 = vmatpush.msra.mxu0 0.0
    %709 = vmatpush.msra.mxu0 0.0
    %710 = vmatpush.msra.mxu0 0.0
    %711 = vmatpush.msra.mxu0 0.0
    %712 = vmatpush.msra.mxu0 %v697
    %713 = vmatpush.msra.mxu0 %v696
    %714 = vmatpush.msra.mxu0 %v695
    %715 = vmatpush.msra.mxu0 %v694
    %716 = vmatpush.msra.mxu0 %v693
    %717 = vmatmul.f32.gmra.mxu0 %v699
    %v718 = vpop.f32.mrf.mxu0
    %v719 = vadd.f32 %v47, %v718
    %720 = vdwg.mxu0
    %v721 = vxor.u32 %v719, 2147483648
    %v722 = vmul.f32 %v721, 1.442695
    %v723 = vpow.pop %v722
    %v724 = vadd.f32 %v723, 1.0
    %v725 = vrcp.pop %v724
    %v726 = vmul.f32 %v724, %v725
    %v727 = vsub.f32 1.0, %v726
    %v728 = vmul.f32 %v725, %v727
    %v729 = vadd.f32 %v725, %v728
    %vm730 = vweird.f32 %v724
    %vm731 = vweird.f32 %v725
    %vm732 = vmor %vm730, %vm731
    %v733 = vsel %vm732, %v725, %v729
    %v734 = vand.u32 2147483647, %v724
    %vm735 = vcmp.eq.f32.partialorder %v734, 8.507059e+37
    %v736 = vand.u32 %v724, 2147483648
    %v737 = vor.u32 1.1754944e-38, %v736
    %v738 = vsel %vm735, %v737, %v733
    %v739 = vmul.f32 1.0, %v738
    %v740 = vmul.f32 %v719, %v739
    %v741 = vld [vmem:[%s4] sm:$0xff]
    %v742 = vld [vmem:[%s4 + $0x8] sm:$0xff]
    %v743 = vld [vmem:[%s4 + $0x10] sm:$0xff]
    %v744 = vld [vmem:[%s4 + $0x18] sm:$0xff]
    %v745 = vld [vmem:[%s4 + $0x20] sm:$0xff]
    %v746 = vld [vmem:[%s4 + $0x28] sm:$0xff]
    %v747 = vld [vmem:[%s4 + $0x30] sm:$0xff]
    %v748 = vld [vmem:[%s4 + $0x38] sm:$0xff]
    %v750 = vsel %vm118, %v740, 0
    %752 = vmatpush.msra.mxu0 0.0
    %753 = vmatpush.msra.mxu0 0.0
    %754 = vmatpush.msra.mxu0 0.0
    %755 = vmatpush.msra.mxu0 0.0
    %756 = vmatpush.msra.mxu0 0.0
    %757 = vmatpush.msra.mxu0 0.0
    %758 = vmatpush.msra.mxu0 0.0
    %759 = vmatpush.msra.mxu0 0.0
    %760 = vmatpush.msra.mxu0 %v748
    %761 = vmatpush.msra.mxu0 %v747
    %762 = vmatpush.msra.mxu0 %v746
    %763 = vmatpush.msra.mxu0 %v745
    %764 = vmatpush.msra.mxu0 %v744
    %765 = vmatpush.msra.mxu0 %v743
    %766 = vmatpush.msra.mxu0 %v742
    %767 = vmatpush.msra.mxu0 %v741
    %768 = vmatmul.f32.gmra.mxu0 %v750
    %v769 = vpop.f32.mrf.mxu0
    %v770 = vadd.f32 %v51, %v769
    %771 = vdwg.mxu0
    %772 = vst.msk [vmem:[#allocation2] sm:$0xff] %vm142, %v770
    %s773 = scalar_lea.vmem [#allocation3], 56
    %774 = vst.msk [vmem:[%s773] sm:$0xff] %vm142, %v770
    %s775 = scalar_lea.vmem %s1, 64
    %v776 = vld [vmem:[%s775] sm:$0xff]
    %778 = vrot.lane.b32.xlu0 %v776, 32
    %v779 = vpop.permute.xlu0 %778
    %781 = vst.msk [vmem:[#allocation2] sm:$0xff] %vm58, %v779
    %v782 = vld [vmem:[#allocation2] sm:$0xff]
    %v783 = vld [vmem:[%s2] sm:$0xff]
    %v784 = vld [vmem:[%s2 + $0x8] sm:$0xff]
    %v785 = vld [vmem:[%s2 + $0x10] sm:$0xff]
    %v786 = vld [vmem:[%s2 + $0x18] sm:$0xff]
    %v787 = vld [vmem:[%s2 + $0x20] sm:$0xff]
    %v789 = vsel %vm66, %v782, 0
    %791 = vmatpush.msra.mxu0 0.0
    %792 = vmatpush.msra.mxu0 0.0
    %793 = vmatpush.msra.mxu0 0.0
    %794 = vmatpush.msra.mxu0 0.0
    %795 = vmatpush.msra.mxu0 0.0
    %796 = vmatpush.msra.mxu0 0.0
    %797 = vmatpush.msra.mxu0 0.0
    %798 = vmatpush.msra.mxu0 0.0
    %799 = vmatpush.msra.mxu0 0.0
    %800 = vmatpush.msra.mxu0 0.0
    %801 = vmatpush.msra.mxu0 0.0
    %802 = vmatpush.msra.mxu0 %v787
    %803 = vmatpush.msra.mxu0 %v786
    %804 = vmatpush.msra.mxu0 %v785
    %805 = vmatpush.msra.mxu0 %v784
    %806 = vmatpush.msra.mxu0 %v783
    %807 = vmatmul.f32.gmra.mxu0 %v789
    %v808 = vpop.f32.mrf.mxu0
    %v809 = vadd.f32 %v47, %v808
    %810 = vdwg.mxu0
    %v811 = vxor.u32 %v809, 2147483648
    %v812 = vmul.f32 %v811, 1.442695
    %v813 = vpow.pop %v812
    %v814 = vadd.f32 %v813, 1.0
    %v815 = vrcp.pop %v814
    %v816 = vmul.f32 %v814, %v815
    %v817 = vsub.f32 1.0, %v816
    %v818 = vmul.f32 %v815, %v817
    %v819 = vadd.f32 %v815, %v818
    %vm820 = vweird.f32 %v814
    %vm821 = vweird.f32 %v815
    %vm822 = vmor %vm820, %vm821
    %v823 = vsel %vm822, %v815, %v819
    %v824 = vand.u32 2147483647, %v814
    %vm825 = vcmp.eq.f32.partialorder %v824, 8.507059e+37
    %v826 = vand.u32 %v814, 2147483648
    %v827 = vor.u32 1.1754944e-38, %v826
    %v828 = vsel %vm825, %v827, %v823
    %v829 = vmul.f32 1.0, %v828
    %v830 = vmul.f32 %v809, %v829
    %v831 = vld [vmem:[%s4] sm:$0xff]
    %v832 = vld [vmem:[%s4 + $0x8] sm:$0xff]
    %v833 = vld [vmem:[%s4 + $0x10] sm:$0xff]
    %v834 = vld [vmem:[%s4 + $0x18] sm:$0xff]
    %v835 = vld [vmem:[%s4 + $0x20] sm:$0xff]
    %v836 = vld [vmem:[%s4 + $0x28] sm:$0xff]
    %v837 = vld [vmem:[%s4 + $0x30] sm:$0xff]
    %v838 = vld [vmem:[%s4 + $0x38] sm:$0xff]
    %v840 = vsel %vm118, %v830, 0
    %842 = vmatpush.msra.mxu0 0.0
    %843 = vmatpush.msra.mxu0 0.0
    %844 = vmatpush.msra.mxu0 0.0
    %845 = vmatpush.msra.mxu0 0.0
    %846 = vmatpush.msra.mxu0 0.0
    %847 = vmatpush.msra.mxu0 0.0
    %848 = vmatpush.msra.mxu0 0.0
    %849 = vmatpush.msra.mxu0 0.0
    %850 = vmatpush.msra.mxu0 %v838
    %851 = vmatpush.msra.mxu0 %v837
    %852 = vmatpush.msra.mxu0 %v836
    %853 = vmatpush.msra.mxu0 %v835
    %854 = vmatpush.msra.mxu0 %v834
    %855 = vmatpush.msra.mxu0 %v833
    %856 = vmatpush.msra.mxu0 %v832
    %857 = vmatpush.msra.mxu0 %v831
    %858 = vmatmul.f32.gmra.mxu0 %v840
    %v859 = vpop.f32.mrf.mxu0
    %v860 = vadd.f32 %v51, %v859
    %861 = vdwg.mxu0
    %862 = vst.msk [vmem:[#allocation2] sm:$0xff] %vm142, %v860
    %s863 = scalar_lea.vmem [#allocation3], 64
    %864 = vst.msk [vmem:[%s863] sm:$0xff] %vm142, %v860
    %s865 = scalar_lea.vmem %s1, 72
    %v866 = vld [vmem:[%s865] sm:$0xff]
    %868 = vrot.lane.b32.xlu0 %v866, 32
    %v869 = vpop.permute.xlu0 %868
    %871 = vst.msk [vmem:[#allocation2] sm:$0xff] %vm58, %v869
    %v872 = vld [vmem:[#allocation2] sm:$0xff]
    %v873 = vld [vmem:[%s2] sm:$0xff]
    %v874 = vld [vmem:[%s2 + $0x8] sm:$0xff]
    %v875 = vld [vmem:[%s2 + $0x10] sm:$0xff]
    %v876 = vld [vmem:[%s2 + $0x18] sm:$0xff]
    %v877 = vld [vmem:[%s2 + $0x20] sm:$0xff]
    %v879 = vsel %vm66, %v872, 0
    %881 = vmatpush.msra.mxu0 0.0
    %882 = vmatpush.msra.mxu0 0.0
    %883 = vmatpush.msra.mxu0 0.0
    %884 = vmatpush.msra.mxu0 0.0
    %885 = vmatpush.msra.mxu0 0.0
    %886 = vmatpush.msra.mxu0 0.0
    %887 = vmatpush.msra.mxu0 0.0
    %888 = vmatpush.msra.mxu0 0.0
    %889 = vmatpush.msra.mxu0 0.0
    %890 = vmatpush.msra.mxu0 0.0
    %891 = vmatpush.msra.mxu0 0.0
    %892 = vmatpush.msra.mxu0 %v877
    %893 = vmatpush.msra.mxu0 %v876
    %894 = vmatpush.msra.mxu0 %v875
    %895 = vmatpush.msra.mxu0 %v874
    %896 = vmatpush.msra.mxu0 %v873
    %897 = vmatmul.f32.gmra.mxu0 %v879
    %v898 = vpop.f32.mrf.mxu0
    %v899 = vadd.f32 %v47, %v898
    %900 = vdwg.mxu0
    %v901 = vxor.u32 %v899, 2147483648
    %v902 = vmul.f32 %v901, 1.442695
    %v903 = vpow.pop %v902
    %v904 = vadd.f32 %v903, 1.0
    %v905 = vrcp.pop %v904
    %v906 = vmul.f32 %v904, %v905
    %v907 = vsub.f32 1.0, %v906
    %v908 = vmul.f32 %v905, %v907
    %v909 = vadd.f32 %v905, %v908
    %vm910 = vweird.f32 %v904
    %vm911 = vweird.f32 %v905
    %vm912 = vmor %vm910, %vm911
    %v913 = vsel %vm912, %v905, %v909
    %v914 = vand.u32 2147483647, %v904
    %vm915 = vcmp.eq.f32.partialorder %v914, 8.507059e+37
    %v916 = vand.u32 %v904, 2147483648
    %v917 = vor.u32 1.1754944e-38, %v916
    %v918 = vsel %vm915, %v917, %v913
    %v919 = vmul.f32 1.0, %v918
    %v920 = vmul.f32 %v899, %v919
    %v921 = vld [vmem:[%s4] sm:$0xff]
    %v922 = vld [vmem:[%s4 + $0x8] sm:$0xff]
    %v923 = vld [vmem:[%s4 + $0x10] sm:$0xff]
    %v924 = vld [vmem:[%s4 + $0x18] sm:$0xff]
    %v925 = vld [vmem:[%s4 + $0x20] sm:$0xff]
    %v926 = vld [vmem:[%s4 + $0x28] sm:$0xff]
    %v927 = vld [vmem:[%s4 + $0x30] sm:$0xff]
    %v928 = vld [vmem:[%s4 + $0x38] sm:$0xff]
    %v930 = vsel %vm118, %v920, 0
    %932 = vmatpush.msra.mxu0 0.0
    %933 = vmatpush.msra.mxu0 0.0
    %934 = vmatpush.msra.mxu0 0.0
    %935 = vmatpush.msra.mxu0 0.0
    %936 = vmatpush.msra.mxu0 0.0
    %937 = vmatpush.msra.mxu0 0.0
    %938 = vmatpush.msra.mxu0 0.0
    %939 = vmatpush.msra.mxu0 0.0
    %940 = vmatpush.msra.mxu0 %v928
    %941 = vmatpush.msra.mxu0 %v927
    %942 = vmatpush.msra.mxu0 %v926
    %943 = vmatpush.msra.mxu0 %v925
    %944 = vmatpush.msra.mxu0 %v924
    %945 = vmatpush.msra.mxu0 %v923
    %946 = vmatpush.msra.mxu0 %v922
    %947 = vmatpush.msra.mxu0 %v921
    %948 = vmatmul.f32.gmra.mxu0 %v930
    %v949 = vpop.f32.mrf.mxu0
    %v950 = vadd.f32 %v51, %v949
    %951 = vdwg.mxu0
    %952 = vst.msk [vmem:[#allocation2] sm:$0xff] %vm142, %v950
    %s953 = scalar_lea.vmem [#allocation3], 72
    %954 = vst.msk [vmem:[%s953] sm:$0xff] %vm142, %v950
    %s955 = scalar_lea.vmem %s1, 80
    %v956 = vld [vmem:[%s955] sm:$0xff]
    %958 = vrot.lane.b32.xlu0 %v956, 32
    %v959 = vpop.permute.xlu0 %958
    %961 = vst.msk [vmem:[#allocation2] sm:$0xff] %vm58, %v959
    %v962 = vld [vmem:[#allocation2] sm:$0xff]
    %v963 = vld [vmem:[%s2] sm:$0xff]
    %v964 = vld [vmem:[%s2 + $0x8] sm:$0xff]
    %v965 = vld [vmem:[%s2 + $0x10] sm:$0xff]
    %v966 = vld [vmem:[%s2 + $0x18] sm:$0xff]
    %v967 = vld [vmem:[%s2 + $0x20] sm:$0xff]
    %v969 = vsel %vm66, %v962, 0
    %971 = vmatpush.msra.mxu0 0.0
    %972 = vmatpush.msra.mxu0 0.0
    %973 = vmatpush.msra.mxu0 0.0
    %974 = vmatpush.msra.mxu0 0.0
    %975 = vmatpush.msra.mxu0 0.0
    %976 = vmatpush.msra.mxu0 0.0
    %977 = vmatpush.msra.mxu0 0.0
    %978 = vmatpush.msra.mxu0 0.0
    %979 = vmatpush.msra.mxu0 0.0
    %980 = vmatpush.msra.mxu0 0.0
    %981 = vmatpush.msra.mxu0 0.0
    %982 = vmatpush.msra.mxu0 %v967
    %983 = vmatpush.msra.mxu0 %v966
    %984 = vmatpush.msra.mxu0 %v965
    %985 = vmatpush.msra.mxu0 %v964
    %986 = vmatpush.msra.mxu0 %v963
    %987 = vmatmul.f32.gmra.mxu0 %v969
    %v988 = vpop.f32.mrf.mxu0
    %v989 = vadd.f32 %v47, %v988
    %990 = vdwg.mxu0
    %v991 = vxor.u32 %v989, 2147483648
    %v992 = vmul.f32 %v991, 1.442695
    %v993 = vpow.pop %v992
    %v994 = vadd.f32 %v993, 1.0
    %v995 = vrcp.pop %v994
    %v996 = vmul.f32 %v994, %v995
    %v997 = vsub.f32 1.0, %v996
    %v998 = vmul.f32 %v995, %v997
    %v999 = vadd.f32 %v995, %v998
    %vm1000 = vweird.f32 %v994
    %vm1001 = vweird.f32 %v995
    %vm1002 = vmor %vm1000, %vm1001
    %v1003 = vsel %vm1002, %v995, %v999
    %v1004 = vand.u32 2147483647, %v994
    %vm1005 = vcmp.eq.f32.partialorder %v1004, 8.507059e+37
    %v1006 = vand.u32 %v994, 2147483648
    %v1007 = vor.u32 1.1754944e-38, %v1006
    %v1008 = vsel %vm1005, %v1007, %v1003
    %v1009 = vmul.f32 1.0, %v1008
    %v1010 = vmul.f32 %v989, %v1009
    %v1011 = vld [vmem:[%s4] sm:$0xff]
    %v1012 = vld [vmem:[%s4 + $0x8] sm:$0xff]
    %v1013 = vld [vmem:[%s4 + $0x10] sm:$0xff]
    %v1014 = vld [vmem:[%s4 + $0x18] sm:$0xff]
    %v1015 = vld [vmem:[%s4 + $0x20] sm:$0xff]
    %v1016 = vld [vmem:[%s4 + $0x28] sm:$0xff]
    %v1017 = vld [vmem:[%s4 + $0x30] sm:$0xff]
    %v1018 = vld [vmem:[%s4 + $0x38] sm:$0xff]
    %v1020 = vsel %vm118, %v1010, 0
    %1022 = vmatpush.msra.mxu0 0.0
    %1023 = vmatpush.msra.mxu0 0.0
    %1024 = vmatpush.msra.mxu0 0.0
    %1025 = vmatpush.msra.mxu0 0.0
    %1026 = vmatpush.msra.mxu0 0.0
    %1027 = vmatpush.msra.mxu0 0.0
    %1028 = vmatpush.msra.mxu0 0.0
    %1029 = vmatpush.msra.mxu0 0.0
    %1030 = vmatpush.msra.mxu0 %v1018
    %1031 = vmatpush.msra.mxu0 %v1017
    %1032 = vmatpush.msra.mxu0 %v1016
    %1033 = vmatpush.msra.mxu0 %v1015
    %1034 = vmatpush.msra.mxu0 %v1014
    %1035 = vmatpush.msra.mxu0 %v1013
    %1036 = vmatpush.msra.mxu0 %v1012
    %1037 = vmatpush.msra.mxu0 %v1011
    %1038 = vmatmul.f32.gmra.mxu0 %v1020
    %v1039 = vpop.f32.mrf.mxu0
    %v1040 = vadd.f32 %v51, %v1039
    %1041 = vdwg.mxu0
    %1042 = vst.msk [vmem:[#allocation2] sm:$0xff] %vm142, %v1040
    %s1043 = scalar_lea.vmem [#allocation3], 80
    %1044 = vst.msk [vmem:[%s1043] sm:$0xff] %vm142, %v1040
    %s1045 = scalar_lea.vmem %s1, 88
    %v1046 = vld [vmem:[%s1045] sm:$0xff]
    %1048 = vrot.lane.b32.xlu0 %v1046, 32
    %v1049 = vpop.permute.xlu0 %1048
    %1051 = vst.msk [vmem:[#allocation2] sm:$0xff] %vm58, %v1049
    %v1052 = vld [vmem:[#allocation2] sm:$0xff]
    %v1053 = vld [vmem:[%s2] sm:$0xff]
    %v1054 = vld [vmem:[%s2 + $0x8] sm:$0xff]
    %v1055 = vld [vmem:[%s2 + $0x10] sm:$0xff]
    %v1056 = vld [vmem:[%s2 + $0x18] sm:$0xff]
    %v1057 = vld [vmem:[%s2 + $0x20] sm:$0xff]
    %v1059 = vsel %vm66, %v1052, 0
    %1061 = vmatpush.msra.mxu0 0.0
    %1062 = vmatpush.msra.mxu0 0.0
    %1063 = vmatpush.msra.mxu0 0.0
    %1064 = vmatpush.msra.mxu0 0.0
    %1065 = vmatpush.msra.mxu0 0.0
    %1066 = vmatpush.msra.mxu0 0.0
    %1067 = vmatpush.msra.mxu0 0.0
    %1068 = vmatpush.msra.mxu0 0.0
    %1069 = vmatpush.msra.mxu0 0.0
    %1070 = vmatpush.msra.mxu0 0.0
    %1071 = vmatpush.msra.mxu0 0.0
    %1072 = vmatpush.msra.mxu0 %v1057
    %1073 = vmatpush.msra.mxu0 %v1056
    %1074 = vmatpush.msra.mxu0 %v1055
    %1075 = vmatpush.msra.mxu0 %v1054
    %1076 = vmatpush.msra.mxu0 %v1053
    %1077 = vmatmul.f32.gmra.mxu0 %v1059
    %v1078 = vpop.f32.mrf.mxu0
    %v1079 = vadd.f32 %v47, %v1078
    %1080 = vdwg.mxu0
    %v1081 = vxor.u32 %v1079, 2147483648
    %v1082 = vmul.f32 %v1081, 1.442695
    %v1083 = vpow.pop %v1082
    %v1084 = vadd.f32 %v1083, 1.0
    %v1085 = vrcp.pop %v1084
    %v1086 = vmul.f32 %v1084, %v1085
    %v1087 = vsub.f32 1.0, %v1086
    %v1088 = vmul.f32 %v1085, %v1087
    %v1089 = vadd.f32 %v1085, %v1088
    %vm1090 = vweird.f32 %v1084
    %vm1091 = vweird.f32 %v1085
    %vm1092 = vmor %vm1090, %vm1091
    %v1093 = vsel %vm1092, %v1085, %v1089
    %v1094 = vand.u32 2147483647, %v1084
    %vm1095 = vcmp.eq.f32.partialorder %v1094, 8.507059e+37
    %v1096 = vand.u32 %v1084, 2147483648
    %v1097 = vor.u32 1.1754944e-38, %v1096
    %v1098 = vsel %vm1095, %v1097, %v1093
    %v1099 = vmul.f32 1.0, %v1098
    %v1100 = vmul.f32 %v1079, %v1099
    %v1101 = vld [vmem:[%s4] sm:$0xff]
    %v1102 = vld [vmem:[%s4 + $0x8] sm:$0xff]
    %v1103 = vld [vmem:[%s4 + $0x10] sm:$0xff]
    %v1104 = vld [vmem:[%s4 + $0x18] sm:$0xff]
    %v1105 = vld [vmem:[%s4 + $0x20] sm:$0xff]
    %v1106 = vld [vmem:[%s4 + $0x28] sm:$0xff]
    %v1107 = vld [vmem:[%s4 + $0x30] sm:$0xff]
    %v1108 = vld [vmem:[%s4 + $0x38] sm:$0xff]
    %v1110 = vsel %vm118, %v1100, 0
    %1112 = vmatpush.msra.mxu0 0.0
    %1113 = vmatpush.msra.mxu0 0.0
    %1114 = vmatpush.msra.mxu0 0.0
    %1115 = vmatpush.msra.mxu0 0.0
    %1116 = vmatpush.msra.mxu0 0.0
    %1117 = vmatpush.msra.mxu0 0.0
    %1118 = vmatpush.msra.mxu0 0.0
    %1119 = vmatpush.msra.mxu0 0.0
    %1120 = vmatpush.msra.mxu0 %v1108
    %1121 = vmatpush.msra.mxu0 %v1107
    %1122 = vmatpush.msra.mxu0 %v1106
    %1123 = vmatpush.msra.mxu0 %v1105
    %1124 = vmatpush.msra.mxu0 %v1104
    %1125 = vmatpush.msra.mxu0 %v1103
    %1126 = vmatpush.msra.mxu0 %v1102
    %1127 = vmatpush.msra.mxu0 %v1101
    %1128 = vmatmul.f32.gmra.mxu0 %v1110
    %v1129 = vpop.f32.mrf.mxu0
    %v1130 = vadd.f32 %v51, %v1129
    %1131 = vdwg.mxu0
    %1132 = vst.msk [vmem:[#allocation2] sm:$0xff] %vm142, %v1130
    %s1133 = scalar_lea.vmem [#allocation3], 88
    %1134 = vst.msk [vmem:[%s1133] sm:$0xff] %vm142, %v1130
    %s1135 = scalar_lea.vmem %s1, 96
    %v1136 = vld [vmem:[%s1135] sm:$0xff]
    %1138 = vrot.lane.b32.xlu0 %v1136, 32
    %v1139 = vpop.permute.xlu0 %1138
    %1141 = vst.msk [vmem:[#allocation2] sm:$0xff] %vm58, %v1139
    %v1142 = vld [vmem:[#allocation2] sm:$0xff]
    %v1143 = vld [vmem:[%s2] sm:$0xff]
    %v1144 = vld [vmem:[%s2 + $0x8] sm:$0xff]
    %v1145 = vld [vmem:[%s2 + $0x10] sm:$0xff]
    %v1146 = vld [vmem:[%s2 + $0x18] sm:$0xff]
    %v1147 = vld [vmem:[%s2 + $0x20] sm:$0xff]
    %v1149 = vsel %vm66, %v1142, 0
    %1151 = vmatpush.msra.mxu0 0.0
    %1152 = vmatpush.msra.mxu0 0.0
    %1153 = vmatpush.msra.mxu0 0.0
    %1154 = vmatpush.msra.mxu0 0.0
    %1155 = vmatpush.msra.mxu0 0.0
    %1156 = vmatpush.msra.mxu0 0.0
    %1157 = vmatpush.msra.mxu0 0.0
    %1158 = vmatpush.msra.mxu0 0.0
    %1159 = vmatpush.msra.mxu0 0.0
    %1160 = vmatpush.msra.mxu0 0.0
    %1161 = vmatpush.msra.mxu0 0.0
    %1162 = vmatpush.msra.mxu0 %v1147
    %1163 = vmatpush.msra.mxu0 %v1146
    %1164 = vmatpush.msra.mxu0 %v1145
    %1165 = vmatpush.msra.mxu0 %v1144
    %1166 = vmatpush.msra.mxu0 %v1143
    %1167 = vmatmul.f32.gmra.mxu0 %v1149
    %v1168 = vpop.f32.mrf.mxu0
    %v1169 = vadd.f32 %v47, %v1168
    %1170 = vdwg.mxu0
    %v1171 = vxor.u32 %v1169, 2147483648
    %v1172 = vmul.f32 %v1171, 1.442695
    %v1173 = vpow.pop %v1172
    %v1174 = vadd.f32 %v1173, 1.0
    %v1175 = vrcp.pop %v1174
    %v1176 = vmul.f32 %v1174, %v1175
    %v1177 = vsub.f32 1.0, %v1176
    %v1178 = vmul.f32 %v1175, %v1177
    %v1179 = vadd.f32 %v1175, %v1178
    %vm1180 = vweird.f32 %v1174
    %vm1181 = vweird.f32 %v1175
    %vm1182 = vmor %vm1180, %vm1181
    %v1183 = vsel %vm1182, %v1175, %v1179
    %v1184 = vand.u32 2147483647, %v1174
    %vm1185 = vcmp.eq.f32.partialorder %v1184, 8.507059e+37
    %v1186 = vand.u32 %v1174, 2147483648
    %v1187 = vor.u32 1.1754944e-38, %v1186
    %v1188 = vsel %vm1185, %v1187, %v1183
    %v1189 = vmul.f32 1.0, %v1188
    %v1190 = vmul.f32 %v1169, %v1189
    %v1191 = vld [vmem:[%s4] sm:$0xff]
    %v1192 = vld [vmem:[%s4 + $0x8] sm:$0xff]
    %v1193 = vld [vmem:[%s4 + $0x10] sm:$0xff]
    %v1194 = vld [vmem:[%s4 + $0x18] sm:$0xff]
    %v1195 = vld [vmem:[%s4 + $0x20] sm:$0xff]
    %v1196 = vld [vmem:[%s4 + $0x28] sm:$0xff]
    %v1197 = vld [vmem:[%s4 + $0x30] sm:$0xff]
    %v1198 = vld [vmem:[%s4 + $0x38] sm:$0xff]
    %v1200 = vsel %vm118, %v1190, 0
    %1202 = vmatpush.msra.mxu0 0.0
    %1203 = vmatpush.msra.mxu0 0.0
    %1204 = vmatpush.msra.mxu0 0.0
    %1205 = vmatpush.msra.mxu0 0.0
    %1206 = vmatpush.msra.mxu0 0.0
    %1207 = vmatpush.msra.mxu0 0.0
    %1208 = vmatpush.msra.mxu0 0.0
    %1209 = vmatpush.msra.mxu0 0.0
    %1210 = vmatpush.msra.mxu0 %v1198
    %1211 = vmatpush.msra.mxu0 %v1197
    %1212 = vmatpush.msra.mxu0 %v1196
    %1213 = vmatpush.msra.mxu0 %v1195
    %1214 = vmatpush.msra.mxu0 %v1194
    %1215 = vmatpush.msra.mxu0 %v1193
    %1216 = vmatpush.msra.mxu0 %v1192
    %1217 = vmatpush.msra.mxu0 %v1191
    %1218 = vmatmul.f32.gmra.mxu0 %v1200
    %v1219 = vpop.f32.mrf.mxu0
    %v1220 = vadd.f32 %v51, %v1219
    %1221 = vdwg.mxu0
    %1222 = vst.msk [vmem:[#allocation2] sm:$0xff] %vm142, %v1220
    %s1223 = scalar_lea.vmem [#allocation3], 96
    %1224 = vst.msk [vmem:[%s1223] sm:$0xff] %vm142, %v1220
    %s1225 = scalar_lea.vmem %s1, 104
    %v1226 = vld [vmem:[%s1225] sm:$0xff]
    %1228 = vrot.lane.b32.xlu0 %v1226, 32
    %v1229 = vpop.permute.xlu0 %1228
    %1231 = vst.msk [vmem:[#allocation2] sm:$0xff] %vm58, %v1229
    %v1232 = vld [vmem:[#allocation2] sm:$0xff]
    %v1233 = vld [vmem:[%s2] sm:$0xff]
    %v1234 = vld [vmem:[%s2 + $0x8] sm:$0xff]
    %v1235 = vld [vmem:[%s2 + $0x10] sm:$0xff]
    %v1236 = vld [vmem:[%s2 + $0x18] sm:$0xff]
    %v1237 = vld [vmem:[%s2 + $0x20] sm:$0xff]
    %v1239 = vsel %vm66, %v1232, 0
    %1241 = vmatpush.msra.mxu0 0.0
    %1242 = vmatpush.msra.mxu0 0.0
    %1243 = vmatpush.msra.mxu0 0.0
    %1244 = vmatpush.msra.mxu0 0.0
    %1245 = vmatpush.msra.mxu0 0.0
    %1246 = vmatpush.msra.mxu0 0.0
    %1247 = vmatpush.msra.mxu0 0.0
    %1248 = vmatpush.msra.mxu0 0.0
    %1249 = vmatpush.msra.mxu0 0.0
    %1250 = vmatpush.msra.mxu0 0.0
    %1251 = vmatpush.msra.mxu0 0.0
    %1252 = vmatpush.msra.mxu0 %v1237
    %1253 = vmatpush.msra.mxu0 %v1236
    %1254 = vmatpush.msra.mxu0 %v1235
    %1255 = vmatpush.msra.mxu0 %v1234
    %1256 = vmatpush.msra.mxu0 %v1233
    %1257 = vmatmul.f32.gmra.mxu0 %v1239
    %v1258 = vpop.f32.mrf.mxu0
    %v1259 = vadd.f32 %v47, %v1258
    %1260 = vdwg.mxu0
    %v1261 = vxor.u32 %v1259, 2147483648
    %v1262 = vmul.f32 %v1261, 1.442695
    %v1263 = vpow.pop %v1262
    %v1264 = vadd.f32 %v1263, 1.0
    %v1265 = vrcp.pop %v1264
    %v1266 = vmul.f32 %v1264, %v1265
    %v1267 = vsub.f32 1.0, %v1266
    %v1268 = vmul.f32 %v1265, %v1267
    %v1269 = vadd.f32 %v1265, %v1268
    %vm1270 = vweird.f32 %v1264
    %vm1271 = vweird.f32 %v1265
    %vm1272 = vmor %vm1270, %vm1271
    %v1273 = vsel %vm1272, %v1265, %v1269
    %v1274 = vand.u32 2147483647, %v1264
    %vm1275 = vcmp.eq.f32.partialorder %v1274, 8.507059e+37
    %v1276 = vand.u32 %v1264, 2147483648
    %v1277 = vor.u32 1.1754944e-38, %v1276
    %v1278 = vsel %vm1275, %v1277, %v1273
    %v1279 = vmul.f32 1.0, %v1278
    %v1280 = vmul.f32 %v1259, %v1279
    %v1281 = vld [vmem:[%s4] sm:$0xff]
    %v1282 = vld [vmem:[%s4 + $0x8] sm:$0xff]
    %v1283 = vld [vmem:[%s4 + $0x10] sm:$0xff]
    %v1284 = vld [vmem:[%s4 + $0x18] sm:$0xff]
    %v1285 = vld [vmem:[%s4 + $0x20] sm:$0xff]
    %v1286 = vld [vmem:[%s4 + $0x28] sm:$0xff]
    %v1287 = vld [vmem:[%s4 + $0x30] sm:$0xff]
    %v1288 = vld [vmem:[%s4 + $0x38] sm:$0xff]
    %v1290 = vsel %vm118, %v1280, 0
    %1292 = vmatpush.msra.mxu0 0.0
    %1293 = vmatpush.msra.mxu0 0.0
    %1294 = vmatpush.msra.mxu0 0.0
    %1295 = vmatpush.msra.mxu0 0.0
    %1296 = vmatpush.msra.mxu0 0.0
    %1297 = vmatpush.msra.mxu0 0.0
    %1298 = vmatpush.msra.mxu0 0.0
    %1299 = vmatpush.msra.mxu0 0.0
    %1300 = vmatpush.msra.mxu0 %v1288
    %1301 = vmatpush.msra.mxu0 %v1287
    %1302 = vmatpush.msra.mxu0 %v1286
    %1303 = vmatpush.msra.mxu0 %v1285
    %1304 = vmatpush.msra.mxu0 %v1284
    %1305 = vmatpush.msra.mxu0 %v1283
    %1306 = vmatpush.msra.mxu0 %v1282
    %1307 = vmatpush.msra.mxu0 %v1281
    %1308 = vmatmul.f32.gmra.mxu0 %v1290
    %v1309 = vpop.f32.mrf.mxu0
    %v1310 = vadd.f32 %v51, %v1309
    %1311 = vdwg.mxu0
    %1312 = vst.msk [vmem:[#allocation2] sm:$0xff] %vm142, %v1310
    %s1313 = scalar_lea.vmem [#allocation3], 104
    %1314 = vst.msk [vmem:[%s1313] sm:$0xff] %vm142, %v1310
    %s1315 = scalar_lea.vmem %s1, 112
    %v1316 = vld [vmem:[%s1315] sm:$0xff]
    %1318 = vrot.lane.b32.xlu0 %v1316, 32
    %v1319 = vpop.permute.xlu0 %1318
    %1321 = vst.msk [vmem:[#allocation2] sm:$0xff] %vm58, %v1319
    %v1322 = vld [vmem:[#allocation2] sm:$0xff]
    %v1323 = vld [vmem:[%s2] sm:$0xff]
    %v1324 = vld [vmem:[%s2 + $0x8] sm:$0xff]
    %v1325 = vld [vmem:[%s2 + $0x10] sm:$0xff]
    %v1326 = vld [vmem:[%s2 + $0x18] sm:$0xff]
    %v1327 = vld [vmem:[%s2 + $0x20] sm:$0xff]
    %v1329 = vsel %vm66, %v1322, 0
    %1331 = vmatpush.msra.mxu0 0.0
    %1332 = vmatpush.msra.mxu0 0.0
    %1333 = vmatpush.msra.mxu0 0.0
    %1334 = vmatpush.msra.mxu0 0.0
    %1335 = vmatpush.msra.mxu0 0.0
    %1336 = vmatpush.msra.mxu0 0.0
    %1337 = vmatpush.msra.mxu0 0.0
    %1338 = vmatpush.msra.mxu0 0.0
    %1339 = vmatpush.msra.mxu0 0.0
    %1340 = vmatpush.msra.mxu0 0.0
    %1341 = vmatpush.msra.mxu0 0.0
    %1342 = vmatpush.msra.mxu0 %v1327
    %1343 = vmatpush.msra.mxu0 %v1326
    %1344 = vmatpush.msra.mxu0 %v1325
    %1345 = vmatpush.msra.mxu0 %v1324
    %1346 = vmatpush.msra.mxu0 %v1323
    %1347 = vmatmul.f32.gmra.mxu0 %v1329
    %v1348 = vpop.f32.mrf.mxu0
    %v1349 = vadd.f32 %v47, %v1348
    %1350 = vdwg.mxu0
    %v1351 = vxor.u32 %v1349, 2147483648
    %v1352 = vmul.f32 %v1351, 1.442695
    %v1353 = vpow.pop %v1352
    %v1354 = vadd.f32 %v1353, 1.0
    %v1355 = vrcp.pop %v1354
    %v1356 = vmul.f32 %v1354, %v1355
    %v1357 = vsub.f32 1.0, %v1356
    %v1358 = vmul.f32 %v1355, %v1357
    %v1359 = vadd.f32 %v1355, %v1358
    %vm1360 = vweird.f32 %v1354
    %vm1361 = vweird.f32 %v1355
    %vm1362 = vmor %vm1360, %vm1361
    %v1363 = vsel %vm1362, %v1355, %v1359
    %v1364 = vand.u32 2147483647, %v1354
    %vm1365 = vcmp.eq.f32.partialorder %v1364, 8.507059e+37
    %v1366 = vand.u32 %v1354, 2147483648
    %v1367 = vor.u32 1.1754944e-38, %v1366
    %v1368 = vsel %vm1365, %v1367, %v1363
    %v1369 = vmul.f32 1.0, %v1368
    %v1370 = vmul.f32 %v1349, %v1369
    %v1371 = vld [vmem:[%s4] sm:$0xff]
    %v1372 = vld [vmem:[%s4 + $0x8] sm:$0xff]
    %v1373 = vld [vmem:[%s4 + $0x10] sm:$0xff]
    %v1374 = vld [vmem:[%s4 + $0x18] sm:$0xff]
    %v1375 = vld [vmem:[%s4 + $0x20] sm:$0xff]
    %v1376 = vld [vmem:[%s4 + $0x28] sm:$0xff]
    %v1377 = vld [vmem:[%s4 + $0x30] sm:$0xff]
    %v1378 = vld [vmem:[%s4 + $0x38] sm:$0xff]
    %v1380 = vsel %vm118, %v1370, 0
    %1382 = vmatpush.msra.mxu0 0.0
    %1383 = vmatpush.msra.mxu0 0.0
    %1384 = vmatpush.msra.mxu0 0.0
    %1385 = vmatpush.msra.mxu0 0.0
    %1386 = vmatpush.msra.mxu0 0.0
    %1387 = vmatpush.msra.mxu0 0.0
    %1388 = vmatpush.msra.mxu0 0.0
    %1389 = vmatpush.msra.mxu0 0.0
    %1390 = vmatpush.msra.mxu0 %v1378
    %1391 = vmatpush.msra.mxu0 %v1377
    %1392 = vmatpush.msra.mxu0 %v1376
    %1393 = vmatpush.msra.mxu0 %v1375
    %1394 = vmatpush.msra.mxu0 %v1374
    %1395 = vmatpush.msra.mxu0 %v1373
    %1396 = vmatpush.msra.mxu0 %v1372
    %1397 = vmatpush.msra.mxu0 %v1371
    %1398 = vmatmul.f32.gmra.mxu0 %v1380
    %v1399 = vpop.f32.mrf.mxu0
    %v1400 = vadd.f32 %v51, %v1399
    %1401 = vdwg.mxu0
    %1402 = vst.msk [vmem:[#allocation2] sm:$0xff] %vm142, %v1400
    %s1403 = scalar_lea.vmem [#allocation3], 112
    %1404 = vst.msk [vmem:[%s1403] sm:$0xff] %vm142, %v1400
    %s1405 = scalar_lea.vmem %s1, 120
    %v1406 = vld [vmem:[%s1405] sm:$0xff]
    %1408 = vrot.lane.b32.xlu0 %v1406, 32
    %v1409 = vpop.permute.xlu0 %1408
    %1411 = vst.msk [vmem:[#allocation2] sm:$0xff] %vm58, %v1409
    %v1412 = vld [vmem:[#allocation2] sm:$0xff]
    %v1413 = vld [vmem:[%s2] sm:$0xff]
    %v1414 = vld [vmem:[%s2 + $0x8] sm:$0xff]
    %v1415 = vld [vmem:[%s2 + $0x10] sm:$0xff]
    %v1416 = vld [vmem:[%s2 + $0x18] sm:$0xff]
    %v1417 = vld [vmem:[%s2 + $0x20] sm:$0xff]
    %v1419 = vsel %vm66, %v1412, 0
    %1421 = vmatpush.msra.mxu0 0.0
    %1422 = vmatpush.msra.mxu0 0.0
    %1423 = vmatpush.msra.mxu0 0.0
    %1424 = vmatpush.msra.mxu0 0.0
    %1425 = vmatpush.msra.mxu0 0.0
    %1426 = vmatpush.msra.mxu0 0.0
    %1427 = vmatpush.msra.mxu0 0.0
    %1428 = vmatpush.msra.mxu0 0.0
    %1429 = vmatpush.msra.mxu0 0.0
    %1430 = vmatpush.msra.mxu0 0.0
    %1431 = vmatpush.msra.mxu0 0.0
    %1432 = vmatpush.msra.mxu0 %v1417
    %1433 = vmatpush.msra.mxu0 %v1416
    %1434 = vmatpush.msra.mxu0 %v1415
    %1435 = vmatpush.msra.mxu0 %v1414
    %1436 = vmatpush.msra.mxu0 %v1413
    %1437 = vmatmul.f32.gmra.mxu0 %v1419
    %v1438 = vpop.f32.mrf.mxu0
    %v1439 = vadd.f32 %v47, %v1438
    %1440 = vdwg.mxu0
    %v1441 = vxor.u32 %v1439, 2147483648
    %v1442 = vmul.f32 %v1441, 1.442695
    %v1443 = vpow.pop %v1442
    %v1444 = vadd.f32 %v1443, 1.0
    %v1445 = vrcp.pop %v1444
    %v1446 = vmul.f32 %v1444, %v1445
    %v1447 = vsub.f32 1.0, %v1446
    %v1448 = vmul.f32 %v1445, %v1447
    %v1449 = vadd.f32 %v1445, %v1448
    %vm1450 = vweird.f32 %v1444
    %vm1451 = vweird.f32 %v1445
    %vm1452 = vmor %vm1450, %vm1451
    %v1453 = vsel %vm1452, %v1445, %v1449
    %v1454 = vand.u32 2147483647, %v1444
    %vm1455 = vcmp.eq.f32.partialorder %v1454, 8.507059e+37
    %v1456 = vand.u32 %v1444, 2147483648
    %v1457 = vor.u32 1.1754944e-38, %v1456
    %v1458 = vsel %vm1455, %v1457, %v1453
    %v1459 = vmul.f32 1.0, %v1458
    %v1460 = vmul.f32 %v1439, %v1459
    %v1461 = vld [vmem:[%s4] sm:$0xff]
    %v1462 = vld [vmem:[%s4 + $0x8] sm:$0xff]
    %v1463 = vld [vmem:[%s4 + $0x10] sm:$0xff]
    %v1464 = vld [vmem:[%s4 + $0x18] sm:$0xff]
    %v1465 = vld [vmem:[%s4 + $0x20] sm:$0xff]
    %v1466 = vld [vmem:[%s4 + $0x28] sm:$0xff]
    %v1467 = vld [vmem:[%s4 + $0x30] sm:$0xff]
    %v1468 = vld [vmem:[%s4 + $0x38] sm:$0xff]
    %v1470 = vsel %vm118, %v1460, 0
    %1472 = vmatpush.msra.mxu0 0.0
    %1473 = vmatpush.msra.mxu0 0.0
    %1474 = vmatpush.msra.mxu0 0.0
    %1475 = vmatpush.msra.mxu0 0.0
    %1476 = vmatpush.msra.mxu0 0.0
    %1477 = vmatpush.msra.mxu0 0.0
    %1478 = vmatpush.msra.mxu0 0.0
    %1479 = vmatpush.msra.mxu0 0.0
    %1480 = vmatpush.msra.mxu0 %v1468
    %1481 = vmatpush.msra.mxu0 %v1467
    %1482 = vmatpush.msra.mxu0 %v1466
    %1483 = vmatpush.msra.mxu0 %v1465
    %1484 = vmatpush.msra.mxu0 %v1464
    %1485 = vmatpush.msra.mxu0 %v1463
    %1486 = vmatpush.msra.mxu0 %v1462
    %1487 = vmatpush.msra.mxu0 %v1461
    %1488 = vmatmul.f32.gmra.mxu0 %v1470
    %v1489 = vpop.f32.mrf.mxu0
    %v1490 = vadd.f32 %v51, %v1489
    %1491 = vdwg.mxu0
    %1492 = vst.msk [vmem:[#allocation2] sm:$0xff] %vm142, %v1490
    %s1493 = scalar_lea.vmem [#allocation3], 120
    %1494 = vst.msk [vmem:[%s1493] sm:$0xff] %vm142, %v1490
    %v1495 = vld [vmem:[#allocation3] sm:$0xff]
    %v1496 = vld [vmem:[#allocation3 + $0x8] sm:$0xff]
    %v1497 = vld [vmem:[#allocation3 + $0x10] sm:$0xff]
    %v1498 = vld [vmem:[#allocation3 + $0x18] sm:$0xff]
    %v1499 = vld [vmem:[#allocation3 + $0x20] sm:$0xff]
    %v1500 = vld [vmem:[#allocation3 + $0x28] sm:$0xff]
    %v1501 = vld [vmem:[#allocation3 + $0x30] sm:$0xff]
    %v1502 = vld [vmem:[#allocation3 + $0x38] sm:$0xff]
    %v1503 = vld [vmem:[#allocation3 + $0x40] sm:$0xff]
    %v1504 = vld [vmem:[#allocation3 + $0x48] sm:$0xff]
    %v1505 = vld [vmem:[#allocation3 + $0x50] sm:$0xff]
    %v1506 = vld [vmem:[#allocation3 + $0x58] sm:$0xff]
    %v1507 = vld [vmem:[#allocation3 + $0x60] sm:$0xff]
    %v1508 = vld [vmem:[#allocation3 + $0x68] sm:$0xff]
    %v1509 = vld [vmem:[#allocation3 + $0x70] sm:$0xff]
    %v1510 = vld [vmem:[#allocation3 + $0x78] sm:$0xff]
    %v1511 = vld [vmem:[%s6] sm:$0xff]
    %v1512 = vld [vmem:[%s6 + $0x8] sm:$0xff]
    %v1513 = vld [vmem:[%s6 + $0x10] sm:$0xff]
    %v1514 = vld [vmem:[%s6 + $0x18] sm:$0xff]
    %v1515 = vld [vmem:[%s7] sm:$0x1]
    %v1517 = vperm.slane %v1515, 0
    %v1520 = vsel %vm142, %v1495, 0
    %v1523 = vsel %vm142, %v1496, 0
    %v1526 = vsel %vm142, %v1497, 0
    %v1529 = vsel %vm142, %v1498, 0
    %v1532 = vsel %vm142, %v1499, 0
    %v1535 = vsel %vm142, %v1500, 0
    %v1538 = vsel %vm142, %v1501, 0
    %v1541 = vsel %vm142, %v1502, 0
    %v1544 = vsel %vm142, %v1503, 0
    %v1547 = vsel %vm142, %v1504, 0
    %v1550 = vsel %vm142, %v1505, 0
    %v1553 = vsel %vm142, %v1506, 0
    %v1556 = vsel %vm142, %v1507, 0
    %v1559 = vsel %vm142, %v1508, 0
    %v1562 = vsel %vm142, %v1509, 0
    %v1565 = vsel %vm142, %v1510, 0
    %1567 = vmatpush.msra.mxu0 0.0
    %1568 = vmatpush.msra.mxu0 0.0
    %1569 = vmatpush.msra.mxu0 0.0
    %1570 = vmatpush.msra.mxu0 0.0
    %1571 = vmatpush.msra.mxu0 0.0
    %1572 = vmatpush.msra.mxu0 0.0
    %1573 = vmatpush.msra.mxu0 0.0
    %1574 = vmatpush.msra.mxu0 0.0
    %1575 = vmatpush.msra.mxu0 0.0
    %1576 = vmatpush.msra.mxu0 0.0
    %1577 = vmatpush.msra.mxu0 0.0
    %1578 = vmatpush.msra.mxu0 0.0
    %1579 = vmatpush.msra.mxu0 %v1514
    %1580 = vmatpush.msra.mxu0 %v1513
    %1581 = vmatpush.msra.mxu0 %v1512
    %1582 = vmatpush.msra.mxu0 %v1511
    %1583 = vmatmul.f32.gmra.mxu0 %v1520
    %v1584 = vpop.f32.mrf.mxu0
    %v1585 = vadd.f32 %v1517, %v1584
    %1586 = vmatmul.f32.gmra.mxu0 %v1523
    %v1587 = vpop.f32.mrf.mxu0
    %v1588 = vadd.f32 %v1517, %v1587
    %1589 = vmatmul.f32.gmra.mxu0 %v1526
    %v1590 = vpop.f32.mrf.mxu0
    %v1591 = vadd.f32 %v1517, %v1590
    %1592 = vmatmul.f32.gmra.mxu0 %v1529
    %v1593 = vpop.f32.mrf.mxu0
    %v1594 = vadd.f32 %v1517, %v1593
    %1595 = vmatmul.f32.gmra.mxu0 %v1532
    %v1596 = vpop.f32.mrf.mxu0
    %v1597 = vadd.f32 %v1517, %v1596
    %1598 = vmatmul.f32.gmra.mxu0 %v1535
    %v1599 = vpop.f32.mrf.mxu0
    %v1600 = vadd.f32 %v1517, %v1599
    %1601 = vmatmul.f32.gmra.mxu0 %v1538
    %v1602 = vpop.f32.mrf.mxu0
    %v1603 = vadd.f32 %v1517, %v1602
    %1604 = vmatmul.f32.gmra.mxu0 %v1541
    %v1605 = vpop.f32.mrf.mxu0
    %v1606 = vadd.f32 %v1517, %v1605
    %1607 = vmatmul.f32.gmra.mxu0 %v1544
    %v1608 = vpop.f32.mrf.mxu0
    %v1609 = vadd.f32 %v1517, %v1608
    %1610 = vmatmul.f32.gmra.mxu0 %v1547
    %v1611 = vpop.f32.mrf.mxu0
    %v1612 = vadd.f32 %v1517, %v1611
    %1613 = vmatmul.f32.gmra.mxu0 %v1550
    %v1614 = vpop.f32.mrf.mxu0
    %v1615 = vadd.f32 %v1517, %v1614
    %1616 = vmatmul.f32.gmra.mxu0 %v1553
    %v1617 = vpop.f32.mrf.mxu0
    %v1618 = vadd.f32 %v1517, %v1617
    %1619 = vmatmul.f32.gmra.mxu0 %v1556
    %v1620 = vpop.f32.mrf.mxu0
    %v1621 = vadd.f32 %v1517, %v1620
    %1622 = vmatmul.f32.gmra.mxu0 %v1559
    %v1623 = vpop.f32.mrf.mxu0
    %v1624 = vadd.f32 %v1517, %v1623
    %1625 = vmatmul.f32.gmra.mxu0 %v1562
    %v1626 = vpop.f32.mrf.mxu0
    %v1627 = vadd.f32 %v1517, %v1626
    %1628 = vmatmul.f32.gmra.mxu0 %v1565
    %v1629 = vpop.f32.mrf.mxu0
    %v1630 = vadd.f32 %v1517, %v1629
    %1631 = vdwg.mxu0
    %v1632 = vxor.u32 %v1585, 2147483648
    %v1633 = vxor.u32 %v1588, 2147483648
    %v1634 = vxor.u32 %v1591, 2147483648
    %v1635 = vxor.u32 %v1594, 2147483648
    %v1636 = vxor.u32 %v1597, 2147483648
    %v1637 = vxor.u32 %v1600, 2147483648
    %v1638 = vxor.u32 %v1603, 2147483648
    %v1639 = vxor.u32 %v1606, 2147483648
    %v1640 = vxor.u32 %v1609, 2147483648
    %v1641 = vxor.u32 %v1612, 2147483648
    %v1642 = vxor.u32 %v1615, 2147483648
    %v1643 = vxor.u32 %v1618, 2147483648
    %v1644 = vxor.u32 %v1621, 2147483648
    %v1645 = vxor.u32 %v1624, 2147483648
    %v1646 = vxor.u32 %v1627, 2147483648
    %v1647 = vxor.u32 %v1630, 2147483648
    %v1648 = vmul.f32 %v1632, 1.442695
    %v1649 = vpow.pop %v1648
    %v1650 = vmul.f32 %v1633, 1.442695
    %v1651 = vpow.pop %v1650
    %v1652 = vmul.f32 %v1634, 1.442695
    %v1653 = vpow.pop %v1652
    %v1654 = vmul.f32 %v1635, 1.442695
    %v1655 = vpow.pop %v1654
    %v1656 = vmul.f32 %v1636, 1.442695
    %v1657 = vpow.pop %v1656
    %v1658 = vmul.f32 %v1637, 1.442695
    %v1659 = vpow.pop %v1658
    %v1660 = vmul.f32 %v1638, 1.442695
    %v1661 = vpow.pop %v1660
    %v1662 = vmul.f32 %v1639, 1.442695
    %v1663 = vpow.pop %v1662
    %v1664 = vmul.f32 %v1640, 1.442695
    %v1665 = vpow.pop %v1664
    %v1666 = vmul.f32 %v1641, 1.442695
    %v1667 = vpow.pop %v1666
    %v1668 = vmul.f32 %v1642, 1.442695
    %v1669 = vpow.pop %v1668
    %v1670 = vmul.f32 %v1643, 1.442695
    %v1671 = vpow.pop %v1670
    %v1672 = vmul.f32 %v1644, 1.442695
    %v1673 = vpow.pop %v1672
    %v1674 = vmul.f32 %v1645, 1.442695
    %v1675 = vpow.pop %v1674
    %v1676 = vmul.f32 %v1646, 1.442695
    %v1677 = vpow.pop %v1676
    %v1678 = vmul.f32 %v1647, 1.442695
    %v1679 = vpow.pop %v1678
    %v1680 = vadd.f32 %v1649, 1.0
    %v1681 = vadd.f32 %v1651, 1.0
    %v1682 = vadd.f32 %v1653, 1.0
    %v1683 = vadd.f32 %v1655, 1.0
    %v1684 = vadd.f32 %v1657, 1.0
    %v1685 = vadd.f32 %v1659, 1.0
    %v1686 = vadd.f32 %v1661, 1.0
    %v1687 = vadd.f32 %v1663, 1.0
    %v1688 = vadd.f32 %v1665, 1.0
    %v1689 = vadd.f32 %v1667, 1.0
    %v1690 = vadd.f32 %v1669, 1.0
    %v1691 = vadd.f32 %v1671, 1.0
    %v1692 = vadd.f32 %v1673, 1.0
    %v1693 = vadd.f32 %v1675, 1.0
    %v1694 = vadd.f32 %v1677, 1.0
    %v1695 = vadd.f32 %v1679, 1.0
    %v1696 = vrcp.pop %v1680
    %v1697 = vmul.f32 %v1680, %v1696
    %v1698 = vsub.f32 1.0, %v1697
    %v1699 = vmul.f32 %v1696, %v1698
    %v1700 = vadd.f32 %v1696, %v1699
    %vm1701 = vweird.f32 %v1680
    %vm1702 = vweird.f32 %v1696
    %vm1703 = vmor %vm1701, %vm1702
    %v1704 = vsel %vm1703, %v1696, %v1700
    %v1705 = vand.u32 2147483647, %v1680
    %vm1706 = vcmp.eq.f32.partialorder %v1705, 8.507059e+37
    %v1707 = vand.u32 %v1680, 2147483648
    %v1708 = vor.u32 1.1754944e-38, %v1707
    %v1709 = vsel %vm1706, %v1708, %v1704
    %v1710 = vmul.f32 1.0, %v1709
    %v1711 = vrcp.pop %v1681
    %v1712 = vmul.f32 %v1681, %v1711
    %v1713 = vsub.f32 1.0, %v1712
    %v1714 = vmul.f32 %v1711, %v1713
    %v1715 = vadd.f32 %v1711, %v1714
    %vm1716 = vweird.f32 %v1681
    %vm1717 = vweird.f32 %v1711
    %vm1718 = vmor %vm1716, %vm1717
    %v1719 = vsel %vm1718, %v1711, %v1715
    %v1720 = vand.u32 2147483647, %v1681
    %vm1721 = vcmp.eq.f32.partialorder %v1720, 8.507059e+37
    %v1722 = vand.u32 %v1681, 2147483648
    %v1723 = vor.u32 1.1754944e-38, %v1722
    %v1724 = vsel %vm1721, %v1723, %v1719
    %v1725 = vmul.f32 1.0, %v1724
    %v1726 = vrcp.pop %v1682
    %v1727 = vmul.f32 %v1682, %v1726
    %v1728 = vsub.f32 1.0, %v1727
    %v1729 = vmul.f32 %v1726, %v1728
    %v1730 = vadd.f32 %v1726, %v1729
    %vm1731 = vweird.f32 %v1682
    %vm1732 = vweird.f32 %v1726
    %vm1733 = vmor %vm1731, %vm1732
    %v1734 = vsel %vm1733, %v1726, %v1730
    %v1735 = vand.u32 2147483647, %v1682
    %vm1736 = vcmp.eq.f32.partialorder %v1735, 8.507059e+37
    %v1737 = vand.u32 %v1682, 2147483648
    %v1738 = vor.u32 1.1754944e-38, %v1737
    %v1739 = vsel %vm1736, %v1738, %v1734
    %v1740 = vmul.f32 1.0, %v1739
    %v1741 = vrcp.pop %v1683
    %v1742 = vmul.f32 %v1683, %v1741
    %v1743 = vsub.f32 1.0, %v1742
    %v1744 = vmul.f32 %v1741, %v1743
    %v1745 = vadd.f32 %v1741, %v1744
    %vm1746 = vweird.f32 %v1683
    %vm1747 = vweird.f32 %v1741
    %vm1748 = vmor %vm1746, %vm1747
    %v1749 = vsel %vm1748, %v1741, %v1745
    %v1750 = vand.u32 2147483647, %v1683
    %vm1751 = vcmp.eq.f32.partialorder %v1750, 8.507059e+37
    %v1752 = vand.u32 %v1683, 2147483648
    %v1753 = vor.u32 1.1754944e-38, %v1752
    %v1754 = vsel %vm1751, %v1753, %v1749
    %v1755 = vmul.f32 1.0, %v1754
    %v1756 = vrcp.pop %v1684
    %v1757 = vmul.f32 %v1684, %v1756
    %v1758 = vsub.f32 1.0, %v1757
    %v1759 = vmul.f32 %v1756, %v1758
    %v1760 = vadd.f32 %v1756, %v1759
    %vm1761 = vweird.f32 %v1684
    %vm1762 = vweird.f32 %v1756
    %vm1763 = vmor %vm1761, %vm1762
    %v1764 = vsel %vm1763, %v1756, %v1760
    %v1765 = vand.u32 2147483647, %v1684
    %vm1766 = vcmp.eq.f32.partialorder %v1765, 8.507059e+37
    %v1767 = vand.u32 %v1684, 2147483648
    %v1768 = vor.u32 1.1754944e-38, %v1767
    %v1769 = vsel %vm1766, %v1768, %v1764
    %v1770 = vmul.f32 1.0, %v1769
    %v1771 = vrcp.pop %v1685
    %v1772 = vmul.f32 %v1685, %v1771
    %v1773 = vsub.f32 1.0, %v1772
    %v1774 = vmul.f32 %v1771, %v1773
    %v1775 = vadd.f32 %v1771, %v1774
    %vm1776 = vweird.f32 %v1685
    %vm1777 = vweird.f32 %v1771
    %vm1778 = vmor %vm1776, %vm1777
    %v1779 = vsel %vm1778, %v1771, %v1775
    %v1780 = vand.u32 2147483647, %v1685
    %vm1781 = vcmp.eq.f32.partialorder %v1780, 8.507059e+37
    %v1782 = vand.u32 %v1685, 2147483648
    %v1783 = vor.u32 1.1754944e-38, %v1782
    %v1784 = vsel %vm1781, %v1783, %v1779
    %v1785 = vmul.f32 1.0, %v1784
    %v1786 = vrcp.pop %v1686
    %v1787 = vmul.f32 %v1686, %v1786
    %v1788 = vsub.f32 1.0, %v1787
    %v1789 = vmul.f32 %v1786, %v1788
    %v1790 = vadd.f32 %v1786, %v1789
    %vm1791 = vweird.f32 %v1686
    %vm1792 = vweird.f32 %v1786
    %vm1793 = vmor %vm1791, %vm1792
    %v1794 = vsel %vm1793, %v1786, %v1790
    %v1795 = vand.u32 2147483647, %v1686
    %vm1796 = vcmp.eq.f32.partialorder %v1795, 8.507059e+37
    %v1797 = vand.u32 %v1686, 2147483648
    %v1798 = vor.u32 1.1754944e-38, %v1797
    %v1799 = vsel %vm1796, %v1798, %v1794
    %v1800 = vmul.f32 1.0, %v1799
    %v1801 = vrcp.pop %v1687
    %v1802 = vmul.f32 %v1687, %v1801
    %v1803 = vsub.f32 1.0, %v1802
    %v1804 = vmul.f32 %v1801, %v1803
    %v1805 = vadd.f32 %v1801, %v1804
    %vm1806 = vweird.f32 %v1687
    %vm1807 = vweird.f32 %v1801
    %vm1808 = vmor %vm1806, %vm1807
    %v1809 = vsel %vm1808, %v1801, %v1805
    %v1810 = vand.u32 2147483647, %v1687
    %vm1811 = vcmp.eq.f32.partialorder %v1810, 8.507059e+37
    %v1812 = vand.u32 %v1687, 2147483648
    %v1813 = vor.u32 1.1754944e-38, %v1812
    %v1814 = vsel %vm1811, %v1813, %v1809
    %v1815 = vmul.f32 1.0, %v1814
    %v1816 = vrcp.pop %v1688
    %v1817 = vmul.f32 %v1688, %v1816
    %v1818 = vsub.f32 1.0, %v1817
    %v1819 = vmul.f32 %v1816, %v1818
    %v1820 = vadd.f32 %v1816, %v1819
    %vm1821 = vweird.f32 %v1688
    %vm1822 = vweird.f32 %v1816
    %vm1823 = vmor %vm1821, %vm1822
    %v1824 = vsel %vm1823, %v1816, %v1820
    %v1825 = vand.u32 2147483647, %v1688
    %vm1826 = vcmp.eq.f32.partialorder %v1825, 8.507059e+37
    %v1827 = vand.u32 %v1688, 2147483648
    %v1828 = vor.u32 1.1754944e-38, %v1827
    %v1829 = vsel %vm1826, %v1828, %v1824
    %v1830 = vmul.f32 1.0, %v1829
    %v1831 = vrcp.pop %v1689
    %v1832 = vmul.f32 %v1689, %v1831
    %v1833 = vsub.f32 1.0, %v1832
    %v1834 = vmul.f32 %v1831, %v1833
    %v1835 = vadd.f32 %v1831, %v1834
    %vm1836 = vweird.f32 %v1689
    %vm1837 = vweird.f32 %v1831
    %vm1838 = vmor %vm1836, %vm1837
    %v1839 = vsel %vm1838, %v1831, %v1835
    %v1840 = vand.u32 2147483647, %v1689
    %vm1841 = vcmp.eq.f32.partialorder %v1840, 8.507059e+37
    %v1842 = vand.u32 %v1689, 2147483648
    %v1843 = vor.u32 1.1754944e-38, %v1842
    %v1844 = vsel %vm1841, %v1843, %v1839
    %v1845 = vmul.f32 1.0, %v1844
    %v1846 = vrcp.pop %v1690
    %v1847 = vmul.f32 %v1690, %v1846
    %v1848 = vsub.f32 1.0, %v1847
    %v1849 = vmul.f32 %v1846, %v1848
    %v1850 = vadd.f32 %v1846, %v1849
    %vm1851 = vweird.f32 %v1690
    %vm1852 = vweird.f32 %v1846
    %vm1853 = vmor %vm1851, %vm1852
    %v1854 = vsel %vm1853, %v1846, %v1850
    %v1855 = vand.u32 2147483647, %v1690
    %vm1856 = vcmp.eq.f32.partialorder %v1855, 8.507059e+37
    %v1857 = vand.u32 %v1690, 2147483648
    %v1858 = vor.u32 1.1754944e-38, %v1857
    %v1859 = vsel %vm1856, %v1858, %v1854
    %v1860 = vmul.f32 1.0, %v1859
    %v1861 = vrcp.pop %v1691
    %v1862 = vmul.f32 %v1691, %v1861
    %v1863 = vsub.f32 1.0, %v1862
    %v1864 = vmul.f32 %v1861, %v1863
    %v1865 = vadd.f32 %v1861, %v1864
    %vm1866 = vweird.f32 %v1691
    %vm1867 = vweird.f32 %v1861
    %vm1868 = vmor %vm1866, %vm1867
    %v1869 = vsel %vm1868, %v1861, %v1865
    %v1870 = vand.u32 2147483647, %v1691
    %vm1871 = vcmp.eq.f32.partialorder %v1870, 8.507059e+37
    %v1872 = vand.u32 %v1691, 2147483648
    %v1873 = vor.u32 1.1754944e-38, %v1872
    %v1874 = vsel %vm1871, %v1873, %v1869
    %v1875 = vmul.f32 1.0, %v1874
    %v1876 = vrcp.pop %v1692
    %v1877 = vmul.f32 %v1692, %v1876
    %v1878 = vsub.f32 1.0, %v1877
    %v1879 = vmul.f32 %v1876, %v1878
    %v1880 = vadd.f32 %v1876, %v1879
    %vm1881 = vweird.f32 %v1692
    %vm1882 = vweird.f32 %v1876
    %vm1883 = vmor %vm1881, %vm1882
    %v1884 = vsel %vm1883, %v1876, %v1880
    %v1885 = vand.u32 2147483647, %v1692
    %vm1886 = vcmp.eq.f32.partialorder %v1885, 8.507059e+37
    %v1887 = vand.u32 %v1692, 2147483648
    %v1888 = vor.u32 1.1754944e-38, %v1887
    %v1889 = vsel %vm1886, %v1888, %v1884
    %v1890 = vmul.f32 1.0, %v1889
    %v1891 = vrcp.pop %v1693
    %v1892 = vmul.f32 %v1693, %v1891
    %v1893 = vsub.f32 1.0, %v1892
    %v1894 = vmul.f32 %v1891, %v1893
    %v1895 = vadd.f32 %v1891, %v1894
    %vm1896 = vweird.f32 %v1693
    %vm1897 = vweird.f32 %v1891
    %vm1898 = vmor %vm1896, %vm1897
    %v1899 = vsel %vm1898, %v1891, %v1895
    %v1900 = vand.u32 2147483647, %v1693
    %vm1901 = vcmp.eq.f32.partialorder %v1900, 8.507059e+37
    %v1902 = vand.u32 %v1693, 2147483648
    %v1903 = vor.u32 1.1754944e-38, %v1902
    %v1904 = vsel %vm1901, %v1903, %v1899
    %v1905 = vmul.f32 1.0, %v1904
    %v1906 = vrcp.pop %v1694
    %v1907 = vmul.f32 %v1694, %v1906
    %v1908 = vsub.f32 1.0, %v1907
    %v1909 = vmul.f32 %v1906, %v1908
    %v1910 = vadd.f32 %v1906, %v1909
    %vm1911 = vweird.f32 %v1694
    %vm1912 = vweird.f32 %v1906
    %vm1913 = vmor %vm1911, %vm1912
    %v1914 = vsel %vm1913, %v1906, %v1910
    %v1915 = vand.u32 2147483647, %v1694
    %vm1916 = vcmp.eq.f32.partialorder %v1915, 8.507059e+37
    %v1917 = vand.u32 %v1694, 2147483648
    %v1918 = vor.u32 1.1754944e-38, %v1917
    %v1919 = vsel %vm1916, %v1918, %v1914
    %v1920 = vmul.f32 1.0, %v1919
    %v1921 = vrcp.pop %v1695
    %v1922 = vmul.f32 %v1695, %v1921
    %v1923 = vsub.f32 1.0, %v1922
    %v1924 = vmul.f32 %v1921, %v1923
    %v1925 = vadd.f32 %v1921, %v1924
    %vm1926 = vweird.f32 %v1695
    %vm1927 = vweird.f32 %v1921
    %vm1928 = vmor %vm1926, %vm1927
    %v1929 = vsel %vm1928, %v1921, %v1925
    %v1930 = vand.u32 2147483647, %v1695
    %vm1931 = vcmp.eq.f32.partialorder %v1930, 8.507059e+37
    %v1932 = vand.u32 %v1695, 2147483648
    %v1933 = vor.u32 1.1754944e-38, %v1932
    %v1934 = vsel %vm1931, %v1933, %v1929
    %v1935 = vmul.f32 1.0, %v1934
    %v1936 = vmul.f32 %v1585, %v1710
    %v1937 = vmul.f32 %v1588, %v1725
    %v1938 = vmul.f32 %v1591, %v1740
    %v1939 = vmul.f32 %v1594, %v1755
    %v1940 = vmul.f32 %v1597, %v1770
    %v1941 = vmul.f32 %v1600, %v1785
    %v1942 = vmul.f32 %v1603, %v1800
    %v1943 = vmul.f32 %v1606, %v1815
    %v1944 = vmul.f32 %v1609, %v1830
    %v1945 = vmul.f32 %v1612, %v1845
    %v1946 = vmul.f32 %v1615, %v1860
    %v1947 = vmul.f32 %v1618, %v1875
    %v1948 = vmul.f32 %v1621, %v1890
    %v1949 = vmul.f32 %v1624, %v1905
    %v1950 = vmul.f32 %v1627, %v1920
    %v1951 = vmul.f32 %v1630, %v1935
    %v1952 = vld [vmem:[%s8] sm:$0xff]
    %v1953 = vld [vmem:[%s8 + $0x8] sm:$0xff]
    %v1954 = vld [vmem:[%s8 + $0x10] sm:$0xff]
    %v1955 = vld [vmem:[%s8 + $0x18] sm:$0xff]
    %v1956 = vld [vmem:[%s8 + $0x20] sm:$0xff]
    %v1957 = vld [vmem:[%s8 + $0x28] sm:$0xff]
    %v1958 = vld [vmem:[%s8 + $0x30] sm:$0xff]
    %v1959 = vld [vmem:[%s8 + $0x38] sm:$0xff]
    %v1960 = vld [vmem:[%s9] sm:$0x1]
    %v1962 = vperm.slane %v1960, 0
    %v1965 = vsel %vm118, %v1936, 0
    %v1968 = vsel %vm118, %v1937, 0
    %v1971 = vsel %vm118, %v1938, 0
    %v1974 = vsel %vm118, %v1939, 0
    %v1977 = vsel %vm118, %v1940, 0
    %v1980 = vsel %vm118, %v1941, 0
    %v1983 = vsel %vm118, %v1942, 0
    %v1986 = vsel %vm118, %v1943, 0
    %v1989 = vsel %vm118, %v1944, 0
    %v1992 = vsel %vm118, %v1945, 0
    %v1995 = vsel %vm118, %v1946, 0
    %v1998 = vsel %vm118, %v1947, 0
    %v2001 = vsel %vm118, %v1948, 0
    %v2004 = vsel %vm118, %v1949, 0
    %v2007 = vsel %vm118, %v1950, 0
    %v2010 = vsel %vm118, %v1951, 0
    %2012 = vmatpush.msra.mxu0 0.0
    %2013 = vmatpush.msra.mxu0 0.0
    %2014 = vmatpush.msra.mxu0 0.0
    %2015 = vmatpush.msra.mxu0 0.0
    %2016 = vmatpush.msra.mxu0 0.0
    %2017 = vmatpush.msra.mxu0 0.0
    %2018 = vmatpush.msra.mxu0 0.0
    %2019 = vmatpush.msra.mxu0 0.0
    %2020 = vmatpush.msra.mxu0 %v1959
    %2021 = vmatpush.msra.mxu0 %v1958
    %2022 = vmatpush.msra.mxu0 %v1957
    %2023 = vmatpush.msra.mxu0 %v1956
    %2024 = vmatpush.msra.mxu0 %v1955
    %2025 = vmatpush.msra.mxu0 %v1954
    %2026 = vmatpush.msra.mxu0 %v1953
    %2027 = vmatpush.msra.mxu0 %v1952
    %2028 = vmatmul.f32.gmra.mxu0 %v1965
    %v2029 = vpop.f32.mrf.mxu0
    %v2030 = vadd.f32 %v1962, %v2029
    %2031 = vmatmul.f32.gmra.mxu0 %v1968
    %v2032 = vpop.f32.mrf.mxu0
    %v2033 = vadd.f32 %v1962, %v2032
    %2034 = vmatmul.f32.gmra.mxu0 %v1971
    %v2035 = vpop.f32.mrf.mxu0
    %v2036 = vadd.f32 %v1962, %v2035
    %2037 = vmatmul.f32.gmra.mxu0 %v1974
    %v2038 = vpop.f32.mrf.mxu0
    %v2039 = vadd.f32 %v1962, %v2038
    %2040 = vmatmul.f32.gmra.mxu0 %v1977
    %v2041 = vpop.f32.mrf.mxu0
    %v2042 = vadd.f32 %v1962, %v2041
    %2043 = vmatmul.f32.gmra.mxu0 %v1980
    %v2044 = vpop.f32.mrf.mxu0
    %v2045 = vadd.f32 %v1962, %v2044
    %2046 = vmatmul.f32.gmra.mxu0 %v1983
    %v2047 = vpop.f32.mrf.mxu0
    %v2048 = vadd.f32 %v1962, %v2047
    %2049 = vmatmul.f32.gmra.mxu0 %v1986
    %v2050 = vpop.f32.mrf.mxu0
    %v2051 = vadd.f32 %v1962, %v2050
    %2052 = vmatmul.f32.gmra.mxu0 %v1989
    %v2053 = vpop.f32.mrf.mxu0
    %v2054 = vadd.f32 %v1962, %v2053
    %2055 = vmatmul.f32.gmra.mxu0 %v1992
    %v2056 = vpop.f32.mrf.mxu0
    %v2057 = vadd.f32 %v1962, %v2056
    %2058 = vmatmul.f32.gmra.mxu0 %v1995
    %v2059 = vpop.f32.mrf.mxu0
    %v2060 = vadd.f32 %v1962, %v2059
    %2061 = vmatmul.f32.gmra.mxu0 %v1998
    %v2062 = vpop.f32.mrf.mxu0
    %v2063 = vadd.f32 %v1962, %v2062
    %2064 = vmatmul.f32.gmra.mxu0 %v2001
    %v2065 = vpop.f32.mrf.mxu0
    %v2066 = vadd.f32 %v1962, %v2065
    %2067 = vmatmul.f32.gmra.mxu0 %v2004
    %v2068 = vpop.f32.mrf.mxu0
    %v2069 = vadd.f32 %v1962, %v2068
    %2070 = vmatmul.f32.gmra.mxu0 %v2007
    %v2071 = vpop.f32.mrf.mxu0
    %v2072 = vadd.f32 %v1962, %v2071
    %2073 = vmatmul.f32.gmra.mxu0 %v2010
    %v2074 = vpop.f32.mrf.mxu0
    %v2075 = vadd.f32 %v1962, %v2074
    %2076 = vdwg.mxu0
    %2077 = vst [vmem:[%s10] sm:$0xff] %v2030
    %2078 = vst [vmem:[%s10 + $0x8] sm:$0xff] %v2033
    %2079 = vst [vmem:[%s10 + $0x10] sm:$0xff] %v2036
    %2080 = vst [vmem:[%s10 + $0x18] sm:$0xff] %v2039
    %2081 = vst [vmem:[%s10 + $0x20] sm:$0xff] %v2042
    %2082 = vst [vmem:[%s10 + $0x28] sm:$0xff] %v2045
    %2083 = vst [vmem:[%s10 + $0x30] sm:$0xff] %v2048
    %2084 = vst [vmem:[%s10 + $0x38] sm:$0xff] %v2051
    %2085 = vst [vmem:[%s10 + $0x40] sm:$0xff] %v2054
    %2086 = vst [vmem:[%s10 + $0x48] sm:$0xff] %v2057
    %2087 = vst [vmem:[%s10 + $0x50] sm:$0xff] %v2060
    %2088 = vst [vmem:[%s10 + $0x58] sm:$0xff] %v2063
    %2089 = vst [vmem:[%s10 + $0x60] sm:$0xff] %v2066
    %2090 = vst [vmem:[%s10 + $0x68] sm:$0xff] %v2069
    %2091 = vst [vmem:[%s10 + $0x70] sm:$0xff] %v2072
    %2092 = vst [vmem:[%s10 + $0x78] sm:$0xff] %v2075
    %v2093 = vld [vmem:[#allocation2] sm:$0xff]
    %2094 = vst.msk [vmem:[#allocation4] sm:$0xff] %vm142, %v2093
    // Predicated region
    $region46: #{general_rnn_forward_sequence.1} parent=1 // pred_check
      _
    $region47: #{general_rnn_forward_sequence.1} parent=1 // pred_check_branch
      %2096 = sbr.rel (0) target = $region49
    $region48: #{general_rnn_forward_sequence.1} parent=1 // pred_region
      _
    $region49: #{general_rnn_forward_sequence.1} parent=1 // pred_fallthru
      _
    // Predicated region
    $region50: #{general_rnn_forward_sequence.1} parent=1 // pred_check
      _
    $region51: #{general_rnn_forward_sequence.1} parent=1 // pred_check_branch
      %2098 = sbr.rel (0) target = $region53
    $region52: #{general_rnn_forward_sequence.1} parent=1 // pred_region
      %2100 = vsyncadd [#allocation5], 0
      %s2102 = sshll.u32 [#allocation4], 4
      %s2103 = int_to_ptr.vmem [resolvable:$true] %s2102
      %s2104 = sshll.u32 %s11, 4
      %s2105 = int_to_ptr.hbm [resolvable:$true] %s2104
      %2107 = dma.vmem_to_hbm [thread:$0]  %s2103, 128, %s2105, [#allocation5]
    $region53: #{general_rnn_forward_sequence.1} parent=1 // pred_fallthru
      _
    // Predicated region
    $region54: #{general_rnn_forward_sequence.1} parent=1 // pred_check
      _
    $region55: #{general_rnn_forward_sequence.1} parent=1 // pred_check_branch
      %2109 = sbr.rel (0) target = $region57
    $region56: #{general_rnn_forward_sequence.1} parent=1 // pred_region
      _
    $region57: #{general_rnn_forward_sequence.1} parent=1 // pred_fallthru
      _
    // Predicated region
    $region58: #{general_rnn_forward_sequence.1} parent=1 // pred_check
      _
    $region59: #{general_rnn_forward_sequence.1} parent=1 // pred_check_branch
      %2111 = sbr.rel (0) target = $region61
    $region60: #{general_rnn_forward_sequence.1} parent=1 // pred_region
      %2113 = dma.done [#allocation5], 128
    $region61: #{general_rnn_forward_sequence.1} parent=1 // pred_fallthru
      _
    %2114 = vsyncpa [#allocation5], 1

</llo_original>
